<compile_context>
chip_gen: v7x
topology: tpu7x:2x2x1
jax: 0.10.0
libtpu: 0.0.40
codegen_flags: <defaults>
</compile_context>

<pallas_src>
import functools

import jax
import jax.numpy as jnp
from jax.experimental import pallas as pl
from jax.experimental.pallas import tpu as pltpu

VMEM_LIMIT_BYTES = 32 * 1024 * 1024  # explicit & portable (v5e/v6e 128 MiB, v7x 64 MiB)


def _round_up(x, m):
    return ((x + m - 1) // m) * m


# ---------------------------------------------------------------------------
# Kernel 1: M-tiled matmul + bias + ReLU (bf16 operands, f32 accumulation)
# ---------------------------------------------------------------------------
def _matmul_bias_relu_kernel(x_ref, w_ref, b_ref, o_ref):
    y = jnp.dot(x_ref[...], w_ref[...], preferred_element_type=jnp.float32)
    y = jnp.maximum(y + b_ref[...], 0.0)          # bias + ReLU in f32
    o_ref[...] = y.astype(o_ref.dtype)


def matmul_bias_relu(x, w, b, *, out_dtype=jnp.bfloat16, tm_max=256):
    """(M, K) @ (K, N) + b, ReLU.  Grid over M ("parallel") for pipelining and
    megacore sharding; K and N stay full-block (both are small on this net)."""
    M, K = x.shape
    K2, N = w.shape
    assert K == K2, (K, K2)
    tm = min(tm_max, _round_up(M, 8))
    Mp = _round_up(M, tm)
    if Mp != M:
        x = jnp.pad(x, ((0, Mp - M), (0, 0)))
    out = pl.pallas_call(
        _matmul_bias_relu_kernel,
        out_shape=jax.ShapeDtypeStruct((Mp, N), out_dtype),
        grid=(Mp // tm,),
        in_specs=[
            pl.BlockSpec((tm, K), lambda i: (i, 0)),
            pl.BlockSpec((K, N), lambda i: (0, 0)),
            pl.BlockSpec((1, N), lambda i: (0, 0)),
        ],
        out_specs=pl.BlockSpec((tm, N), lambda i: (i, 0)),
        compiler_params=pltpu.CompilerParams(
            dimension_semantics=("parallel",),
            vmem_limit_bytes=VMEM_LIMIT_BYTES,
        ),
    )(
        x.astype(jnp.bfloat16),
        w.astype(jnp.bfloat16),
        b.reshape(1, N).astype(jnp.float32),
    )
    return out[:M] if Mp != M else out


# ---------------------------------------------------------------------------
# Kernel 2: fused fc(1024->512)+ReLU + [policy|value] heads + log_softmax.
# Head weights are packed into one lane-dense (F, 128) matrix:
#   columns [0, A)  -> policy logits
#   column  A       -> value
#   columns > A     -> zero padding
# ---------------------------------------------------------------------------
def _fc_head_kernel(x_ref, wfc_ref, bfc_ref, wh_ref, bh_ref, o_ref, *, num_actions):
    feat = jnp.dot(x_ref[...], wfc_ref[...], preferred_element_type=jnp.float32)
    feat = jnp.maximum(feat + bfc_ref[...], 0.0)               # fc bias + ReLU (f32)
    h = jnp.dot(feat.astype(jnp.bfloat16), wh_ref[...],
                preferred_element_type=jnp.float32) + bh_ref[...]  # (tm, 128)
    col = jax.lax.broadcasted_iota(jnp.int32, h.shape, 1)
    is_logit = col < num_actions
    # Categorical(logits=...) normalization: logits - logsumexp(logits)
    logits = jnp.where(is_logit, h, jnp.float32(-1e30))        # mask value/pad cols
    m = jnp.max(logits, axis=-1, keepdims=True)
    z = logits - m
    lse = jnp.log(jnp.sum(jnp.exp(z), axis=-1, keepdims=True))
    logp = z - lse
    # Pack output: log-probs in [0, A), value at column A, zeros elsewhere.
    o_ref[...] = jnp.where(is_logit, logp, jnp.where(col == num_actions, h, 0.0))


def fc_and_heads(x_flat, wfc, bfc, wp, bp, wv, bv):
    B, K = x_flat.shape
    F = wfc.shape[1]
    A = wp.shape[1]
    assert A + 1 <= 128
    NH = _round_up(A + 1, 128)                     # lane-dense head width

    whead = jnp.zeros((F, NH), jnp.float32)
    whead = whead.at[:, :A].set(wp.astype(jnp.float32))
    whead = whead.at[:, A].set(wv[:, 0].astype(jnp.float32))
    bhead = jnp.zeros((NH,), jnp.float32)
    bhead = bhead.at[:A].set(bp.astype(jnp.float32))
    bhead = bhead.at[A].set(bv[0].astype(jnp.float32))

    tm = min(256, _round_up(B, 8))
    Bp = _round_up(B, tm)
    xp = jnp.pad(x_flat, ((0, Bp - B), (0, 0))) if Bp != B else x_flat

    out = pl.pallas_call(
        functools.partial(_fc_head_kernel, num_actions=A),
        out_shape=jax.ShapeDtypeStruct((Bp, NH), jnp.float32),
        grid=(Bp // tm,),
        in_specs=[
            pl.BlockSpec((tm, K), lambda i: (i, 0)),
            pl.BlockSpec((K, F), lambda i: (0, 0)),
            pl.BlockSpec((1, F), lambda i: (0, 0)),
            pl.BlockSpec((F, NH), lambda i: (0, 0)),
            pl.BlockSpec((1, NH), lambda i: (0, 0)),
        ],
        out_specs=pl.BlockSpec((tm, NH), lambda i: (i, 0)),
        compiler_params=pltpu.CompilerParams(
            dimension_semantics=("parallel",),
            vmem_limit_bytes=VMEM_LIMIT_BYTES,
        ),
    )(
        xp.astype(jnp.bfloat16),
        wfc.astype(jnp.bfloat16),
        bfc.reshape(1, F).astype(jnp.float32),
        whead.astype(jnp.bfloat16),
        bhead.reshape(1, NH).astype(jnp.float32),
    )
    out = out[:B]
    return out[:, :A], out[:, A]                   # (B, A) log-probs, (B,) value


# ---------------------------------------------------------------------------
# Glue: im2col patch extraction (pure data movement) + conv wrapper
# ---------------------------------------------------------------------------
# TODO(synk): on v5e (HBM-bound) the im2col expansion could be fused into the
# matmul kernel (accumulate over KH*KW shifted slices in-kernel) to avoid
# materializing the expanded patch matrix in HBM.
def im2col(x_nhwc, kh, kw, stride):
    N, H, W, C = x_nhwc.shape
    OH = (H - kh) // stride + 1
    OW = (W - kw) // stride + 1
    cols = []
    for i in range(kh):
        for j in range(kw):
            p = jax.lax.slice(
                x_nhwc,
                (0, i, j, 0),
                (N, i + (OH - 1) * stride + 1, j + (OW - 1) * stride + 1, C),
                (1, stride, stride, 1),
            )  # (N, OH, OW, C)
            cols.append(p)
    # column ordering: (kh, kw, cin), cin fastest -> matches w_hwio.reshape below
    patches = jnp.concatenate(cols, axis=-1)
    return patches.reshape(N * OH * OW, kh * kw * C), OH, OW


def conv2d_relu(x_nhwc, w_hwio, b, stride):
    KH, KW, Cin, Cout = w_hwio.shape
    N = x_nhwc.shape[0]
    patches, OH, OW = im2col(x_nhwc, KH, KW, stride)
    w_mat = w_hwio.reshape(KH * KW * Cin, Cout)
    y = matmul_bias_relu(patches, w_mat, b)        # bf16 activations out
    return y.reshape(N, OH, OW, Cout)


# ---------------------------------------------------------------------------
# Parameters (deterministic synthetic init; orthogonal_init replaced by scaled
# normal — synthetic kernel, not a checkpoint load).  Weights kept in the
# torch-equivalent layouts (HWIO convs, NCHW-flatten-order wfc).
# ---------------------------------------------------------------------------
def init_params(key, num_actions=15, feature_dim=512):
    ks = jax.random.split(key, 10)
    s = 0.05
    return dict(
        w1=jax.random.normal(ks[0], (8, 8, 3, 32), jnp.float32) * s,
        b1=jnp.zeros((32,), jnp.float32),
        w2=jax.random.normal(ks[1], (4, 4, 32, 64), jnp.float32) * s,
        b2=jnp.zeros((64,), jnp.float32),
        w3=jax.random.normal(ks[2], (3, 3, 64, 64), jnp.float32) * s,
        b3=jnp.zeros((64,), jnp.float32),
        wfc=jax.random.normal(ks[3], (1024, feature_dim), jnp.float32) * s,
        bfc=jnp.zeros((feature_dim,), jnp.float32),
        wp=jax.random.normal(ks[4], (feature_dim, num_actions), jnp.float32) * 0.01,
        bp=jnp.zeros((num_actions,), jnp.float32),
        wv=jax.random.normal(ks[5], (feature_dim, 1), jnp.float32) * s,
        bv=jnp.zeros((1,), jnp.float32),
    )


# ---------------------------------------------------------------------------
# Full forward (Policy.forward): returns (normalized Categorical log-probs,
# value).  Sampling (act()) is host-side policy.
# ---------------------------------------------------------------------------
@jax.jit
def policy_forward(x_nchw, params):
    x = jnp.transpose(x_nchw, (0, 2, 3, 1)).astype(jnp.bfloat16)  # NCHW -> NHWC, bf16
    x = conv2d_relu(x, params["w1"], params["b1"], 4)   # (B, 15, 15, 32)
    x = conv2d_relu(x, params["w2"], params["b2"], 2)   # (B, 6, 6, 64)
    x = conv2d_relu(x, params["w3"], params["b3"], 1)   # (B, 4, 4, 64)
    B, OH, OW, C = x.shape
    x_flat = x.reshape(B, OH * OW * C)                  # NHWC-order flatten
    F = params["wfc"].shape[1]
    # torch flattens NCHW (c, h, w fastest); we flattened NHWC (h, w, c fastest).
    # Fold the difference into a row permutation of wfc instead of a runtime
    # activation transpose.
    wfc_perm = (
        params["wfc"].reshape(C, OH, OW, F).transpose(1, 2, 0, 3).reshape(OH * OW * C, F)
    )
    log_probs, value = fc_and_heads(
        x_flat, wfc_perm, params["bfc"],
        params["wp"], params["bp"], params["wv"], params["bv"],
    )
    # TODO(synk): torch returns a Categorical dist object; we return its
    # normalized log-probs (dist.logits) — sampling (act()) is host-side.
    return log_probs, value


if __name__ == "__main__":
    key = jax.random.PRNGKey(0)
    k_x, k_p = jax.random.split(key)
    num_actions = 15
    # Input must be (B, 3, 64, 64) so the flatten yields 1024 features (matches
    # the module's Linear(in_features=1024, ...)).  Batch kept small.
    x = jax.random.normal(k_x, (2, 3, 64, 64), jnp.float32)
    params = init_params(k_p, num_actions=num_actions, feature_dim=512)

    log_probs, value = policy_forward(x, params)
    jax.block_until_ready((log_probs, value))

    assert log_probs.shape == (2, num_actions), log_probs.shape
    assert value.shape == (2,), value.shape
    # log-probs must normalize per row
    assert bool(jnp.allclose(jnp.sum(jnp.exp(log_probs), axis=-1), 1.0, atol=1e-4))
    print("KERNEL_OK")
</pallas_src>

<mosaic_0001>
module attributes {stable_mosaic.version = 11 : i64} {
  func.func @_matmul_bias_relu_kernel(%arg0: i32, %arg1: memref<256x192xbf16, #tpu.memory_space<vmem>>, %arg2: memref<192x32xbf16, #tpu.memory_space<vmem>>, %arg3: memref<1x32xf32, #tpu.memory_space<vmem>>, %arg4: memref<256x32xbf16, #tpu.memory_space<vmem>>) attributes {dimension_semantics = [#tpu.dimension_semantics<parallel>], iteration_bounds = array<i64: 2>, scalar_prefetch = 0 : i64, scratch_operands = 0 : i64, tpu.core_type = #tpu.core_type<tc>, window_params = [{transform_indices = @transform_0, window_bounds = array<i64: 256, 192>}, {pipeline_mode = #tpu.pipeline_mode<synchronous>, transform_indices = @transform_1, window_bounds = array<i64: 192, 32>}, {pipeline_mode = #tpu.pipeline_mode<synchronous>, transform_indices = @transform_2, window_bounds = array<i64: 1, 32>}, {transform_indices = @transform_3, window_bounds = array<i64: 256, 32>}]} {
    %c0 = arith.constant 0 : index
    %c0_0 = arith.constant 0 : index
    %0 = vector.load %arg1[%c0, %c0_0] : memref<256x192xbf16, #tpu.memory_space<vmem>>, vector<256x192xbf16>
    %c0_1 = arith.constant 0 : index
    %c0_2 = arith.constant 0 : index
    %1 = vector.load %arg2[%c0_1, %c0_2] : memref<192x32xbf16, #tpu.memory_space<vmem>>, vector<192x32xbf16>
    %cst = arith.constant dense<0.000000e+00> : vector<256x32xf32>
    %2 = tpu.matmul %0, %1, %cst {dimension_numbers = #tpu.dot_dimension_numbers<[1], [0], [0], [1], [0, 0, 1, 1], [], []>} : vector<256x192xbf16>, vector<192x32xbf16>, vector<256x32xf32> -> vector<256x32xf32>
    %c0_3 = arith.constant 0 : index
    %c0_4 = arith.constant 0 : index
    %3 = vector.load %arg3[%c0_3, %c0_4] : memref<1x32xf32, #tpu.memory_space<vmem>>, vector<1x32xf32>
    %4 = vector.broadcast %3 : vector<1x32xf32> to vector<256x32xf32>
    %5 = arith.addf %2, %4 : vector<256x32xf32>
    %cst_5 = arith.constant 0.000000e+00 : f32
    %6 = vector.broadcast %cst_5 : f32 to vector<256x32xf32>
    %7 = arith.maximumf %5, %6 : vector<256x32xf32>
    %8 = arith.truncf %7 : vector<256x32xf32> to vector<256x32xbf16>
    %c0_6 = arith.constant 0 : index
    %c0_7 = arith.constant 0 : index
    %9 = vector.load %arg4[%c0_6, %c0_7] : memref<256x32xbf16, #tpu.memory_space<vmem>>, vector<256x32xbf16>
    tpu.vector_store %arg4[%c0_6, %c0_7], %8 {strides = array<i32>} : memref<256x32xbf16, #tpu.memory_space<vmem>>, vector<256x32xbf16>,
    return
  }
  func.func @transform_0(%arg0: i32) -> (i32, i32) {
    %c0_i32 = arith.constant 0 : i32
    %c0_i32_0 = arith.constant 0 : i32
    return %arg0, %c0_i32 : i32, i32
  }
  func.func @transform_1(%arg0: i32) -> (i32, i32) {
    %c0_i32 = arith.constant 0 : i32
    %c0_i32_0 = arith.constant 0 : i32
    %c0_i32_1 = arith.constant 0 : i32
    return %c0_i32, %c0_i32_0 : i32, i32
  }
  func.func @transform_2(%arg0: i32) -> (i32, i32) {
    %c0_i32 = arith.constant 0 : i32
    %c0_i32_0 = arith.constant 0 : i32
    %c0_i32_1 = arith.constant 0 : i32
    return %c0_i32, %c0_i32_0 : i32, i32
  }
  func.func @transform_3(%arg0: i32) -> (i32, i32) {
    %c0_i32 = arith.constant 0 : i32
    %c0_i32_0 = arith.constant 0 : i32
    return %arg0, %c0_i32 : i32, i32
  }
}

module attributes {stable_mosaic.version = 11 : i64} {
  func.func @_matmul_bias_relu_kernel(%arg0: i32, %arg1: memref<72x512xbf16, #tpu.memory_space<vmem>>, %arg2: memref<512x64xbf16, #tpu.memory_space<vmem>>, %arg3: memref<1x64xf32, #tpu.memory_space<vmem>>, %arg4: memref<72x64xbf16, #tpu.memory_space<vmem>>) attributes {dimension_semantics = [#tpu.dimension_semantics<parallel>], iteration_bounds = array<i64: 1>, scalar_prefetch = 0 : i64, scratch_operands = 0 : i64, tpu.core_type = #tpu.core_type<tc>, window_params = [{transform_indices = @transform_0, window_bounds = array<i64: 72, 512>}, {pipeline_mode = #tpu.pipeline_mode<synchronous>, transform_indices = @transform_1, window_bounds = array<i64: 512, 64>}, {pipeline_mode = #tpu.pipeline_mode<synchronous>, transform_indices = @transform_2, window_bounds = array<i64: 1, 64>}, {transform_indices = @transform_3, window_bounds = array<i64: 72, 64>}]} {
    %c0 = arith.constant 0 : index
    %c0_0 = arith.constant 0 : index
    %0 = vector.load %arg1[%c0, %c0_0] : memref<72x512xbf16, #tpu.memory_space<vmem>>, vector<72x512xbf16>
    %c0_1 = arith.constant 0 : index
    %c0_2 = arith.constant 0 : index
    %1 = vector.load %arg2[%c0_1, %c0_2] : memref<512x64xbf16, #tpu.memory_space<vmem>>, vector<512x64xbf16>
    %cst = arith.constant dense<0.000000e+00> : vector<72x64xf32>
    %2 = tpu.matmul %0, %1, %cst {dimension_numbers = #tpu.dot_dimension_numbers<[1], [0], [0], [1], [0, 0, 1, 1], [], []>} : vector<72x512xbf16>, vector<512x64xbf16>, vector<72x64xf32> -> vector<72x64xf32>
    %c0_3 = arith.constant 0 : index
    %c0_4 = arith.constant 0 : index
    %3 = vector.load %arg3[%c0_3, %c0_4] : memref<1x64xf32, #tpu.memory_space<vmem>>, vector<1x64xf32>
    %4 = vector.broadcast %3 : vector<1x64xf32> to vector<72x64xf32>
    %5 = arith.addf %2, %4 : vector<72x64xf32>
    %cst_5 = arith.constant 0.000000e+00 : f32
    %6 = vector.broadcast %cst_5 : f32 to vector<72x64xf32>
    %7 = arith.maximumf %5, %6 : vector<72x64xf32>
    %8 = arith.truncf %7 : vector<72x64xf32> to vector<72x64xbf16>
    %c0_6 = arith.constant 0 : index
    %c0_7 = arith.constant 0 : index
    %9 = vector.load %arg4[%c0_6, %c0_7] : memref<72x64xbf16, #tpu.memory_space<vmem>>, vector<72x64xbf16>
    tpu.vector_store %arg4[%c0_6, %c0_7], %8 {strides = array<i32>} : memref<72x64xbf16, #tpu.memory_space<vmem>>, vector<72x64xbf16>,
    return
  }
  func.func @transform_0(%arg0: i32) -> (i32, i32) {
    %c0_i32 = arith.constant 0 : i32
    %c0_i32_0 = arith.constant 0 : i32
    return %arg0, %c0_i32 : i32, i32
  }
  func.func @transform_1(%arg0: i32) -> (i32, i32) {
    %c0_i32 = arith.constant 0 : i32
    %c0_i32_0 = arith.constant 0 : i32
    %c0_i32_1 = arith.constant 0 : i32
    return %c0_i32, %c0_i32_0 : i32, i32
  }
  func.func @transform_2(%arg0: i32) -> (i32, i32) {
    %c0_i32 = arith.constant 0 : i32
    %c0_i32_0 = arith.constant 0 : i32
    %c0_i32_1 = arith.constant 0 : i32
    return %c0_i32, %c0_i32_0 : i32, i32
  }
  func.func @transform_3(%arg0: i32) -> (i32, i32) {
    %c0_i32 = arith.constant 0 : i32
    %c0_i32_0 = arith.constant 0 : i32
    return %arg0, %c0_i32 : i32, i32
  }
}

module attributes {stable_mosaic.version = 11 : i64} {
  func.func @_matmul_bias_relu_kernel(%arg0: i32, %arg1: memref<32x576xbf16, #tpu.memory_space<vmem>>, %arg2: memref<576x64xbf16, #tpu.memory_space<vmem>>, %arg3: memref<1x64xf32, #tpu.memory_space<vmem>>, %arg4: memref<32x64xbf16, #tpu.memory_space<vmem>>) attributes {dimension_semantics = [#tpu.dimension_semantics<parallel>], iteration_bounds = array<i64: 1>, scalar_prefetch = 0 : i64, scratch_operands = 0 : i64, tpu.core_type = #tpu.core_type<tc>, window_params = [{transform_indices = @transform_0, window_bounds = array<i64: 32, 576>}, {pipeline_mode = #tpu.pipeline_mode<synchronous>, transform_indices = @transform_1, window_bounds = array<i64: 576, 64>}, {pipeline_mode = #tpu.pipeline_mode<synchronous>, transform_indices = @transform_2, window_bounds = array<i64: 1, 64>}, {transform_indices = @transform_3, window_bounds = array<i64: 32, 64>}]} {
    %c0 = arith.constant 0 : index
    %c0_0 = arith.constant 0 : index
    %0 = vector.load %arg1[%c0, %c0_0] : memref<32x576xbf16, #tpu.memory_space<vmem>>, vector<32x576xbf16>
    %c0_1 = arith.constant 0 : index
    %c0_2 = arith.constant 0 : index
    %1 = vector.load %arg2[%c0_1, %c0_2] : memref<576x64xbf16, #tpu.memory_space<vmem>>, vector<576x64xbf16>
    %cst = arith.constant dense<0.000000e+00> : vector<32x64xf32>
    %2 = tpu.matmul %0, %1, %cst {dimension_numbers = #tpu.dot_dimension_numbers<[1], [0], [0], [1], [0, 0, 1, 1], [], []>} : vector<32x576xbf16>, vector<576x64xbf16>, vector<32x64xf32> -> vector<32x64xf32>
    %c0_3 = arith.constant 0 : index
    %c0_4 = arith.constant 0 : index
    %3 = vector.load %arg3[%c0_3, %c0_4] : memref<1x64xf32, #tpu.memory_space<vmem>>, vector<1x64xf32>
    %4 = vector.broadcast %3 : vector<1x64xf32> to vector<32x64xf32>
    %5 = arith.addf %2, %4 : vector<32x64xf32>
    %cst_5 = arith.constant 0.000000e+00 : f32
    %6 = vector.broadcast %cst_5 : f32 to vector<32x64xf32>
    %7 = arith.maximumf %5, %6 : vector<32x64xf32>
    %8 = arith.truncf %7 : vector<32x64xf32> to vector<32x64xbf16>
    %c0_6 = arith.constant 0 : index
    %c0_7 = arith.constant 0 : index
    %9 = vector.load %arg4[%c0_6, %c0_7] : memref<32x64xbf16, #tpu.memory_space<vmem>>, vector<32x64xbf16>
    tpu.vector_store %arg4[%c0_6, %c0_7], %8 {strides = array<i32>} : memref<32x64xbf16, #tpu.memory_space<vmem>>, vector<32x64xbf16>,
    return
  }
  func.func @transform_0(%arg0: i32) -> (i32, i32) {
    %c0_i32 = arith.constant 0 : i32
    %c0_i32_0 = arith.constant 0 : i32
    return %arg0, %c0_i32 : i32, i32
  }
  func.func @transform_1(%arg0: i32) -> (i32, i32) {
    %c0_i32 = arith.constant 0 : i32
    %c0_i32_0 = arith.constant 0 : i32
    %c0_i32_1 = arith.constant 0 : i32
    return %c0_i32, %c0_i32_0 : i32, i32
  }
  func.func @transform_2(%arg0: i32) -> (i32, i32) {
    %c0_i32 = arith.constant 0 : i32
    %c0_i32_0 = arith.constant 0 : i32
    %c0_i32_1 = arith.constant 0 : i32
    return %c0_i32, %c0_i32_0 : i32, i32
  }
  func.func @transform_3(%arg0: i32) -> (i32, i32) {
    %c0_i32 = arith.constant 0 : i32
    %c0_i32_0 = arith.constant 0 : i32
    return %arg0, %c0_i32 : i32, i32
  }
}

module attributes {stable_mosaic.version = 11 : i64} {
  func.func @_fc_head_kernel(%arg0: i32, %arg1: memref<8x1024xbf16, #tpu.memory_space<vmem>>, %arg2: memref<1024x512xbf16, #tpu.memory_space<vmem>>, %arg3: memref<1x512xf32, #tpu.memory_space<vmem>>, %arg4: memref<512x128xbf16, #tpu.memory_space<vmem>>, %arg5: memref<1x128xf32, #tpu.memory_space<vmem>>, %arg6: memref<8x128xf32, #tpu.memory_space<vmem>>) attributes {dimension_semantics = [#tpu.dimension_semantics<parallel>], iteration_bounds = array<i64: 1>, scalar_prefetch = 0 : i64, scratch_operands = 0 : i64, tpu.core_type = #tpu.core_type<tc>, window_params = [{transform_indices = @transform_0, window_bounds = array<i64: 8, 1024>}, {pipeline_mode = #tpu.pipeline_mode<synchronous>, transform_indices = @transform_1, window_bounds = array<i64: 1024, 512>}, {pipeline_mode = #tpu.pipeline_mode<synchronous>, transform_indices = @transform_2, window_bounds = array<i64: 1, 512>}, {pipeline_mode = #tpu.pipeline_mode<synchronous>, transform_indices = @transform_3, window_bounds = array<i64: 512, 128>}, {pipeline_mode = #tpu.pipeline_mode<synchronous>, transform_indices = @transform_4, window_bounds = array<i64: 1, 128>}, {transform_indices = @transform_5, window_bounds = array<i64: 8, 128>}]} {
    %c0 = arith.constant 0 : index
    %c0_0 = arith.constant 0 : index
    %0 = vector.load %arg1[%c0, %c0_0] : memref<8x1024xbf16, #tpu.memory_space<vmem>>, vector<8x1024xbf16>
    %c0_1 = arith.constant 0 : index
    %c0_2 = arith.constant 0 : index
    %1 = vector.load %arg2[%c0_1, %c0_2] : memref<1024x512xbf16, #tpu.memory_space<vmem>>, vector<1024x512xbf16>
    %cst = arith.constant dense<0.000000e+00> : vector<8x512xf32>
    %2 = tpu.matmul %0, %1, %cst {dimension_numbers = #tpu.dot_dimension_numbers<[1], [0], [0], [1], [0, 0, 1, 1], [], []>} : vector<8x1024xbf16>, vector<1024x512xbf16>, vector<8x512xf32> -> vector<8x512xf32>
    %c0_3 = arith.constant 0 : index
    %c0_4 = arith.constant 0 : index
    %3 = vector.load %arg3[%c0_3, %c0_4] : memref<1x512xf32, #tpu.memory_space<vmem>>, vector<1x512xf32>
    %4 = vector.broadcast %3 : vector<1x512xf32> to vector<8x512xf32>
    %5 = arith.addf %2, %4 : vector<8x512xf32>
    %cst_5 = arith.constant 0.000000e+00 : f32
    %6 = vector.broadcast %cst_5 : f32 to vector<8x512xf32>
    %7 = arith.maximumf %5, %6 : vector<8x512xf32>
    %8 = arith.truncf %7 : vector<8x512xf32> to vector<8x512xbf16>
    %c0_6 = arith.constant 0 : index
    %c0_7 = arith.constant 0 : index
    %9 = vector.load %arg4[%c0_6, %c0_7] : memref<512x128xbf16, #tpu.memory_space<vmem>>, vector<512x128xbf16>
    %cst_8 = arith.constant dense<0.000000e+00> : vector<8x128xf32>
    %10 = tpu.matmul %8, %9, %cst_8 {dimension_numbers = #tpu.dot_dimension_numbers<[1], [0], [0], [1], [0, 0, 1, 1], [], []>} : vector<8x512xbf16>, vector<512x128xbf16>, vector<8x128xf32> -> vector<8x128xf32>
    %c0_9 = arith.constant 0 : index
    %c0_10 = arith.constant 0 : index
    %11 = vector.load %arg5[%c0_9, %c0_10] : memref<1x128xf32, #tpu.memory_space<vmem>>, vector<1x128xf32>
    %12 = vector.broadcast %11 : vector<1x128xf32> to vector<8x128xf32>
    %13 = arith.addf %10, %12 : vector<8x128xf32>
    %14 = tpu.iota {dimensions = array<i32: 1>} : vector<8x128xi32>
    %c15_i32 = arith.constant 15 : i32
    %15 = vector.broadcast %c15_i32 : i32 to vector<8x128xi32>
    %16 = arith.cmpi slt, %14, %15 : vector<8x128xi32>
    %cst_11 = arith.constant -1.000000e+30 : f32
    %17 = vector.broadcast %cst_11 : f32 to vector<8x128xf32>
    %18 = arith.select %16, %13, %17 : vector<8x128xi1>, vector<8x128xf32>
    %cst_12 = arith.constant dense<0xFF800000> : vector<8xf32>
    %19 = vector.multi_reduction <maximumf>, %18, %cst_12 [1] : vector<8x128xf32> to vector<8xf32>
    %20 = vector.shape_cast %19 : vector<8xf32> to vector<8x1xf32>
    %21 = vector.broadcast %20 : vector<8x1xf32> to vector<8x128xf32>
    %22 = arith.subf %18, %21 : vector<8x128xf32>
    %23 = math.exp %22 : vector<8x128xf32>
    %cst_13 = arith.constant dense<0.000000e+00> : vector<8xf32>
    %24 = vector.multi_reduction <add>, %23, %cst_13 [1] : vector<8x128xf32> to vector<8xf32>
    %25 = vector.shape_cast %24 : vector<8xf32> to vector<8x1xf32>
    %26 = math.log %25 : vector<8x1xf32>
    %27 = vector.broadcast %26 : vector<8x1xf32> to vector<8x128xf32>
    %28 = arith.subf %22, %27 : vector<8x128xf32>
    %c15_i32_14 = arith.constant 15 : i32
    %29 = vector.broadcast %c15_i32_14 : i32 to vector<8x128xi32>
    %30 = arith.cmpi eq, %14, %29 : vector<8x128xi32>
    %cst_15 = arith.constant 0.000000e+00 : f32
    %31 = vector.broadcast %cst_15 : f32 to vector<8x128xf32>
    %32 = arith.select %30, %13, %31 : vector<8x128xi1>, vector<8x128xf32>
    %33 = arith.select %16, %28, %32 : vector<8x128xi1>, vector<8x128xf32>
    %c0_16 = arith.constant 0 : index
    %c0_17 = arith.constant 0 : index
    %34 = vector.load %arg6[%c0_16, %c0_17] : memref<8x128xf32, #tpu.memory_space<vmem>>, vector<8x128xf32>
    tpu.vector_store %arg6[%c0_16, %c0_17], %33 {strides = array<i32>} : memref<8x128xf32, #tpu.memory_space<vmem>>, vector<8x128xf32>,
    return
  }
  func.func @transform_0(%arg0: i32) -> (i32, i32) {
    %c0_i32 = arith.constant 0 : i32
    %c0_i32_0 = arith.constant 0 : i32
    return %arg0, %c0_i32 : i32, i32
  }
  func.func @transform_1(%arg0: i32) -> (i32, i32) {
    %c0_i32 = arith.constant 0 : i32
    %c0_i32_0 = arith.constant 0 : i32
    %c0_i32_1 = arith.constant 0 : i32
    return %c0_i32, %c0_i32_0 : i32, i32
  }
  func.func @transform_2(%arg0: i32) -> (i32, i32) {
    %c0_i32 = arith.constant 0 : i32
    %c0_i32_0 = arith.constant 0 : i32
    %c0_i32_1 = arith.constant 0 : i32
    return %c0_i32, %c0_i32_0 : i32, i32
  }
  func.func @transform_3(%arg0: i32) -> (i32, i32) {
    %c0_i32 = arith.constant 0 : i32
    %c0_i32_0 = arith.constant 0 : i32
    %c0_i32_1 = arith.constant 0 : i32
    return %c0_i32, %c0_i32_0 : i32, i32
  }
  func.func @transform_4(%arg0: i32) -> (i32, i32) {
    %c0_i32 = arith.constant 0 : i32
    %c0_i32_0 = arith.constant 0 : i32
    %c0_i32_1 = arith.constant 0 : i32
    return %c0_i32, %c0_i32_0 : i32, i32
  }
  func.func @transform_5(%arg0: i32) -> (i32, i32) {
    %c0_i32 = arith.constant 0 : i32
    %c0_i32_0 = arith.constant 0 : i32
    return %arg0, %c0_i32 : i32, i32
  }
}

</mosaic_0001>

<llo_original>
// kernel: policy_forward.4
$region0: #{policy_forward.4}
  #allocation0 [shape = 'u32[]', space=smem, size = 0x4, offset = 0x4, fixed_abs, tag = 'smem constant byte address 0x4 - core index']
  #allocation1 [shape = 'u32[144,128]{1,0:T(1,128)}', space=vmem, size = 0x12000, scoped, tag = 'internal scratch']
  %s0 = inlined_call_operand.vmem [shape: bf16[512,192], index: 0, kind: input, shape index: {}]
  %s1 = inlined_call_operand.vmem [shape: bf16[192,32], index: 1, kind: input, shape index: {}]
  %s2 = inlined_call_operand.vmem [shape: f32[1,32], index: 2, kind: input, shape index: {}]
  %s3 = inlined_call_operand.vmem [shape: bf16[512,32], index: 3, kind: output, shape index: {}]
  %s4 = sld [smem:[#allocation0]]
  $region45: #{policy_forward.4} parent=0
    _
  %s6 = ssub.s32 1, %s4
  %s7 = scalar_select 0, %s6, %s4
  loop: start=0, step=1, limit=4
  $region2: #{policy_forward.4} parent=0 // loop_pre_header
    _
  $region3: #{policy_forward.4} parent=0 // loop_header
    %s9 = sphi 0, %s13
    %p10 = scmp.ge.s32.totalorder %s9, 4
    %s19 = sphi 0, %s21
    %s22 = sphi 0, %s19
    %s23 = sphi 0, %s22
    %s39 = sphi 0, %s23
    %s43 = sphi 0, %s43
    %s45 = sphi 0, %s43
    %s46 = sphi 0, %s45
    %s60 = sphi 0, %s46
    %s64 = sphi 0, %s64
    %s66 = sphi 0, %s64
    %s67 = sphi 0, %s66
    %s81 = sphi 0, %s67
    %s87 = sphi 0, %s89
    %s90 = sphi 0, %s87
    %s91 = sphi 0, %s90
    %s107 = sphi 0, %s91
  $region4: #{policy_forward.4} parent=0 // loop_header_branch
    %12 = sbr.rel (%p10) target = $region8
  $region5: #{policy_forward.4} parent=0 // loop_body
    %s14 = ssub.s32 %s9, 1
    %s15 = ssub.s32 %s9, 2
    %s16 = sadd.s32 %s9, 1
    %s17 = ssub.s32 %s9, %s16
    %p18 = scmp.eq.s32.totalorder %s17, 0
    %s20 = sadd.s32 %s19, 1
    %s21 = scalar_select %p18, %s19, %s20
    %p24 = pneg %p18
    %p25 = scmp.eq.s32.totalorder %s9, 1
    %p26 = por %p24, %p25
    %p27 = scmp.ne.s32.totalorder %s19, %s22
    %p28 = scmp.eq.s32.totalorder %s9, 0
    %p29 = por %p27, %p28
    %p30 = scmp.ne.s32.totalorder %s19, %s22
    %p31 = scmp.eq.s32.totalorder %s14, 1
    %p32 = por %p30, %p31
    %p33 = scmp.ne.s32.totalorder %s22, %s23
    %p34 = scmp.eq.s32.totalorder %s14, 0
    %p35 = por %p33, %p34
    %p36 = scmp.ne.s32.totalorder %s22, %s23
    %p37 = scmp.eq.s32.totalorder %s15, 1
    %p38 = por %p36, %p37
    %p40 = scmp.ne.s32.totalorder %s23, %s39
    %p41 = scmp.eq.s32.totalorder %s15, 0
    %p42 = por %p40, %p41
    %s44 = sadd.s32 %s43, 1
    %p47 = scmp.eq.s32.totalorder %s9, 1
    %p48 = scmp.ne.s32.totalorder %s43, %s45
    %p49 = scmp.eq.s32.totalorder %s9, 0
    %p50 = por %p48, %p49
    %p51 = scmp.ne.s32.totalorder %s43, %s45
    %p52 = scmp.eq.s32.totalorder %s14, 1
    %p53 = por %p51, %p52
    %p54 = scmp.ne.s32.totalorder %s45, %s46
    %p55 = scmp.eq.s32.totalorder %s14, 0
    %p56 = por %p54, %p55
    %p57 = scmp.ne.s32.totalorder %s45, %s46
    %p58 = scmp.eq.s32.totalorder %s15, 1
    %p59 = por %p57, %p58
    %p61 = scmp.ne.s32.totalorder %s46, %s60
    %p62 = scmp.eq.s32.totalorder %s15, 0
    %p63 = por %p61, %p62
    %s65 = sadd.s32 %s64, 1
    %p68 = scmp.eq.s32.totalorder %s9, 1
    %p69 = scmp.ne.s32.totalorder %s64, %s66
    %p70 = scmp.eq.s32.totalorder %s9, 0
    %p71 = por %p69, %p70
    %p72 = scmp.ne.s32.totalorder %s64, %s66
    %p73 = scmp.eq.s32.totalorder %s14, 1
    %p74 = por %p72, %p73
    %p75 = scmp.ne.s32.totalorder %s66, %s67
    %p76 = scmp.eq.s32.totalorder %s14, 0
    %p77 = por %p75, %p76
    %p78 = scmp.ne.s32.totalorder %s66, %s67
    %p79 = scmp.eq.s32.totalorder %s15, 1
    %p80 = por %p78, %p79
    %p82 = scmp.ne.s32.totalorder %s67, %s81
    %p83 = scmp.eq.s32.totalorder %s15, 0
    %p84 = por %p82, %p83
    %s85 = ssub.s32 %s9, %s16
    %p86 = scmp.eq.s32.totalorder %s85, 0
    %s88 = sadd.s32 %s87, 1
    %s89 = scalar_select %p86, %s87, %s88
    %p92 = pneg %p86
    %p93 = scmp.eq.s32.totalorder %s9, 1
    %p94 = por %p92, %p93
    %p95 = scmp.ne.s32.totalorder %s87, %s90
    %p96 = scmp.eq.s32.totalorder %s9, 0
    %p97 = por %p95, %p96
    %p98 = scmp.ne.s32.totalorder %s87, %s90
    %p99 = scmp.eq.s32.totalorder %s14, 1
    %p100 = por %p98, %p99
    %p101 = scmp.ne.s32.totalorder %s90, %s91
    %p102 = scmp.eq.s32.totalorder %s14, 0
    %p103 = por %p101, %p102
    %p104 = scmp.ne.s32.totalorder %s90, %s91
    %p105 = scmp.eq.s32.totalorder %s15, 1
    %p106 = por %p104, %p105
    %p108 = scmp.ne.s32.totalorder %s91, %s107
    %p109 = scmp.eq.s32.totalorder %s15, 0
    %p110 = por %p108, %p109
    %p111 = scmp.le.s32.totalorder 1, %s9
    %p112 = scmp.lt.s32.totalorder %s9, 3
    %p113 = pnand %p111, %p112
    %p114 = pneg %p113
    // Predicated region
    $region9: #{policy_forward.4} parent=5 // pred_check
      _
    $region10: #{policy_forward.4} parent=5 // pred_check_branch
      %116 = sbr.rel (%p113) target = $region12
    $region11: #{policy_forward.4} parent=5 // pred_region
      %s117 = ssub.s32 %s9, 1
      // Predicated region
      $region13: #{policy_forward.4} parent=11 // pred_check
        %p118 = pneg %p56
      $region14: #{policy_forward.4} parent=11 // pred_check_branch
        %120 = sbr.rel (%p118) target = $region16
      $region15: #{policy_forward.4} parent=11 // pred_region
        _
      $region16: #{policy_forward.4} parent=11 // pred_fallthru
        _
      // Predicated region
      $region17: #{policy_forward.4} parent=11 // pred_check
        %p121 = pneg %p77
      $region18: #{policy_forward.4} parent=11 // pred_check_branch
        %123 = sbr.rel (%p121) target = $region20
      $region19: #{policy_forward.4} parent=11 // pred_region
        _
      $region20: #{policy_forward.4} parent=11 // pred_fallthru
        _
    $region12: #{policy_forward.4} parent=5 // pred_fallthru
      _
    %p124 = scmp.lt.s32.totalorder %s9, 2
    // Predicated region
    $region21: #{policy_forward.4} parent=5 // pred_check
      %p125 = pneg %p124
    $region22: #{policy_forward.4} parent=5 // pred_check_branch
      %127 = sbr.rel (%p125) target = $region24
    $region23: #{policy_forward.4} parent=5 // pred_region
      // Predicated region
      $region25: #{policy_forward.4} parent=23 // pred_check
        %p128 = pneg %p29
      $region26: #{policy_forward.4} parent=23 // pred_check_branch
        %130 = sbr.rel (%p128) target = $region28
      $region27: #{policy_forward.4} parent=23 // pred_region
        %s131 = smul.u32 32, %s9
        %p132 = scmp.lt.s32.totalorder %s131, 63
        %s133 = scalar_select %p132, %s131, 63
        %s134 = smul.addr %s133, 2
        %s135 = smul.addr %s134, 4
        %s136 = scalar_lea.vmem %s0, %s135
        %s137 = smul.u32 32, %s9
      $region28: #{policy_forward.4} parent=23 // pred_fallthru
        _
    $region24: #{policy_forward.4} parent=5 // pred_fallthru
      _
    %p138 = scmp.le.s32.totalorder 1, %s9
    %p139 = scmp.lt.s32.totalorder %s9, 3
    %p140 = pnand %p138, %p139
    %p141 = pneg %p140
    // Predicated region
    $region29: #{policy_forward.4} parent=5 // pred_check
      _
    $region30: #{policy_forward.4} parent=5 // pred_check_branch
      %143 = sbr.rel (%p140) target = $region32
    $region31: #{policy_forward.4} parent=5 // pred_region
      %s144 = ssub.s32 %s9, 1
      %s145 = smul.u32 32, %s14
      %p146 = scmp.lt.s32.totalorder %s145, 63
      %s147 = scalar_select %p146, %s145, 63
      %s148 = smul.addr %s147, 2
      %s149 = smul.addr %s148, 4
      %s150 = scalar_lea.vmem %s0, %s149
      %p151 = pneg %p35
      %p152 = pneg %p32
      %p153 = pneg %p56
      %p154 = pneg %p53
      %p155 = pneg %p77
      %p156 = pneg %p74
      %p157 = pneg %p103
      %p158 = pneg %p100
      %s159 = smul.u32 32, %s14
      %p160 = scmp.lt.s32.totalorder %s159, 63
      %s161 = scalar_select %p160, %s159, 63
      %s162 = smul.addr %s161, 4
      %s163 = scalar_lea.vmem %s3, %s162
      %s164 = smul.u32 32, %s14
      %p165 = scmp.lt.s32.totalorder %s164, 63
      %s166 = scalar_select %p165, %s164, 63
      %s167 = smul.addr %s166, 2
      %s168 = smul.addr %s167, 4
      %s169 = scalar_lea.vmem %s0, %s168
      %s170 = smul.u32 32, %s14
      %s171 = smul.u32 32, %s14
      %p172 = scmp.lt.s32.totalorder %s171, 63
      %s173 = scalar_select %p172, %s171, 63
      %s174 = smul.addr %s173, 4
      %s175 = scalar_lea.vmem %s3, %s174
      %s176 = smul.u32 32, %s14
      %v178 = vld [vmem:[%s169] sm:$0xff]
      %v179 = vld [vmem:[%s169 + $0x8] sm:$0xff]
      %v180 = vld [vmem:[%s169 + $0x10] sm:$0xff]
      %v181 = vld [vmem:[%s169 + $0x18] sm:$0xff]
      %v182 = vld [vmem:[%s169 + $0x20] sm:$0xff]
      %v183 = vld [vmem:[%s169 + $0x28] sm:$0xff]
      %v184 = vld [vmem:[%s169 + $0x30] sm:$0xff]
      %v185 = vld [vmem:[%s169 + $0x38] sm:$0xff]
      %v186 = vld [vmem:[%s169 + $0x40] sm:$0xff]
      %v187 = vld [vmem:[%s169 + $0x48] sm:$0xff]
      %v188 = vld [vmem:[%s169 + $0x50] sm:$0xff]
      %v189 = vld [vmem:[%s169 + $0x58] sm:$0xff]
      %v190 = vld [vmem:[%s169 + $0x60] sm:$0xff]
      %v191 = vld [vmem:[%s169 + $0x68] sm:$0xff]
      %v192 = vld [vmem:[%s169 + $0x70] sm:$0xff]
      %v193 = vld [vmem:[%s169 + $0x78] sm:$0xff]
      %v194 = vld [vmem:[%s169 + $0x80] sm:$0xff]
      %v195 = vld [vmem:[%s169 + $0x88] sm:$0xff]
      %v196 = vld [vmem:[%s169 + $0x90] sm:$0xff]
      %v197 = vld [vmem:[%s169 + $0x98] sm:$0xff]
      %v198 = vld [vmem:[%s169 + $0xa0] sm:$0xff]
      %v199 = vld [vmem:[%s169 + $0xa8] sm:$0xff]
      %v200 = vld [vmem:[%s169 + $0xb0] sm:$0xff]
      %v201 = vld [vmem:[%s169 + $0xb8] sm:$0xff]
      %v202 = vld [vmem:[%s169 + $0xc0] sm:$0xff]
      %v203 = vld [vmem:[%s169 + $0xc8] sm:$0xff]
      %v204 = vld [vmem:[%s169 + $0xd0] sm:$0xff]
      %v205 = vld [vmem:[%s169 + $0xd8] sm:$0xff]
      %v206 = vld [vmem:[%s169 + $0xe0] sm:$0xff]
      %v207 = vld [vmem:[%s169 + $0xe8] sm:$0xff]
      %v208 = vld [vmem:[%s169 + $0xf0] sm:$0xff]
      %v209 = vld [vmem:[%s169 + $0xf8] sm:$0xff]
      %v210 = vld [vmem:[%s1] sm:$0xf]
      %v211 = vld [vmem:[%s1 + $0x4] sm:$0xf]
      %v212 = vld [vmem:[%s1 + $0x8] sm:$0xf]
      %v213 = vld [vmem:[%s1 + $0xc] sm:$0xf]
      %v214 = vld [vmem:[%s1 + $0x10] sm:$0xf]
      %v215 = vld [vmem:[%s1 + $0x14] sm:$0xf]
      %v216 = vld [vmem:[%s1 + $0x18] sm:$0xf]
      %v217 = vld [vmem:[%s1 + $0x1c] sm:$0xf]
      %v218 = vld [vmem:[%s1 + $0x20] sm:$0xf]
      %v219 = vld [vmem:[%s1 + $0x24] sm:$0xf]
      %v220 = vld [vmem:[%s1 + $0x28] sm:$0xf]
      %v221 = vld [vmem:[%s1 + $0x2c] sm:$0xf]
      %v222 = vld [vmem:[%s1 + $0x30] sm:$0xf]
      %v223 = vld [vmem:[%s1 + $0x34] sm:$0xf]
      %v224 = vld [vmem:[%s1 + $0x38] sm:$0xf]
      %v225 = vld [vmem:[%s1 + $0x3c] sm:$0xf]
      %v226 = vld [vmem:[%s1 + $0x40] sm:$0xf]
      %v227 = vld [vmem:[%s1 + $0x44] sm:$0xf]
      %v228 = vld [vmem:[%s1 + $0x48] sm:$0xf]
      %v229 = vld [vmem:[%s1 + $0x4c] sm:$0xf]
      %v230 = vld [vmem:[%s1 + $0x50] sm:$0xf]
      %v231 = vld [vmem:[%s1 + $0x54] sm:$0xf]
      %v232 = vld [vmem:[%s1 + $0x58] sm:$0xf]
      %v233 = vld [vmem:[%s1 + $0x5c] sm:$0xf]
      %v234 = vld [vmem:[%s2] sm:$0x1]
      %v236 = vlaneseq
      %v237 = vshrl.u32 %v236, 7
      %v238 = vsub.s32 0, %v237
      %v239 = vrot.slane %v234, %v238
      %v273 = vunpack.c.l.b16 %v178
      %v274 = vunpack.c.h.b16 %v178
      %v275 = vunpack.c.l.b16 %v179
      %v276 = vunpack.c.h.b16 %v179
      %v277 = vunpack.c.l.b16 %v180
      %v278 = vunpack.c.h.b16 %v180
      %v279 = vunpack.c.l.b16 %v181
      %v280 = vunpack.c.h.b16 %v181
      %v281 = vunpack.c.l.b16 %v182
      %v282 = vunpack.c.h.b16 %v182
      %v283 = vunpack.c.l.b16 %v183
      %v284 = vunpack.c.h.b16 %v183
      %v285 = vunpack.c.l.b16 %v184
      %v286 = vunpack.c.h.b16 %v184
      %v287 = vunpack.c.l.b16 %v185
      %v288 = vunpack.c.h.b16 %v185
      %v289 = vunpack.c.l.b16 %v186
      %v290 = vunpack.c.h.b16 %v186
      %v291 = vunpack.c.l.b16 %v187
      %v292 = vunpack.c.h.b16 %v187
      %v293 = vunpack.c.l.b16 %v188
      %v294 = vunpack.c.h.b16 %v188
      %v295 = vunpack.c.l.b16 %v189
      %v296 = vunpack.c.h.b16 %v189
      %v297 = vunpack.c.l.b16 %v190
      %v298 = vunpack.c.h.b16 %v190
      %v299 = vunpack.c.l.b16 %v191
      %v300 = vunpack.c.h.b16 %v191
      %v301 = vunpack.c.l.b16 %v192
      %v302 = vunpack.c.h.b16 %v192
      %v303 = vunpack.c.l.b16 %v193
      %v304 = vunpack.c.h.b16 %v193
      %v305 = vunpack.c.l.b16 %v194
      %v306 = vunpack.c.h.b16 %v194
      %v307 = vunpack.c.l.b16 %v195
      %v308 = vunpack.c.h.b16 %v195
      %v309 = vunpack.c.l.b16 %v196
      %v310 = vunpack.c.h.b16 %v196
      %v311 = vunpack.c.l.b16 %v197
      %v312 = vunpack.c.h.b16 %v197
      %v313 = vunpack.c.l.b16 %v198
      %v314 = vunpack.c.h.b16 %v198
      %v315 = vunpack.c.l.b16 %v199
      %v316 = vunpack.c.h.b16 %v199
      %v317 = vunpack.c.l.b16 %v200
      %v318 = vunpack.c.h.b16 %v200
      %v319 = vunpack.c.l.b16 %v201
      %v320 = vunpack.c.h.b16 %v201
      %v321 = vunpack.c.l.b16 %v202
      %v322 = vunpack.c.h.b16 %v202
      %v323 = vunpack.c.l.b16 %v203
      %v324 = vunpack.c.h.b16 %v203
      %v325 = vunpack.c.l.b16 %v204
      %v326 = vunpack.c.h.b16 %v204
      %v327 = vunpack.c.l.b16 %v205
      %v328 = vunpack.c.h.b16 %v205
      %v329 = vunpack.c.l.b16 %v206
      %v330 = vunpack.c.h.b16 %v206
      %v331 = vunpack.c.l.b16 %v207
      %v332 = vunpack.c.h.b16 %v207
      %v333 = vunpack.c.l.b16 %v208
      %v334 = vunpack.c.h.b16 %v208
      %v335 = vunpack.c.l.b16 %v209
      %v336 = vunpack.c.h.b16 %v209
      %v337 = vpack.c.b16 %v275, %v273
      %v338 = vpack.c.b16 %v276, %v274
      %v339 = vpack.c.b16 %v279, %v277
      %v340 = vpack.c.b16 %v280, %v278
      %v341 = vpack.c.b16 %v283, %v281
      %v342 = vpack.c.b16 %v284, %v282
      %v343 = vpack.c.b16 %v287, %v285
      %v344 = vpack.c.b16 %v288, %v286
      %v345 = vpack.c.b16 %v291, %v289
      %v346 = vpack.c.b16 %v292, %v290
      %v347 = vpack.c.b16 %v295, %v293
      %v348 = vpack.c.b16 %v296, %v294
      %v349 = vpack.c.b16 %v299, %v297
      %v350 = vpack.c.b16 %v300, %v298
      %v351 = vpack.c.b16 %v303, %v301
      %v352 = vpack.c.b16 %v304, %v302
      %v353 = vpack.c.b16 %v307, %v305
      %v354 = vpack.c.b16 %v308, %v306
      %v355 = vpack.c.b16 %v311, %v309
      %v356 = vpack.c.b16 %v312, %v310
      %v357 = vpack.c.b16 %v315, %v313
      %v358 = vpack.c.b16 %v316, %v314
      %v359 = vpack.c.b16 %v319, %v317
      %v360 = vpack.c.b16 %v320, %v318
      %v361 = vpack.c.b16 %v323, %v321
      %v362 = vpack.c.b16 %v324, %v322
      %v363 = vpack.c.b16 %v327, %v325
      %v364 = vpack.c.b16 %v328, %v326
      %v365 = vpack.c.b16 %v331, %v329
      %v366 = vpack.c.b16 %v332, %v330
      %v367 = vpack.c.b16 %v335, %v333
      %v368 = vpack.c.b16 %v336, %v334
      %v409 = vunpack.c.l.b16 %v210
      %v410 = vunpack.c.l.b16 %v211
      %v411 = vunpack.c.l.b16 %v212
      %v412 = vunpack.c.l.b16 %v213
      %v413 = vunpack.c.l.b16 %v214
      %v414 = vunpack.c.l.b16 %v215
      %v415 = vunpack.c.l.b16 %v216
      %v416 = vunpack.c.l.b16 %v217
      %v417 = vunpack.c.l.b16 %v218
      %v418 = vunpack.c.l.b16 %v219
      %v419 = vunpack.c.l.b16 %v220
      %v420 = vunpack.c.l.b16 %v221
      %v421 = vunpack.c.l.b16 %v222
      %v422 = vunpack.c.l.b16 %v223
      %v423 = vunpack.c.l.b16 %v224
      %v424 = vunpack.c.l.b16 %v225
      %v425 = vunpack.c.l.b16 %v226
      %v426 = vunpack.c.l.b16 %v227
      %v427 = vunpack.c.l.b16 %v228
      %v428 = vunpack.c.l.b16 %v229
      %v429 = vunpack.c.l.b16 %v230
      %v430 = vunpack.c.l.b16 %v231
      %v431 = vunpack.c.l.b16 %v232
      %v432 = vunpack.c.l.b16 %v233
      %v433 = vpack.c.b16 %v410, %v409
      %v434 = vpack.c.b16 %v412, %v411
      %v435 = vpack.c.b16 %v414, %v413
      %v436 = vpack.c.b16 %v416, %v415
      %v437 = vpack.c.b16 %v418, %v417
      %v438 = vpack.c.b16 %v420, %v419
      %v439 = vpack.c.b16 %v422, %v421
      %v440 = vpack.c.b16 %v424, %v423
      %v441 = vpack.c.b16 %v426, %v425
      %v442 = vpack.c.b16 %v428, %v427
      %v443 = vpack.c.b16 %v430, %v429
      %v444 = vpack.c.b16 %v432, %v431
      %vm457 = vcmask 523264
      %v459 = vsel %vm457, %v338, 0
      %v462 = vsel %vm457, %v340, 0
      %v465 = vsel %vm457, %v342, 0
      %v468 = vsel %vm457, %v344, 0
      %v471 = vsel %vm457, %v346, 0
      %v474 = vsel %vm457, %v348, 0
      %v477 = vsel %vm457, %v350, 0
      %v480 = vsel %vm457, %v352, 0
      %v483 = vsel %vm457, %v354, 0
      %v486 = vsel %vm457, %v356, 0
      %v489 = vsel %vm457, %v358, 0
      %v492 = vsel %vm457, %v360, 0
      %v495 = vsel %vm457, %v362, 0
      %v498 = vsel %vm457, %v364, 0
      %v501 = vsel %vm457, %v366, 0
      %v504 = vsel %vm457, %v368, 0
      %506 = vmatprep.subr.bf16.mxu0 0
      %507 = vmatpush1.bf16.msra.mxu0 %v433
      %508 = vmatprep.subr.bf16.mxu0 0
      %509 = vmatpush1.bf16.msra.mxu0 %v434
      %510 = vmatprep.subr.bf16.mxu0 0
      %511 = vmatpush1.bf16.msra.mxu0 %v435
      %512 = vmatprep.subr.bf16.mxu0 0
      %513 = vmatpush1.bf16.msra.mxu0 %v436
      %514 = vmatprep.subr.bf16.mxu0 0
      %515 = vmatpush1.bf16.msra.mxu0 %v437
      %516 = vmatprep.subr.bf16.mxu0 0
      %517 = vmatpush1.bf16.msra.mxu0 %v438
      %518 = vmatprep.subr.bf16.mxu0 0
      %519 = vmatpush1.bf16.msra.mxu0 %v439
      %520 = vmatprep.subr.bf16.mxu0 0
      %521 = vmatpush1.bf16.msra.mxu0 %v440
      %522 = vmatprep.subr.bf16.mxu0 0
      %523 = vmatpush1.bf16.msra.mxu0 %v441
      %524 = vmatprep.subr.bf16.mxu0 0
      %525 = vmatpush1.bf16.msra.mxu0 %v442
      %526 = vmatprep.subr.bf16.mxu0 0
      %527 = vmatpush1.bf16.msra.mxu0 %v443
      %528 = vmatprep.subr.bf16.mxu0 0
      %529 = vmatpush1.bf16.msra.mxu0 %v444
      %530 = vmatprep.subr.bf16.mxu0 0
      %531 = vmatpush1.bf16.msra.mxu0 0
      %532 = vmatprep.subr.bf16.mxu0 0
      %533 = vmatpush1.bf16.msra.mxu0 0
      %534 = vmatprep.subr.bf16.mxu0 0
      %535 = vmatpush1.bf16.msra.mxu0 0
      %536 = vmatprep.subr.bf16.mxu0 0
      %537 = vmatpush1.bf16.msra.mxu0 0
      %538 = vmatprep.mubr.bf16.mxu0 %v459
      %539 = vmatmul.mubr.bf16.gmra.mrb[0].mxu0 %v337
      %v540 = vpop.f32.mrb[0].mxu0
      %v541 = vadd.f32 %v239, %v540
      %v542 = vpop.f32.mrb[0].mxu0
      %v543 = vpop.f32.mrb[0].mxu0
      %v544 = vadd.f32 %v239, %v543
      %v545 = vpop.f32.mrb[0].mxu0
      %546 = vmatprep.mubr.bf16.mxu0 %v462
      %547 = vmatmul.mubr.bf16.gmra.mrb[0].mxu0 %v339
      %v548 = vpop.f32.mrb[0].mxu0
      %v549 = vadd.f32 %v239, %v548
      %v550 = vpop.f32.mrb[0].mxu0
      %v551 = vpop.f32.mrb[0].mxu0
      %v552 = vadd.f32 %v239, %v551
      %v553 = vpop.f32.mrb[0].mxu0
      %554 = vmatprep.mubr.bf16.mxu0 %v465
      %555 = vmatmul.mubr.bf16.gmra.mrb[0].mxu0 %v341
      %v556 = vpop.f32.mrb[0].mxu0
      %v557 = vadd.f32 %v239, %v556
      %v558 = vpop.f32.mrb[0].mxu0
      %v559 = vpop.f32.mrb[0].mxu0
      %v560 = vadd.f32 %v239, %v559
      %v561 = vpop.f32.mrb[0].mxu0
      %562 = vmatprep.mubr.bf16.mxu0 %v468
      %563 = vmatmul.mubr.bf16.gmra.mrb[0].mxu0 %v343
      %v564 = vpop.f32.mrb[0].mxu0
      %v565 = vadd.f32 %v239, %v564
      %v566 = vpop.f32.mrb[0].mxu0
      %v567 = vpop.f32.mrb[0].mxu0
      %v568 = vadd.f32 %v239, %v567
      %v569 = vpop.f32.mrb[0].mxu0
      %570 = vmatprep.mubr.bf16.mxu0 %v471
      %571 = vmatmul.mubr.bf16.gmra.mrb[0].mxu0 %v345
      %v572 = vpop.f32.mrb[0].mxu0
      %v573 = vadd.f32 %v239, %v572
      %v574 = vpop.f32.mrb[0].mxu0
      %v575 = vpop.f32.mrb[0].mxu0
      %v576 = vadd.f32 %v239, %v575
      %v577 = vpop.f32.mrb[0].mxu0
      %578 = vmatprep.mubr.bf16.mxu0 %v474
      %579 = vmatmul.mubr.bf16.gmra.mrb[0].mxu0 %v347
      %v580 = vpop.f32.mrb[0].mxu0
      %v581 = vadd.f32 %v239, %v580
      %v582 = vpop.f32.mrb[0].mxu0
      %v583 = vpop.f32.mrb[0].mxu0
      %v584 = vadd.f32 %v239, %v583
      %v585 = vpop.f32.mrb[0].mxu0
      %586 = vmatprep.mubr.bf16.mxu0 %v477
      %587 = vmatmul.mubr.bf16.gmra.mrb[0].mxu0 %v349
      %v588 = vpop.f32.mrb[0].mxu0
      %v589 = vadd.f32 %v239, %v588
      %v590 = vpop.f32.mrb[0].mxu0
      %v591 = vpop.f32.mrb[0].mxu0
      %v592 = vadd.f32 %v239, %v591
      %v593 = vpop.f32.mrb[0].mxu0
      %594 = vmatprep.mubr.bf16.mxu0 %v480
      %595 = vmatmul.mubr.bf16.gmra.mrb[0].mxu0 %v351
      %v596 = vpop.f32.mrb[0].mxu0
      %v597 = vadd.f32 %v239, %v596
      %v598 = vpop.f32.mrb[0].mxu0
      %v599 = vpop.f32.mrb[0].mxu0
      %v600 = vadd.f32 %v239, %v599
      %v601 = vpop.f32.mrb[0].mxu0
      %602 = vmatprep.mubr.bf16.mxu0 %v483
      %603 = vmatmul.mubr.bf16.gmra.mrb[0].mxu0 %v353
      %v604 = vpop.f32.mrb[0].mxu0
      %v605 = vadd.f32 %v239, %v604
      %v606 = vpop.f32.mrb[0].mxu0
      %v607 = vpop.f32.mrb[0].mxu0
      %v608 = vadd.f32 %v239, %v607
      %v609 = vpop.f32.mrb[0].mxu0
      %610 = vmatprep.mubr.bf16.mxu0 %v486
      %611 = vmatmul.mubr.bf16.gmra.mrb[0].mxu0 %v355
      %v612 = vpop.f32.mrb[0].mxu0
      %v613 = vadd.f32 %v239, %v612
      %v614 = vpop.f32.mrb[0].mxu0
      %v615 = vpop.f32.mrb[0].mxu0
      %v616 = vadd.f32 %v239, %v615
      %v617 = vpop.f32.mrb[0].mxu0
      %618 = vmatprep.mubr.bf16.mxu0 %v489
      %619 = vmatmul.mubr.bf16.gmra.mrb[0].mxu0 %v357
      %v620 = vpop.f32.mrb[0].mxu0
      %v621 = vadd.f32 %v239, %v620
      %v622 = vpop.f32.mrb[0].mxu0
      %v623 = vpop.f32.mrb[0].mxu0
      %v624 = vadd.f32 %v239, %v623
      %v625 = vpop.f32.mrb[0].mxu0
      %626 = vmatprep.mubr.bf16.mxu0 %v492
      %627 = vmatmul.mubr.bf16.gmra.mrb[0].mxu0 %v359
      %v628 = vpop.f32.mrb[0].mxu0
      %v629 = vadd.f32 %v239, %v628
      %v630 = vpop.f32.mrb[0].mxu0
      %v631 = vpop.f32.mrb[0].mxu0
      %v632 = vadd.f32 %v239, %v631
      %v633 = vpop.f32.mrb[0].mxu0
      %634 = vmatprep.mubr.bf16.mxu0 %v495
      %635 = vmatmul.mubr.bf16.gmra.mrb[0].mxu0 %v361
      %v636 = vpop.f32.mrb[0].mxu0
      %v637 = vadd.f32 %v239, %v636
      %v638 = vpop.f32.mrb[0].mxu0
      %v639 = vpop.f32.mrb[0].mxu0
      %v640 = vadd.f32 %v239, %v639
      %v641 = vpop.f32.mrb[0].mxu0
      %642 = vmatprep.mubr.bf16.mxu0 %v498
      %643 = vmatmul.mubr.bf16.gmra.mrb[0].mxu0 %v363
      %v644 = vpop.f32.mrb[0].mxu0
      %v645 = vadd.f32 %v239, %v644
      %v646 = vpop.f32.mrb[0].mxu0
      %v647 = vpop.f32.mrb[0].mxu0
      %v648 = vadd.f32 %v239, %v647
      %v649 = vpop.f32.mrb[0].mxu0
      %650 = vmatprep.mubr.bf16.mxu0 %v501
      %651 = vmatmul.mubr.bf16.gmra.mrb[0].mxu0 %v365
      %v652 = vpop.f32.mrb[0].mxu0
      %v653 = vadd.f32 %v239, %v652
      %v654 = vpop.f32.mrb[0].mxu0
      %v655 = vpop.f32.mrb[0].mxu0
      %v656 = vadd.f32 %v239, %v655
      %v657 = vpop.f32.mrb[0].mxu0
      %658 = vmatprep.mubr.bf16.mxu0 %v504
      %659 = vmatmul.mubr.bf16.gmra.mrb[0].mxu0 %v367
      %v660 = vpop.f32.mrb[0].mxu0
      %v661 = vadd.f32 %v239, %v660
      %v662 = vpop.f32.mrb[0].mxu0
      %v663 = vpop.f32.mrb[0].mxu0
      %v664 = vadd.f32 %v239, %v663
      %v665 = vpop.f32.mrb[0].mxu0
      %666 = vdwg.mxu0
      %v667 = vmax.f32 %v541, 0.0
      %v668 = vmax.f32 %v544, 0.0
      %v669 = vmax.f32 %v549, 0.0
      %v670 = vmax.f32 %v552, 0.0
      %v671 = vmax.f32 %v557, 0.0
      %v672 = vmax.f32 %v560, 0.0
      %v673 = vmax.f32 %v565, 0.0
      %v674 = vmax.f32 %v568, 0.0
      %v675 = vmax.f32 %v573, 0.0
      %v676 = vmax.f32 %v576, 0.0
      %v677 = vmax.f32 %v581, 0.0
      %v678 = vmax.f32 %v584, 0.0
      %v679 = vmax.f32 %v589, 0.0
      %v680 = vmax.f32 %v592, 0.0
      %v681 = vmax.f32 %v597, 0.0
      %v682 = vmax.f32 %v600, 0.0
      %v683 = vmax.f32 %v605, 0.0
      %v684 = vmax.f32 %v608, 0.0
      %v685 = vmax.f32 %v613, 0.0
      %v686 = vmax.f32 %v616, 0.0
      %v687 = vmax.f32 %v621, 0.0
      %v688 = vmax.f32 %v624, 0.0
      %v689 = vmax.f32 %v629, 0.0
      %v690 = vmax.f32 %v632, 0.0
      %v691 = vmax.f32 %v637, 0.0
      %v692 = vmax.f32 %v640, 0.0
      %v693 = vmax.f32 %v645, 0.0
      %v694 = vmax.f32 %v648, 0.0
      %v695 = vmax.f32 %v653, 0.0
      %v696 = vmax.f32 %v656, 0.0
      %v697 = vmax.f32 %v661, 0.0
      %v698 = vmax.f32 %v664, 0.0
      %v699 = vpack.c.bf16 %v668, %v667
      %v700 = vpack.c.bf16 %v670, %v669
      %v701 = vpack.c.bf16 %v672, %v671
      %v702 = vpack.c.bf16 %v674, %v673
      %v703 = vpack.c.bf16 %v676, %v675
      %v704 = vpack.c.bf16 %v678, %v677
      %v705 = vpack.c.bf16 %v680, %v679
      %v706 = vpack.c.bf16 %v682, %v681
      %v707 = vpack.c.bf16 %v684, %v683
      %v708 = vpack.c.bf16 %v686, %v685
      %v709 = vpack.c.bf16 %v688, %v687
      %v710 = vpack.c.bf16 %v690, %v689
      %v711 = vpack.c.bf16 %v692, %v691
      %v712 = vpack.c.bf16 %v694, %v693
      %v713 = vpack.c.bf16 %v696, %v695
      %v714 = vpack.c.bf16 %v698, %v697
      %v731 = vunpack.c.l.b16 %v699
      %v732 = vunpack.c.h.b16 %v699
      %v733 = vunpack.c.l.b16 %v700
      %v734 = vunpack.c.h.b16 %v700
      %v735 = vunpack.c.l.b16 %v701
      %v736 = vunpack.c.h.b16 %v701
      %v737 = vunpack.c.l.b16 %v702
      %v738 = vunpack.c.h.b16 %v702
      %v739 = vunpack.c.l.b16 %v703
      %v740 = vunpack.c.h.b16 %v703
      %v741 = vunpack.c.l.b16 %v704
      %v742 = vunpack.c.h.b16 %v704
      %v743 = vunpack.c.l.b16 %v705
      %v744 = vunpack.c.h.b16 %v705
      %v745 = vunpack.c.l.b16 %v706
      %v746 = vunpack.c.h.b16 %v706
      %v747 = vunpack.c.l.b16 %v707
      %v748 = vunpack.c.h.b16 %v707
      %v749 = vunpack.c.l.b16 %v708
      %v750 = vunpack.c.h.b16 %v708
      %v751 = vunpack.c.l.b16 %v709
      %v752 = vunpack.c.h.b16 %v709
      %v753 = vunpack.c.l.b16 %v710
      %v754 = vunpack.c.h.b16 %v710
      %v755 = vunpack.c.l.b16 %v711
      %v756 = vunpack.c.h.b16 %v711
      %v757 = vunpack.c.l.b16 %v712
      %v758 = vunpack.c.h.b16 %v712
      %v759 = vunpack.c.l.b16 %v713
      %v760 = vunpack.c.h.b16 %v713
      %v761 = vunpack.c.l.b16 %v714
      %v762 = vunpack.c.h.b16 %v714
      %v763 = vpack.c.b16 %v731, %v731
      %v764 = vpack.c.b16 %v732, %v732
      %v765 = vpack.c.b16 %v733, %v733
      %v766 = vpack.c.b16 %v734, %v734
      %v767 = vpack.c.b16 %v735, %v735
      %v768 = vpack.c.b16 %v736, %v736
      %v769 = vpack.c.b16 %v737, %v737
      %v770 = vpack.c.b16 %v738, %v738
      %v771 = vpack.c.b16 %v739, %v739
      %v772 = vpack.c.b16 %v740, %v740
      %v773 = vpack.c.b16 %v741, %v741
      %v774 = vpack.c.b16 %v742, %v742
      %v775 = vpack.c.b16 %v743, %v743
      %v776 = vpack.c.b16 %v744, %v744
      %v777 = vpack.c.b16 %v745, %v745
      %v778 = vpack.c.b16 %v746, %v746
      %v779 = vpack.c.b16 %v747, %v747
      %v780 = vpack.c.b16 %v748, %v748
      %v781 = vpack.c.b16 %v749, %v749
      %v782 = vpack.c.b16 %v750, %v750
      %v783 = vpack.c.b16 %v751, %v751
      %v784 = vpack.c.b16 %v752, %v752
      %v785 = vpack.c.b16 %v753, %v753
      %v786 = vpack.c.b16 %v754, %v754
      %v787 = vpack.c.b16 %v755, %v755
      %v788 = vpack.c.b16 %v756, %v756
      %v789 = vpack.c.b16 %v757, %v757
      %v790 = vpack.c.b16 %v758, %v758
      %v791 = vpack.c.b16 %v759, %v759
      %v792 = vpack.c.b16 %v760, %v760
      %v793 = vpack.c.b16 %v761, %v761
      %v794 = vpack.c.b16 %v762, %v762
      %vm827 = vcmask 257024
      %828 = vst.msk [vmem:[%s175] sm:$0xf] %vm827, %v763
      %829 = vst.msk [vmem:[%s175 + $0x4] sm:$0xf] %vm827, %v764
      %830 = vst.msk [vmem:[%s175 + $0x8] sm:$0xf] %vm827, %v765
      %831 = vst.msk [vmem:[%s175 + $0xc] sm:$0xf] %vm827, %v766
      %832 = vst.msk [vmem:[%s175 + $0x10] sm:$0xf] %vm827, %v767
      %833 = vst.msk [vmem:[%s175 + $0x14] sm:$0xf] %vm827, %v768
      %834 = vst.msk [vmem:[%s175 + $0x18] sm:$0xf] %vm827, %v769
      %835 = vst.msk [vmem:[%s175 + $0x1c] sm:$0xf] %vm827, %v770
      %836 = vst.msk [vmem:[%s175 + $0x20] sm:$0xf] %vm827, %v771
      %837 = vst.msk [vmem:[%s175 + $0x24] sm:$0xf] %vm827, %v772
      %838 = vst.msk [vmem:[%s175 + $0x28] sm:$0xf] %vm827, %v773
      %839 = vst.msk [vmem:[%s175 + $0x2c] sm:$0xf] %vm827, %v774
      %840 = vst.msk [vmem:[%s175 + $0x30] sm:$0xf] %vm827, %v775
      %841 = vst.msk [vmem:[%s175 + $0x34] sm:$0xf] %vm827, %v776
      %842 = vst.msk [vmem:[%s175 + $0x38] sm:$0xf] %vm827, %v777
      %843 = vst.msk [vmem:[%s175 + $0x3c] sm:$0xf] %vm827, %v778
      %844 = vst.msk [vmem:[%s175 + $0x40] sm:$0xf] %vm827, %v779
      %845 = vst.msk [vmem:[%s175 + $0x44] sm:$0xf] %vm827, %v780
      %846 = vst.msk [vmem:[%s175 + $0x48] sm:$0xf] %vm827, %v781
      %847 = vst.msk [vmem:[%s175 + $0x4c] sm:$0xf] %vm827, %v782
      %848 = vst.msk [vmem:[%s175 + $0x50] sm:$0xf] %vm827, %v783
      %849 = vst.msk [vmem:[%s175 + $0x54] sm:$0xf] %vm827, %v784
      %850 = vst.msk [vmem:[%s175 + $0x58] sm:$0xf] %vm827, %v785
      %851 = vst.msk [vmem:[%s175 + $0x5c] sm:$0xf] %vm827, %v786
      %852 = vst.msk [vmem:[%s175 + $0x60] sm:$0xf] %vm827, %v787
      %853 = vst.msk [vmem:[%s175 + $0x64] sm:$0xf] %vm827, %v788
      %854 = vst.msk [vmem:[%s175 + $0x68] sm:$0xf] %vm827, %v789
      %855 = vst.msk [vmem:[%s175 + $0x6c] sm:$0xf] %vm827, %v790
      %856 = vst.msk [vmem:[%s175 + $0x70] sm:$0xf] %vm827, %v791
      %857 = vst.msk [vmem:[%s175 + $0x74] sm:$0xf] %vm827, %v792
      %858 = vst.msk [vmem:[%s175 + $0x78] sm:$0xf] %vm827, %v793
      %859 = vst.msk [vmem:[%s175 + $0x7c] sm:$0xf] %vm827, %v794
      %s860 = smul.u32 32, %s14
      %p861 = scmp.lt.s32.totalorder %s860, 63
      %s862 = scalar_select %p861, %s860, 63
      %s863 = smul.addr %s862, 4
      %s864 = scalar_lea.vmem %s3, %s863
      // Predicated region
      $region33: #{policy_forward.4} parent=31 // pred_check
        %p865 = pneg %p100
      $region34: #{policy_forward.4} parent=31 // pred_check_branch
        %867 = sbr.rel (%p865) target = $region36
      $region35: #{policy_forward.4} parent=31 // pred_region
        %s868 = smul.u32 32, %s14
      $region36: #{policy_forward.4} parent=31 // pred_fallthru
        _
    $region32: #{policy_forward.4} parent=5 // pred_fallthru
      _
    %p869 = scmp.le.s32.totalorder 2, %s9
    // Predicated region
    $region37: #{policy_forward.4} parent=5 // pred_check
      %p870 = pneg %p869
    $region38: #{policy_forward.4} parent=5 // pred_check_branch
      %872 = sbr.rel (%p870) target = $region40
    $region39: #{policy_forward.4} parent=5 // pred_region
      %s873 = ssub.s32 %s9, 2
      // Predicated region
      $region41: #{policy_forward.4} parent=39 // pred_check
        %p874 = pneg %p106
      $region42: #{policy_forward.4} parent=39 // pred_check_branch
        %876 = sbr.rel (%p874) target = $region44
      $region43: #{policy_forward.4} parent=39 // pred_region
        %s877 = smul.u32 32, %s15
        %p878 = scmp.lt.s32.totalorder %s877, 63
        %s879 = scalar_select %p878, %s877, 63
        %s880 = smul.addr %s879, 4
        %s881 = scalar_lea.vmem %s3, %s880
      $region44: #{policy_forward.4} parent=39 // pred_fallthru
        _
    $region40: #{policy_forward.4} parent=5 // pred_fallthru
      _
  $region6: #{policy_forward.4} parent=0 // loop_footer
    %s13 = sadd.s32 1, %s9
  $region7: #{policy_forward.4} parent=0 // loop_footer_branch
    %8 = sbr.rel target = $region3
  $region8: #{policy_forward.4} parent=0 // loop_exit
    _

// kernel: policy_forward.5
$region0: #{policy_forward.5}
  #allocation0 [shape = 'u32[]', space=smem, size = 0x4, offset = 0x4, fixed_abs, tag = 'smem constant byte address 0x4 - core index']
  #allocation1 [shape = 'u32[144,128]{1,0:T(1,128)}', space=vmem, size = 0x12000, scoped, tag = 'internal scratch']
  %s0 = inlined_call_operand.vmem [shape: bf16[72,512], index: 0, kind: input, shape index: {}]
  %s1 = inlined_call_operand.vmem [shape: bf16[512,64], index: 1, kind: input, shape index: {}]
  %s2 = inlined_call_operand.vmem [shape: f32[1,64], index: 2, kind: input, shape index: {}]
  %s3 = inlined_call_operand.vmem [shape: bf16[72,64], index: 3, kind: output, shape index: {}]
  %s4 = sld [smem:[#allocation0]]
  $region22: #{policy_forward.5} parent=0
    _
  %s6 = ssub.s32 1, %s4
  %s7 = scalar_select 0, %s6, %s4
  // Predicated region
  $region2: #{policy_forward.5} parent=0 // pred_check
    _
  $region3: #{policy_forward.5} parent=0 // pred_check_branch
    %9 = sbr.rel (0) target = $region5
  $region4: #{policy_forward.5} parent=0 // pred_region
    _
  $region5: #{policy_forward.5} parent=0 // pred_fallthru
    _
  // Predicated region
  $region6: #{policy_forward.5} parent=0 // pred_check
    _
  $region7: #{policy_forward.5} parent=0 // pred_check_branch
    %11 = sbr.rel (0) target = $region9
  $region8: #{policy_forward.5} parent=0 // pred_region
    _
  $region9: #{policy_forward.5} parent=0 // pred_fallthru
    _
  // Predicated region
  $region10: #{policy_forward.5} parent=0 // pred_check
    _
  $region11: #{policy_forward.5} parent=0 // pred_check_branch
    %13 = sbr.rel (0) target = $region13
  $region12: #{policy_forward.5} parent=0 // pred_region
    _
  $region13: #{policy_forward.5} parent=0 // pred_fallthru
    _
  %v15 = vld [vmem:[%s0] sm:$0xff]
  %v16 = vld [vmem:[%s0 + $0x8] sm:$0xff]
  %v17 = vld [vmem:[%s0 + $0x10] sm:$0xff]
  %v18 = vld [vmem:[%s0 + $0x18] sm:$0xff]
  %v19 = vld [vmem:[%s0 + $0x20] sm:$0xff]
  %v20 = vld [vmem:[%s0 + $0x28] sm:$0xff]
  %v21 = vld [vmem:[%s0 + $0x30] sm:$0xff]
  %v22 = vld [vmem:[%s0 + $0x38] sm:$0xff]
  %v23 = vld [vmem:[%s0 + $0x40] sm:$0xff]
  %v24 = vld [vmem:[%s0 + $0x48] sm:$0xff]
  %v25 = vld [vmem:[%s0 + $0x50] sm:$0xff]
  %v26 = vld [vmem:[%s0 + $0x58] sm:$0xff]
  %v27 = vld [vmem:[%s0 + $0x60] sm:$0xff]
  %v28 = vld [vmem:[%s0 + $0x68] sm:$0xff]
  %v29 = vld [vmem:[%s0 + $0x70] sm:$0xff]
  %v30 = vld [vmem:[%s0 + $0x78] sm:$0xff]
  %v31 = vld [vmem:[%s0 + $0x80] sm:$0xff]
  %v32 = vld [vmem:[%s0 + $0x88] sm:$0xff]
  %v33 = vld [vmem:[%s1] sm:$0xf]
  %v34 = vld [vmem:[%s1 + $0x4] sm:$0xf]
  %v35 = vld [vmem:[%s1 + $0x8] sm:$0xf]
  %v36 = vld [vmem:[%s1 + $0xc] sm:$0xf]
  %v37 = vld [vmem:[%s1 + $0x10] sm:$0xf]
  %v38 = vld [vmem:[%s1 + $0x14] sm:$0xf]
  %v39 = vld [vmem:[%s1 + $0x18] sm:$0xf]
  %v40 = vld [vmem:[%s1 + $0x1c] sm:$0xf]
  %v41 = vld [vmem:[%s1 + $0x20] sm:$0xf]
  %v42 = vld [vmem:[%s1 + $0x24] sm:$0xf]
  %v43 = vld [vmem:[%s1 + $0x28] sm:$0xf]
  %v44 = vld [vmem:[%s1 + $0x2c] sm:$0xf]
  %v45 = vld [vmem:[%s1 + $0x30] sm:$0xf]
  %v46 = vld [vmem:[%s1 + $0x34] sm:$0xf]
  %v47 = vld [vmem:[%s1 + $0x38] sm:$0xf]
  %v48 = vld [vmem:[%s1 + $0x3c] sm:$0xf]
  %v49 = vld [vmem:[%s1 + $0x40] sm:$0xf]
  %v50 = vld [vmem:[%s1 + $0x44] sm:$0xf]
  %v51 = vld [vmem:[%s1 + $0x48] sm:$0xf]
  %v52 = vld [vmem:[%s1 + $0x4c] sm:$0xf]
  %v53 = vld [vmem:[%s1 + $0x50] sm:$0xf]
  %v54 = vld [vmem:[%s1 + $0x54] sm:$0xf]
  %v55 = vld [vmem:[%s1 + $0x58] sm:$0xf]
  %v56 = vld [vmem:[%s1 + $0x5c] sm:$0xf]
  %v57 = vld [vmem:[%s1 + $0x60] sm:$0xf]
  %v58 = vld [vmem:[%s1 + $0x64] sm:$0xf]
  %v59 = vld [vmem:[%s1 + $0x68] sm:$0xf]
  %v60 = vld [vmem:[%s1 + $0x6c] sm:$0xf]
  %v61 = vld [vmem:[%s1 + $0x70] sm:$0xf]
  %v62 = vld [vmem:[%s1 + $0x74] sm:$0xf]
  %v63 = vld [vmem:[%s1 + $0x78] sm:$0xf]
  %v64 = vld [vmem:[%s1 + $0x7c] sm:$0xf]
  %v65 = vld [vmem:[%s1 + $0x80] sm:$0xf]
  %v66 = vld [vmem:[%s1 + $0x84] sm:$0xf]
  %v67 = vld [vmem:[%s1 + $0x88] sm:$0xf]
  %v68 = vld [vmem:[%s1 + $0x8c] sm:$0xf]
  %v69 = vld [vmem:[%s1 + $0x90] sm:$0xf]
  %v70 = vld [vmem:[%s1 + $0x94] sm:$0xf]
  %v71 = vld [vmem:[%s1 + $0x98] sm:$0xf]
  %v72 = vld [vmem:[%s1 + $0x9c] sm:$0xf]
  %v73 = vld [vmem:[%s1 + $0xa0] sm:$0xf]
  %v74 = vld [vmem:[%s1 + $0xa4] sm:$0xf]
  %v75 = vld [vmem:[%s1 + $0xa8] sm:$0xf]
  %v76 = vld [vmem:[%s1 + $0xac] sm:$0xf]
  %v77 = vld [vmem:[%s1 + $0xb0] sm:$0xf]
  %v78 = vld [vmem:[%s1 + $0xb4] sm:$0xf]
  %v79 = vld [vmem:[%s1 + $0xb8] sm:$0xf]
  %v80 = vld [vmem:[%s1 + $0xbc] sm:$0xf]
  %v81 = vld [vmem:[%s1 + $0xc0] sm:$0xf]
  %v82 = vld [vmem:[%s1 + $0xc4] sm:$0xf]
  %v83 = vld [vmem:[%s1 + $0xc8] sm:$0xf]
  %v84 = vld [vmem:[%s1 + $0xcc] sm:$0xf]
  %v85 = vld [vmem:[%s1 + $0xd0] sm:$0xf]
  %v86 = vld [vmem:[%s1 + $0xd4] sm:$0xf]
  %v87 = vld [vmem:[%s1 + $0xd8] sm:$0xf]
  %v88 = vld [vmem:[%s1 + $0xdc] sm:$0xf]
  %v89 = vld [vmem:[%s1 + $0xe0] sm:$0xf]
  %v90 = vld [vmem:[%s1 + $0xe4] sm:$0xf]
  %v91 = vld [vmem:[%s1 + $0xe8] sm:$0xf]
  %v92 = vld [vmem:[%s1 + $0xec] sm:$0xf]
  %v93 = vld [vmem:[%s1 + $0xf0] sm:$0xf]
  %v94 = vld [vmem:[%s1 + $0xf4] sm:$0xf]
  %v95 = vld [vmem:[%s1 + $0xf8] sm:$0xf]
  %v96 = vld [vmem:[%s1 + $0xfc] sm:$0xf]
  %v97 = vld [vmem:[%s2] sm:$0x1]
  %v99 = vlaneseq
  %v100 = vshrl.u32 %v99, 7
  %v101 = vsub.s32 0, %v100
  %v102 = vrot.slane %v97, %v101
  %v122 = vunpack.c.l.b16 %v15
  %v123 = vunpack.c.h.b16 %v15
  %v124 = vunpack.c.l.b16 %v16
  %v125 = vunpack.c.h.b16 %v16
  %v126 = vunpack.c.l.b16 %v17
  %v127 = vunpack.c.h.b16 %v17
  %v128 = vunpack.c.l.b16 %v18
  %v129 = vunpack.c.h.b16 %v18
  %v130 = vunpack.c.l.b16 %v19
  %v131 = vunpack.c.h.b16 %v19
  %v132 = vunpack.c.l.b16 %v20
  %v133 = vunpack.c.h.b16 %v20
  %v134 = vunpack.c.l.b16 %v21
  %v135 = vunpack.c.h.b16 %v21
  %v136 = vunpack.c.l.b16 %v22
  %v137 = vunpack.c.h.b16 %v22
  %v138 = vunpack.c.l.b16 %v23
  %v139 = vunpack.c.h.b16 %v23
  %v140 = vunpack.c.l.b16 %v24
  %v141 = vunpack.c.h.b16 %v24
  %v142 = vunpack.c.l.b16 %v25
  %v143 = vunpack.c.h.b16 %v25
  %v144 = vunpack.c.l.b16 %v26
  %v145 = vunpack.c.h.b16 %v26
  %v146 = vunpack.c.l.b16 %v27
  %v147 = vunpack.c.h.b16 %v27
  %v148 = vunpack.c.l.b16 %v28
  %v149 = vunpack.c.h.b16 %v28
  %v150 = vunpack.c.l.b16 %v29
  %v151 = vunpack.c.h.b16 %v29
  %v152 = vunpack.c.l.b16 %v30
  %v153 = vunpack.c.h.b16 %v30
  %v154 = vunpack.c.l.b16 %v31
  %v155 = vunpack.c.h.b16 %v31
  %v156 = vunpack.c.l.b16 %v32
  %v157 = vunpack.c.h.b16 %v32
  %v158 = vpack.c.b16 %v126, %v122
  %v159 = vpack.c.b16 %v127, %v123
  %v160 = vpack.c.b16 %v128, %v124
  %v161 = vpack.c.b16 %v129, %v125
  %v162 = vpack.c.b16 %v134, %v130
  %v163 = vpack.c.b16 %v135, %v131
  %v164 = vpack.c.b16 %v136, %v132
  %v165 = vpack.c.b16 %v137, %v133
  %v166 = vpack.c.b16 %v142, %v138
  %v167 = vpack.c.b16 %v143, %v139
  %v168 = vpack.c.b16 %v144, %v140
  %v169 = vpack.c.b16 %v145, %v141
  %v170 = vpack.c.b16 %v150, %v146
  %v171 = vpack.c.b16 %v151, %v147
  %v172 = vpack.c.b16 %v152, %v148
  %v173 = vpack.c.b16 %v153, %v149
  %v174 = vpack.c.b16 %v154, %v154
  %v175 = vpack.c.b16 %v155, %v155
  %v176 = vpack.c.b16 %v156, %v156
  %v177 = vpack.c.b16 %v157, %v157
  %v262 = vunpack.c.l.b16 %v33
  %v263 = vunpack.c.l.b16 %v34
  %v264 = vunpack.c.l.b16 %v35
  %v265 = vunpack.c.l.b16 %v36
  %v266 = vunpack.c.l.b16 %v37
  %v267 = vunpack.c.l.b16 %v38
  %v268 = vunpack.c.l.b16 %v39
  %v269 = vunpack.c.l.b16 %v40
  %v270 = vunpack.c.l.b16 %v41
  %v271 = vunpack.c.l.b16 %v42
  %v272 = vunpack.c.l.b16 %v43
  %v273 = vunpack.c.l.b16 %v44
  %v274 = vunpack.c.l.b16 %v45
  %v275 = vunpack.c.l.b16 %v46
  %v276 = vunpack.c.l.b16 %v47
  %v277 = vunpack.c.l.b16 %v48
  %v278 = vunpack.c.l.b16 %v49
  %v279 = vunpack.c.l.b16 %v50
  %v280 = vunpack.c.l.b16 %v51
  %v281 = vunpack.c.l.b16 %v52
  %v282 = vunpack.c.l.b16 %v53
  %v283 = vunpack.c.l.b16 %v54
  %v284 = vunpack.c.l.b16 %v55
  %v285 = vunpack.c.l.b16 %v56
  %v286 = vunpack.c.l.b16 %v57
  %v287 = vunpack.c.l.b16 %v58
  %v288 = vunpack.c.l.b16 %v59
  %v289 = vunpack.c.l.b16 %v60
  %v290 = vunpack.c.l.b16 %v61
  %v291 = vunpack.c.l.b16 %v62
  %v292 = vunpack.c.l.b16 %v63
  %v293 = vunpack.c.l.b16 %v64
  %v294 = vunpack.c.l.b16 %v65
  %v295 = vunpack.c.l.b16 %v66
  %v296 = vunpack.c.l.b16 %v67
  %v297 = vunpack.c.l.b16 %v68
  %v298 = vunpack.c.l.b16 %v69
  %v299 = vunpack.c.l.b16 %v70
  %v300 = vunpack.c.l.b16 %v71
  %v301 = vunpack.c.l.b16 %v72
  %v302 = vunpack.c.l.b16 %v73
  %v303 = vunpack.c.l.b16 %v74
  %v304 = vunpack.c.l.b16 %v75
  %v305 = vunpack.c.l.b16 %v76
  %v306 = vunpack.c.l.b16 %v77
  %v307 = vunpack.c.l.b16 %v78
  %v308 = vunpack.c.l.b16 %v79
  %v309 = vunpack.c.l.b16 %v80
  %v310 = vunpack.c.l.b16 %v81
  %v311 = vunpack.c.l.b16 %v82
  %v312 = vunpack.c.l.b16 %v83
  %v313 = vunpack.c.l.b16 %v84
  %v314 = vunpack.c.l.b16 %v85
  %v315 = vunpack.c.l.b16 %v86
  %v316 = vunpack.c.l.b16 %v87
  %v317 = vunpack.c.l.b16 %v88
  %v318 = vunpack.c.l.b16 %v89
  %v319 = vunpack.c.l.b16 %v90
  %v320 = vunpack.c.l.b16 %v91
  %v321 = vunpack.c.l.b16 %v92
  %v322 = vunpack.c.l.b16 %v93
  %v323 = vunpack.c.l.b16 %v94
  %v324 = vunpack.c.l.b16 %v95
  %v325 = vunpack.c.l.b16 %v96
  %v326 = vpack.c.b16 %v263, %v262
  %v327 = vpack.c.b16 %v265, %v264
  %v328 = vpack.c.b16 %v267, %v266
  %v329 = vpack.c.b16 %v269, %v268
  %v330 = vpack.c.b16 %v271, %v270
  %v331 = vpack.c.b16 %v273, %v272
  %v332 = vpack.c.b16 %v275, %v274
  %v333 = vpack.c.b16 %v277, %v276
  %v334 = vpack.c.b16 %v279, %v278
  %v335 = vpack.c.b16 %v281, %v280
  %v336 = vpack.c.b16 %v283, %v282
  %v337 = vpack.c.b16 %v285, %v284
  %v338 = vpack.c.b16 %v287, %v286
  %v339 = vpack.c.b16 %v289, %v288
  %v340 = vpack.c.b16 %v291, %v290
  %v341 = vpack.c.b16 %v293, %v292
  %v342 = vpack.c.b16 %v295, %v294
  %v343 = vpack.c.b16 %v297, %v296
  %v344 = vpack.c.b16 %v299, %v298
  %v345 = vpack.c.b16 %v301, %v300
  %v346 = vpack.c.b16 %v303, %v302
  %v347 = vpack.c.b16 %v305, %v304
  %v348 = vpack.c.b16 %v307, %v306
  %v349 = vpack.c.b16 %v309, %v308
  %v350 = vpack.c.b16 %v311, %v310
  %v351 = vpack.c.b16 %v313, %v312
  %v352 = vpack.c.b16 %v315, %v314
  %v353 = vpack.c.b16 %v317, %v316
  %v354 = vpack.c.b16 %v319, %v318
  %v355 = vpack.c.b16 %v321, %v320
  %v356 = vpack.c.b16 %v323, %v322
  %v357 = vpack.c.b16 %v325, %v324
  %390 = vmatprep.subr.bf16.mxu0 0
  %391 = vmatpush1.bf16.msra.mxu0 %v326
  %392 = vmatprep.subr.bf16.mxu0 0
  %393 = vmatpush1.bf16.msra.mxu0 %v327
  %394 = vmatprep.subr.bf16.mxu0 0
  %395 = vmatpush1.bf16.msra.mxu0 %v328
  %396 = vmatprep.subr.bf16.mxu0 0
  %397 = vmatpush1.bf16.msra.mxu0 %v329
  %398 = vmatprep.subr.bf16.mxu0 0
  %399 = vmatpush1.bf16.msra.mxu0 %v330
  %400 = vmatprep.subr.bf16.mxu0 0
  %401 = vmatpush1.bf16.msra.mxu0 %v331
  %402 = vmatprep.subr.bf16.mxu0 0
  %403 = vmatpush1.bf16.msra.mxu0 %v332
  %404 = vmatprep.subr.bf16.mxu0 0
  %405 = vmatpush1.bf16.msra.mxu0 %v333
  %406 = vmatprep.subr.bf16.mxu0 0
  %407 = vmatpush1.bf16.msra.mxu0 %v334
  %408 = vmatprep.subr.bf16.mxu0 0
  %409 = vmatpush1.bf16.msra.mxu0 %v335
  %410 = vmatprep.subr.bf16.mxu0 0
  %411 = vmatpush1.bf16.msra.mxu0 %v336
  %412 = vmatprep.subr.bf16.mxu0 0
  %413 = vmatpush1.bf16.msra.mxu0 %v337
  %414 = vmatprep.subr.bf16.mxu0 0
  %415 = vmatpush1.bf16.msra.mxu0 %v338
  %416 = vmatprep.subr.bf16.mxu0 0
  %417 = vmatpush1.bf16.msra.mxu0 %v339
  %418 = vmatprep.subr.bf16.mxu0 0
  %419 = vmatpush1.bf16.msra.mxu0 %v340
  %420 = vmatprep.subr.bf16.mxu0 0
  %421 = vmatpush1.bf16.msra.mxu0 %v341
  %422 = vmatprep.mubr.bf16.mxu0 %v159
  %423 = vmatmul.mubr.bf16.gmra.mrb[0].mxu0 %v158
  %v424 = vpop.f32.mrb[0].mxu0
  %v425 = vadd.f32 %v102, %v424
  %v426 = vpop.f32.mrb[0].mxu0
  %v427 = vpop.f32.mrb[0].mxu0
  %v428 = vadd.f32 %v102, %v427
  %v429 = vpop.f32.mrb[0].mxu0
  %430 = vmatprep.mubr.bf16.mxu0 %v163
  %431 = vmatmul.mubr.bf16.gmra.mrb[0].mxu0 %v162
  %v432 = vpop.f32.mrb[0].mxu0
  %v433 = vadd.f32 %v102, %v432
  %v434 = vpop.f32.mrb[0].mxu0
  %v435 = vpop.f32.mrb[0].mxu0
  %v436 = vadd.f32 %v102, %v435
  %v437 = vpop.f32.mrb[0].mxu0
  %438 = vmatprep.mubr.bf16.mxu0 %v167
  %439 = vmatmul.mubr.bf16.gmra.mrb[0].mxu0 %v166
  %v440 = vpop.f32.mrb[0].mxu0
  %v441 = vadd.f32 %v102, %v440
  %v442 = vpop.f32.mrb[0].mxu0
  %v443 = vpop.f32.mrb[0].mxu0
  %v444 = vadd.f32 %v102, %v443
  %v445 = vpop.f32.mrb[0].mxu0
  %446 = vmatprep.mubr.bf16.mxu0 %v171
  %447 = vmatmul.mubr.bf16.gmra.mrb[0].mxu0 %v170
  %v448 = vpop.f32.mrb[0].mxu0
  %v449 = vadd.f32 %v102, %v448
  %v450 = vpop.f32.mrb[0].mxu0
  %v451 = vpop.f32.mrb[0].mxu0
  %v452 = vadd.f32 %v102, %v451
  %v453 = vpop.f32.mrb[0].mxu0
  %454 = vmatprep.mubr.bf16.mxu0 %v175
  %455 = vmatmul.mubr.bf16.gmra.mrb[0].mxu0 %v174
  %v456 = vpop.f32.mrb[0].mxu0
  %v457 = vadd.f32 %v102, %v456
  %v458 = vpop.f32.mrb[0].mxu0
  %v459 = vpop.f32.mrb[0].mxu0
  %v460 = vpop.f32.mrb[0].mxu0
  %461 = vdwg.mxu0
  %462 = vmatprep.subr.bf16.mxu0 0
  %463 = vmatpush1.bf16.msra.mxu0 %v342
  %464 = vmatprep.subr.bf16.mxu0 0
  %465 = vmatpush1.bf16.msra.mxu0 %v343
  %466 = vmatprep.subr.bf16.mxu0 0
  %467 = vmatpush1.bf16.msra.mxu0 %v344
  %468 = vmatprep.subr.bf16.mxu0 0
  %469 = vmatpush1.bf16.msra.mxu0 %v345
  %470 = vmatprep.subr.bf16.mxu0 0
  %471 = vmatpush1.bf16.msra.mxu0 %v346
  %472 = vmatprep.subr.bf16.mxu0 0
  %473 = vmatpush1.bf16.msra.mxu0 %v347
  %474 = vmatprep.subr.bf16.mxu0 0
  %475 = vmatpush1.bf16.msra.mxu0 %v348
  %476 = vmatprep.subr.bf16.mxu0 0
  %477 = vmatpush1.bf16.msra.mxu0 %v349
  %478 = vmatprep.subr.bf16.mxu0 0
  %479 = vmatpush1.bf16.msra.mxu0 %v350
  %480 = vmatprep.subr.bf16.mxu0 0
  %481 = vmatpush1.bf16.msra.mxu0 %v351
  %482 = vmatprep.subr.bf16.mxu0 0
  %483 = vmatpush1.bf16.msra.mxu0 %v352
  %484 = vmatprep.subr.bf16.mxu0 0
  %485 = vmatpush1.bf16.msra.mxu0 %v353
  %486 = vmatprep.subr.bf16.mxu0 0
  %487 = vmatpush1.bf16.msra.mxu0 %v354
  %488 = vmatprep.subr.bf16.mxu0 0
  %489 = vmatpush1.bf16.msra.mxu0 %v355
  %490 = vmatprep.subr.bf16.mxu0 0
  %491 = vmatpush1.bf16.msra.mxu0 %v356
  %492 = vmatprep.subr.bf16.mxu0 0
  %493 = vmatpush1.bf16.msra.mxu0 %v357
  %494 = vmatprep.mubr.bf16.mxu0 %v161
  %495 = vmatmul.mubr.bf16.gmra.mrb[0].mxu0 %v160
  %v496 = vpop.f32.mrb[0].mxu0
  %v497 = vadd.f32 %v425, %v496
  %v498 = vpop.f32.mrb[0].mxu0
  %v499 = vpop.f32.mrb[0].mxu0
  %v500 = vadd.f32 %v428, %v499
  %v501 = vpop.f32.mrb[0].mxu0
  %502 = vmatprep.mubr.bf16.mxu0 %v165
  %503 = vmatmul.mubr.bf16.gmra.mrb[0].mxu0 %v164
  %v504 = vpop.f32.mrb[0].mxu0
  %v505 = vadd.f32 %v433, %v504
  %v506 = vpop.f32.mrb[0].mxu0
  %v507 = vpop.f32.mrb[0].mxu0
  %v508 = vadd.f32 %v436, %v507
  %v509 = vpop.f32.mrb[0].mxu0
  %510 = vmatprep.mubr.bf16.mxu0 %v169
  %511 = vmatmul.mubr.bf16.gmra.mrb[0].mxu0 %v168
  %v512 = vpop.f32.mrb[0].mxu0
  %v513 = vadd.f32 %v441, %v512
  %v514 = vpop.f32.mrb[0].mxu0
  %v515 = vpop.f32.mrb[0].mxu0
  %v516 = vadd.f32 %v444, %v515
  %v517 = vpop.f32.mrb[0].mxu0
  %518 = vmatprep.mubr.bf16.mxu0 %v173
  %519 = vmatmul.mubr.bf16.gmra.mrb[0].mxu0 %v172
  %v520 = vpop.f32.mrb[0].mxu0
  %v521 = vadd.f32 %v449, %v520
  %v522 = vpop.f32.mrb[0].mxu0
  %v523 = vpop.f32.mrb[0].mxu0
  %v524 = vadd.f32 %v452, %v523
  %v525 = vpop.f32.mrb[0].mxu0
  %526 = vmatprep.mubr.bf16.mxu0 %v177
  %527 = vmatmul.mubr.bf16.gmra.mrb[0].mxu0 %v176
  %v528 = vpop.f32.mrb[0].mxu0
  %v529 = vadd.f32 %v457, %v528
  %v530 = vpop.f32.mrb[0].mxu0
  %v531 = vpop.f32.mrb[0].mxu0
  %v532 = vpop.f32.mrb[0].mxu0
  %533 = vdwg.mxu0
  %v534 = vmax.f32 %v497, 0.0
  %v535 = vmax.f32 %v500, 0.0
  %v536 = vmax.f32 %v505, 0.0
  %v537 = vmax.f32 %v508, 0.0
  %v538 = vmax.f32 %v513, 0.0
  %v539 = vmax.f32 %v516, 0.0
  %v540 = vmax.f32 %v521, 0.0
  %v541 = vmax.f32 %v524, 0.0
  %v542 = vmax.f32 %v529, 0.0
  %v543 = vpack.c.bf16 %v535, %v534
  %v544 = vpack.c.bf16 %v537, %v536
  %v545 = vpack.c.bf16 %v539, %v538
  %v546 = vpack.c.bf16 %v541, %v540
  %v547 = vpack.c.bf16 %v542, %v542
  %v553 = vunpack.c.l.b16 %v543
  %v554 = vunpack.c.h.b16 %v543
  %v555 = vunpack.c.l.b16 %v544
  %v556 = vunpack.c.h.b16 %v544
  %v557 = vunpack.c.l.b16 %v545
  %v558 = vunpack.c.h.b16 %v545
  %v559 = vunpack.c.l.b16 %v546
  %v560 = vunpack.c.h.b16 %v546
  %v561 = vunpack.c.l.b16 %v547
  %v562 = vpack.c.b16 %v553, %v553
  %v563 = vpack.c.b16 %v554, %v554
  %v564 = vpack.c.b16 %v555, %v555
  %v565 = vpack.c.b16 %v556, %v556
  %v566 = vpack.c.b16 %v557, %v557
  %v567 = vpack.c.b16 %v558, %v558
  %v568 = vpack.c.b16 %v559, %v559
  %v569 = vpack.c.b16 %v560, %v560
  %v570 = vpack.c.b16 %v561, %v561
  %vm580 = vcmask 519168
  %581 = vst.msk [vmem:[%s3] sm:$0xf] %vm580, %v562
  %582 = vst.msk [vmem:[%s3 + $0x4] sm:$0xf] %vm580, %v563
  %583 = vst.msk [vmem:[%s3 + $0x8] sm:$0xf] %vm580, %v564
  %584 = vst.msk [vmem:[%s3 + $0xc] sm:$0xf] %vm580, %v565
  %585 = vst.msk [vmem:[%s3 + $0x10] sm:$0xf] %vm580, %v566
  %586 = vst.msk [vmem:[%s3 + $0x14] sm:$0xf] %vm580, %v567
  %587 = vst.msk [vmem:[%s3 + $0x18] sm:$0xf] %vm580, %v568
  %588 = vst.msk [vmem:[%s3 + $0x1c] sm:$0xf] %vm580, %v569
  %589 = vst.msk [vmem:[%s3 + $0x20] sm:$0xf] %vm580, %v570
  // Predicated region
  $region14: #{policy_forward.5} parent=0 // pred_check
    _
  $region15: #{policy_forward.5} parent=0 // pred_check_branch
    %591 = sbr.rel (0) target = $region17
  $region16: #{policy_forward.5} parent=0 // pred_region
    _
  $region17: #{policy_forward.5} parent=0 // pred_fallthru
    _
  // Predicated region
  $region18: #{policy_forward.5} parent=0 // pred_check
    _
  $region19: #{policy_forward.5} parent=0 // pred_check_branch
    %593 = sbr.rel (0) target = $region21
  $region20: #{policy_forward.5} parent=0 // pred_region
    _
  $region21: #{policy_forward.5} parent=0 // pred_fallthru
    _

// kernel: policy_forward.6
$region0: #{policy_forward.6}
  #allocation0 [shape = 'u32[]', space=smem, size = 0x4, offset = 0x4, fixed_abs, tag = 'smem constant byte address 0x4 - core index']
  #allocation1 [shape = 'u32[144,128]{1,0:T(1,128)}', space=vmem, size = 0x12000, scoped, tag = 'internal scratch']
  %s0 = inlined_call_operand.vmem [shape: bf16[32,576], index: 0, kind: input, shape index: {}]
  %s1 = inlined_call_operand.vmem [shape: bf16[576,64], index: 1, kind: input, shape index: {}]
  %s2 = inlined_call_operand.vmem [shape: f32[1,64], index: 2, kind: input, shape index: {}]
  %s3 = inlined_call_operand.vmem [shape: bf16[32,64], index: 3, kind: output, shape index: {}]
  %s4 = sld [smem:[#allocation0]]
  $region22: #{policy_forward.6} parent=0
    _
  %s6 = ssub.s32 1, %s4
  %s7 = scalar_select 0, %s6, %s4
  // Predicated region
  $region2: #{policy_forward.6} parent=0 // pred_check
    _
  $region3: #{policy_forward.6} parent=0 // pred_check_branch
    %9 = sbr.rel (0) target = $region5
  $region4: #{policy_forward.6} parent=0 // pred_region
    _
  $region5: #{policy_forward.6} parent=0 // pred_fallthru
    _
  // Predicated region
  $region6: #{policy_forward.6} parent=0 // pred_check
    _
  $region7: #{policy_forward.6} parent=0 // pred_check_branch
    %11 = sbr.rel (0) target = $region9
  $region8: #{policy_forward.6} parent=0 // pred_region
    _
  $region9: #{policy_forward.6} parent=0 // pred_fallthru
    _
  // Predicated region
  $region10: #{policy_forward.6} parent=0 // pred_check
    _
  $region11: #{policy_forward.6} parent=0 // pred_check_branch
    %13 = sbr.rel (0) target = $region13
  $region12: #{policy_forward.6} parent=0 // pred_region
    _
  $region13: #{policy_forward.6} parent=0 // pred_fallthru
    _
  %v15 = vld [vmem:[%s0] sm:$0xff]
  %v16 = vld [vmem:[%s0 + $0x8] sm:$0xff]
  %v17 = vld [vmem:[%s0 + $0x10] sm:$0xf]
  %v18 = vld [vmem:[%s0 + $0x14] sm:$0xff]
  %v19 = vld [vmem:[%s0 + $0x1c] sm:$0xff]
  %v20 = vld [vmem:[%s0 + $0x24] sm:$0xf]
  %v21 = vld [vmem:[%s0 + $0x28] sm:$0xff]
  %v22 = vld [vmem:[%s0 + $0x30] sm:$0xff]
  %v23 = vld [vmem:[%s0 + $0x38] sm:$0xf]
  %v24 = vld [vmem:[%s0 + $0x3c] sm:$0xff]
  %v25 = vld [vmem:[%s0 + $0x44] sm:$0xff]
  %v26 = vld [vmem:[%s0 + $0x4c] sm:$0xf]
  %v27 = vld [vmem:[%s1] sm:$0xf]
  %v28 = vld [vmem:[%s1 + $0x4] sm:$0xf]
  %v29 = vld [vmem:[%s1 + $0x8] sm:$0xf]
  %v30 = vld [vmem:[%s1 + $0xc] sm:$0xf]
  %v31 = vld [vmem:[%s1 + $0x10] sm:$0xf]
  %v32 = vld [vmem:[%s1 + $0x14] sm:$0xf]
  %v33 = vld [vmem:[%s1 + $0x18] sm:$0xf]
  %v34 = vld [vmem:[%s1 + $0x1c] sm:$0xf]
  %v35 = vld [vmem:[%s1 + $0x20] sm:$0xf]
  %v36 = vld [vmem:[%s1 + $0x24] sm:$0xf]
  %v37 = vld [vmem:[%s1 + $0x28] sm:$0xf]
  %v38 = vld [vmem:[%s1 + $0x2c] sm:$0xf]
  %v39 = vld [vmem:[%s1 + $0x30] sm:$0xf]
  %v40 = vld [vmem:[%s1 + $0x34] sm:$0xf]
  %v41 = vld [vmem:[%s1 + $0x38] sm:$0xf]
  %v42 = vld [vmem:[%s1 + $0x3c] sm:$0xf]
  %v43 = vld [vmem:[%s1 + $0x40] sm:$0xf]
  %v44 = vld [vmem:[%s1 + $0x44] sm:$0xf]
  %v45 = vld [vmem:[%s1 + $0x48] sm:$0xf]
  %v46 = vld [vmem:[%s1 + $0x4c] sm:$0xf]
  %v47 = vld [vmem:[%s1 + $0x50] sm:$0xf]
  %v48 = vld [vmem:[%s1 + $0x54] sm:$0xf]
  %v49 = vld [vmem:[%s1 + $0x58] sm:$0xf]
  %v50 = vld [vmem:[%s1 + $0x5c] sm:$0xf]
  %v51 = vld [vmem:[%s1 + $0x60] sm:$0xf]
  %v52 = vld [vmem:[%s1 + $0x64] sm:$0xf]
  %v53 = vld [vmem:[%s1 + $0x68] sm:$0xf]
  %v54 = vld [vmem:[%s1 + $0x6c] sm:$0xf]
  %v55 = vld [vmem:[%s1 + $0x70] sm:$0xf]
  %v56 = vld [vmem:[%s1 + $0x74] sm:$0xf]
  %v57 = vld [vmem:[%s1 + $0x78] sm:$0xf]
  %v58 = vld [vmem:[%s1 + $0x7c] sm:$0xf]
  %v59 = vld [vmem:[%s1 + $0x80] sm:$0xf]
  %v60 = vld [vmem:[%s1 + $0x84] sm:$0xf]
  %v61 = vld [vmem:[%s1 + $0x88] sm:$0xf]
  %v62 = vld [vmem:[%s1 + $0x8c] sm:$0xf]
  %v63 = vld [vmem:[%s1 + $0x90] sm:$0xf]
  %v64 = vld [vmem:[%s1 + $0x94] sm:$0xf]
  %v65 = vld [vmem:[%s1 + $0x98] sm:$0xf]
  %v66 = vld [vmem:[%s1 + $0x9c] sm:$0xf]
  %v67 = vld [vmem:[%s1 + $0xa0] sm:$0xf]
  %v68 = vld [vmem:[%s1 + $0xa4] sm:$0xf]
  %v69 = vld [vmem:[%s1 + $0xa8] sm:$0xf]
  %v70 = vld [vmem:[%s1 + $0xac] sm:$0xf]
  %v71 = vld [vmem:[%s1 + $0xb0] sm:$0xf]
  %v72 = vld [vmem:[%s1 + $0xb4] sm:$0xf]
  %v73 = vld [vmem:[%s1 + $0xb8] sm:$0xf]
  %v74 = vld [vmem:[%s1 + $0xbc] sm:$0xf]
  %v75 = vld [vmem:[%s1 + $0xc0] sm:$0xf]
  %v76 = vld [vmem:[%s1 + $0xc4] sm:$0xf]
  %v77 = vld [vmem:[%s1 + $0xc8] sm:$0xf]
  %v78 = vld [vmem:[%s1 + $0xcc] sm:$0xf]
  %v79 = vld [vmem:[%s1 + $0xd0] sm:$0xf]
  %v80 = vld [vmem:[%s1 + $0xd4] sm:$0xf]
  %v81 = vld [vmem:[%s1 + $0xd8] sm:$0xf]
  %v82 = vld [vmem:[%s1 + $0xdc] sm:$0xf]
  %v83 = vld [vmem:[%s1 + $0xe0] sm:$0xf]
  %v84 = vld [vmem:[%s1 + $0xe4] sm:$0xf]
  %v85 = vld [vmem:[%s1 + $0xe8] sm:$0xf]
  %v86 = vld [vmem:[%s1 + $0xec] sm:$0xf]
  %v87 = vld [vmem:[%s1 + $0xf0] sm:$0xf]
  %v88 = vld [vmem:[%s1 + $0xf4] sm:$0xf]
  %v89 = vld [vmem:[%s1 + $0xf8] sm:$0xf]
  %v90 = vld [vmem:[%s1 + $0xfc] sm:$0xf]
  %v91 = vld [vmem:[%s1 + $0x100] sm:$0xf]
  %v92 = vld [vmem:[%s1 + $0x104] sm:$0xf]
  %v93 = vld [vmem:[%s1 + $0x108] sm:$0xf]
  %v94 = vld [vmem:[%s1 + $0x10c] sm:$0xf]
  %v95 = vld [vmem:[%s1 + $0x110] sm:$0xf]
  %v96 = vld [vmem:[%s1 + $0x114] sm:$0xf]
  %v97 = vld [vmem:[%s1 + $0x118] sm:$0xf]
  %v98 = vld [vmem:[%s1 + $0x11c] sm:$0xf]
  %v99 = vld [vmem:[%s2] sm:$0x1]
  %v101 = vlaneseq
  %v102 = vshrl.u32 %v101, 7
  %v103 = vsub.s32 0, %v102
  %v104 = vrot.slane %v99, %v103
  %v118 = vunpack.c.l.b16 %v15
  %v119 = vunpack.c.h.b16 %v15
  %v120 = vunpack.c.l.b16 %v16
  %v121 = vunpack.c.h.b16 %v16
  %v122 = vunpack.c.l.b16 %v17
  %v123 = vunpack.c.l.b16 %v18
  %v124 = vunpack.c.h.b16 %v18
  %v125 = vunpack.c.l.b16 %v19
  %v126 = vunpack.c.h.b16 %v19
  %v127 = vunpack.c.l.b16 %v20
  %v128 = vunpack.c.l.b16 %v21
  %v129 = vunpack.c.h.b16 %v21
  %v130 = vunpack.c.l.b16 %v22
  %v131 = vunpack.c.h.b16 %v22
  %v132 = vunpack.c.l.b16 %v23
  %v133 = vunpack.c.l.b16 %v24
  %v134 = vunpack.c.h.b16 %v24
  %v135 = vunpack.c.l.b16 %v25
  %v136 = vunpack.c.h.b16 %v25
  %v137 = vunpack.c.l.b16 %v26
  %v138 = vpack.c.b16 %v123, %v118
  %v139 = vpack.c.b16 %v124, %v119
  %v140 = vpack.c.b16 %v125, %v120
  %v141 = vpack.c.b16 %v126, %v121
  %v142 = vpack.c.b16 %v127, %v122
  %v143 = vpack.c.b16 %v133, %v128
  %v144 = vpack.c.b16 %v134, %v129
  %v145 = vpack.c.b16 %v135, %v130
  %v146 = vpack.c.b16 %v136, %v131
  %v147 = vpack.c.b16 %v137, %v132
  %v228 = vunpack.c.l.b16 %v27
  %v229 = vunpack.c.l.b16 %v28
  %v230 = vunpack.c.l.b16 %v29
  %v231 = vunpack.c.l.b16 %v30
  %v232 = vunpack.c.l.b16 %v31
  %v233 = vunpack.c.l.b16 %v32
  %v234 = vunpack.c.l.b16 %v33
  %v235 = vunpack.c.l.b16 %v34
  %v236 = vunpack.c.l.b16 %v35
  %v237 = vunpack.c.l.b16 %v36
  %v238 = vunpack.c.l.b16 %v37
  %v239 = vunpack.c.l.b16 %v38
  %v240 = vunpack.c.l.b16 %v39
  %v241 = vunpack.c.l.b16 %v40
  %v242 = vunpack.c.l.b16 %v41
  %v243 = vunpack.c.l.b16 %v42
  %v244 = vunpack.c.l.b16 %v43
  %v245 = vunpack.c.l.b16 %v44
  %v246 = vunpack.c.l.b16 %v45
  %v247 = vunpack.c.l.b16 %v46
  %v248 = vunpack.c.l.b16 %v47
  %v249 = vunpack.c.l.b16 %v48
  %v250 = vunpack.c.l.b16 %v49
  %v251 = vunpack.c.l.b16 %v50
  %v252 = vunpack.c.l.b16 %v51
  %v253 = vunpack.c.l.b16 %v52
  %v254 = vunpack.c.l.b16 %v53
  %v255 = vunpack.c.l.b16 %v54
  %v256 = vunpack.c.l.b16 %v55
  %v257 = vunpack.c.l.b16 %v56
  %v258 = vunpack.c.l.b16 %v57
  %v259 = vunpack.c.l.b16 %v58
  %v260 = vunpack.c.l.b16 %v59
  %v261 = vunpack.c.l.b16 %v60
  %v262 = vunpack.c.l.b16 %v61
  %v263 = vunpack.c.l.b16 %v62
  %v264 = vunpack.c.l.b16 %v63
  %v265 = vunpack.c.l.b16 %v64
  %v266 = vunpack.c.l.b16 %v65
  %v267 = vunpack.c.l.b16 %v66
  %v268 = vunpack.c.l.b16 %v67
  %v269 = vunpack.c.l.b16 %v68
  %v270 = vunpack.c.l.b16 %v69
  %v271 = vunpack.c.l.b16 %v70
  %v272 = vunpack.c.l.b16 %v71
  %v273 = vunpack.c.l.b16 %v72
  %v274 = vunpack.c.l.b16 %v73
  %v275 = vunpack.c.l.b16 %v74
  %v276 = vunpack.c.l.b16 %v75
  %v277 = vunpack.c.l.b16 %v76
  %v278 = vunpack.c.l.b16 %v77
  %v279 = vunpack.c.l.b16 %v78
  %v280 = vunpack.c.l.b16 %v79
  %v281 = vunpack.c.l.b16 %v80
  %v282 = vunpack.c.l.b16 %v81
  %v283 = vunpack.c.l.b16 %v82
  %v284 = vunpack.c.l.b16 %v83
  %v285 = vunpack.c.l.b16 %v84
  %v286 = vunpack.c.l.b16 %v85
  %v287 = vunpack.c.l.b16 %v86
  %v288 = vunpack.c.l.b16 %v87
  %v289 = vunpack.c.l.b16 %v88
  %v290 = vunpack.c.l.b16 %v89
  %v291 = vunpack.c.l.b16 %v90
  %v292 = vunpack.c.l.b16 %v91
  %v293 = vunpack.c.l.b16 %v92
  %v294 = vunpack.c.l.b16 %v93
  %v295 = vunpack.c.l.b16 %v94
  %v296 = vunpack.c.l.b16 %v95
  %v297 = vunpack.c.l.b16 %v96
  %v298 = vunpack.c.l.b16 %v97
  %v299 = vunpack.c.l.b16 %v98
  %v300 = vpack.c.b16 %v229, %v228
  %v301 = vpack.c.b16 %v231, %v230
  %v302 = vpack.c.b16 %v233, %v232
  %v303 = vpack.c.b16 %v235, %v234
  %v304 = vpack.c.b16 %v237, %v236
  %v305 = vpack.c.b16 %v239, %v238
  %v306 = vpack.c.b16 %v241, %v240
  %v307 = vpack.c.b16 %v243, %v242
  %v308 = vpack.c.b16 %v245, %v244
  %v309 = vpack.c.b16 %v247, %v246
  %v310 = vpack.c.b16 %v249, %v248
  %v311 = vpack.c.b16 %v251, %v250
  %v312 = vpack.c.b16 %v253, %v252
  %v313 = vpack.c.b16 %v255, %v254
  %v314 = vpack.c.b16 %v257, %v256
  %v315 = vpack.c.b16 %v259, %v258
  %v316 = vpack.c.b16 %v261, %v260
  %v317 = vpack.c.b16 %v263, %v262
  %v318 = vpack.c.b16 %v265, %v264
  %v319 = vpack.c.b16 %v267, %v266
  %v320 = vpack.c.b16 %v269, %v268
  %v321 = vpack.c.b16 %v271, %v270
  %v322 = vpack.c.b16 %v273, %v272
  %v323 = vpack.c.b16 %v275, %v274
  %v324 = vpack.c.b16 %v277, %v276
  %v325 = vpack.c.b16 %v279, %v278
  %v326 = vpack.c.b16 %v281, %v280
  %v327 = vpack.c.b16 %v283, %v282
  %v328 = vpack.c.b16 %v285, %v284
  %v329 = vpack.c.b16 %v287, %v286
  %v330 = vpack.c.b16 %v289, %v288
  %v331 = vpack.c.b16 %v291, %v290
  %v332 = vpack.c.b16 %v293, %v292
  %v333 = vpack.c.b16 %v295, %v294
  %v334 = vpack.c.b16 %v297, %v296
  %v335 = vpack.c.b16 %v299, %v298
  %vm372 = vcmask 523264
  %v374 = vsel %vm372, %v142, 0
  %v377 = vsel %vm372, %v147, 0
  %379 = vmatprep.subr.bf16.mxu0 0
  %380 = vmatpush1.bf16.msra.mxu0 %v300
  %381 = vmatprep.subr.bf16.mxu0 0
  %382 = vmatpush1.bf16.msra.mxu0 %v301
  %383 = vmatprep.subr.bf16.mxu0 0
  %384 = vmatpush1.bf16.msra.mxu0 %v302
  %385 = vmatprep.subr.bf16.mxu0 0
  %386 = vmatpush1.bf16.msra.mxu0 %v303
  %387 = vmatprep.subr.bf16.mxu0 0
  %388 = vmatpush1.bf16.msra.mxu0 %v304
  %389 = vmatprep.subr.bf16.mxu0 0
  %390 = vmatpush1.bf16.msra.mxu0 %v305
  %391 = vmatprep.subr.bf16.mxu0 0
  %392 = vmatpush1.bf16.msra.mxu0 %v306
  %393 = vmatprep.subr.bf16.mxu0 0
  %394 = vmatpush1.bf16.msra.mxu0 %v307
  %395 = vmatprep.subr.bf16.mxu0 0
  %396 = vmatpush1.bf16.msra.mxu0 %v308
  %397 = vmatprep.subr.bf16.mxu0 0
  %398 = vmatpush1.bf16.msra.mxu0 %v309
  %399 = vmatprep.subr.bf16.mxu0 0
  %400 = vmatpush1.bf16.msra.mxu0 %v310
  %401 = vmatprep.subr.bf16.mxu0 0
  %402 = vmatpush1.bf16.msra.mxu0 %v311
  %403 = vmatprep.subr.bf16.mxu0 0
  %404 = vmatpush1.bf16.msra.mxu0 %v312
  %405 = vmatprep.subr.bf16.mxu0 0
  %406 = vmatpush1.bf16.msra.mxu0 %v313
  %407 = vmatprep.subr.bf16.mxu0 0
  %408 = vmatpush1.bf16.msra.mxu0 %v314
  %409 = vmatprep.subr.bf16.mxu0 0
  %410 = vmatpush1.bf16.msra.mxu0 %v315
  %411 = vmatprep.mubr.bf16.mxu0 %v139
  %412 = vmatmul.mubr.bf16.gmra.mrb[0].mxu0 %v138
  %v413 = vpop.f32.mrb[0].mxu0
  %v414 = vadd.f32 %v104, %v413
  %v415 = vpop.f32.mrb[0].mxu0
  %v416 = vpop.f32.mrb[0].mxu0
  %v417 = vadd.f32 %v104, %v416
  %v418 = vpop.f32.mrb[0].mxu0
  %419 = vmatprep.mubr.bf16.mxu0 %v144
  %420 = vmatmul.mubr.bf16.gmra.mrb[0].mxu0 %v143
  %v421 = vpop.f32.mrb[0].mxu0
  %v422 = vadd.f32 %v104, %v421
  %v423 = vpop.f32.mrb[0].mxu0
  %v424 = vpop.f32.mrb[0].mxu0
  %v425 = vadd.f32 %v104, %v424
  %v426 = vpop.f32.mrb[0].mxu0
  %427 = vdwg.mxu0
  %428 = vmatprep.subr.bf16.mxu0 0
  %429 = vmatpush1.bf16.msra.mxu0 %v316
  %430 = vmatprep.subr.bf16.mxu0 0
  %431 = vmatpush1.bf16.msra.mxu0 %v317
  %432 = vmatprep.subr.bf16.mxu0 0
  %433 = vmatpush1.bf16.msra.mxu0 %v318
  %434 = vmatprep.subr.bf16.mxu0 0
  %435 = vmatpush1.bf16.msra.mxu0 %v319
  %436 = vmatprep.subr.bf16.mxu0 0
  %437 = vmatpush1.bf16.msra.mxu0 %v320
  %438 = vmatprep.subr.bf16.mxu0 0
  %439 = vmatpush1.bf16.msra.mxu0 %v321
  %440 = vmatprep.subr.bf16.mxu0 0
  %441 = vmatpush1.bf16.msra.mxu0 %v322
  %442 = vmatprep.subr.bf16.mxu0 0
  %443 = vmatpush1.bf16.msra.mxu0 %v323
  %444 = vmatprep.subr.bf16.mxu0 0
  %445 = vmatpush1.bf16.msra.mxu0 %v324
  %446 = vmatprep.subr.bf16.mxu0 0
  %447 = vmatpush1.bf16.msra.mxu0 %v325
  %448 = vmatprep.subr.bf16.mxu0 0
  %449 = vmatpush1.bf16.msra.mxu0 %v326
  %450 = vmatprep.subr.bf16.mxu0 0
  %451 = vmatpush1.bf16.msra.mxu0 %v327
  %452 = vmatprep.subr.bf16.mxu0 0
  %453 = vmatpush1.bf16.msra.mxu0 %v328
  %454 = vmatprep.subr.bf16.mxu0 0
  %455 = vmatpush1.bf16.msra.mxu0 %v329
  %456 = vmatprep.subr.bf16.mxu0 0
  %457 = vmatpush1.bf16.msra.mxu0 %v330
  %458 = vmatprep.subr.bf16.mxu0 0
  %459 = vmatpush1.bf16.msra.mxu0 %v331
  %460 = vmatprep.mubr.bf16.mxu0 %v141
  %461 = vmatmul.mubr.bf16.gmra.mrb[0].mxu0 %v140
  %v462 = vpop.f32.mrb[0].mxu0
  %v463 = vadd.f32 %v414, %v462
  %v464 = vpop.f32.mrb[0].mxu0
  %v465 = vpop.f32.mrb[0].mxu0
  %v466 = vadd.f32 %v417, %v465
  %v467 = vpop.f32.mrb[0].mxu0
  %468 = vmatprep.mubr.bf16.mxu0 %v146
  %469 = vmatmul.mubr.bf16.gmra.mrb[0].mxu0 %v145
  %v470 = vpop.f32.mrb[0].mxu0
  %v471 = vadd.f32 %v422, %v470
  %v472 = vpop.f32.mrb[0].mxu0
  %v473 = vpop.f32.mrb[0].mxu0
  %v474 = vadd.f32 %v425, %v473
  %v475 = vpop.f32.mrb[0].mxu0
  %476 = vdwg.mxu0
  %477 = vmatprep.subr.bf16.mxu0 0
  %478 = vmatpush1.bf16.msra.mxu0 %v332
  %479 = vmatprep.subr.bf16.mxu0 0
  %480 = vmatpush1.bf16.msra.mxu0 %v333
  %481 = vmatprep.subr.bf16.mxu0 0
  %482 = vmatpush1.bf16.msra.mxu0 %v334
  %483 = vmatprep.subr.bf16.mxu0 0
  %484 = vmatpush1.bf16.msra.mxu0 %v335
  %485 = vmatprep.subr.bf16.mxu0 0
  %486 = vmatpush1.bf16.msra.mxu0 0
  %487 = vmatprep.subr.bf16.mxu0 0
  %488 = vmatpush1.bf16.msra.mxu0 0
  %489 = vmatprep.subr.bf16.mxu0 0
  %490 = vmatpush1.bf16.msra.mxu0 0
  %491 = vmatprep.subr.bf16.mxu0 0
  %492 = vmatpush1.bf16.msra.mxu0 0
  %493 = vmatprep.subr.bf16.mxu0 0
  %494 = vmatpush1.bf16.msra.mxu0 0
  %495 = vmatprep.subr.bf16.mxu0 0
  %496 = vmatpush1.bf16.msra.mxu0 0
  %497 = vmatprep.subr.bf16.mxu0 0
  %498 = vmatpush1.bf16.msra.mxu0 0
  %499 = vmatprep.subr.bf16.mxu0 0
  %500 = vmatpush1.bf16.msra.mxu0 0
  %501 = vmatprep.subr.bf16.mxu0 0
  %502 = vmatpush1.bf16.msra.mxu0 0
  %503 = vmatprep.subr.bf16.mxu0 0
  %504 = vmatpush1.bf16.msra.mxu0 0
  %505 = vmatprep.subr.bf16.mxu0 0
  %506 = vmatpush1.bf16.msra.mxu0 0
  %507 = vmatprep.subr.bf16.mxu0 0
  %508 = vmatpush1.bf16.msra.mxu0 0
  %509 = vmatprep.mubr.bf16.mxu0 0
  %510 = vmatmul.mubr.bf16.gmra.mrb[0].mxu0 %v374
  %v511 = vpop.f32.mrb[0].mxu0
  %v512 = vadd.f32 %v463, %v511
  %v513 = vpop.f32.mrb[0].mxu0
  %v514 = vpop.f32.mrb[0].mxu0
  %v515 = vadd.f32 %v466, %v514
  %v516 = vpop.f32.mrb[0].mxu0
  %517 = vmatprep.mubr.bf16.mxu0 0
  %518 = vmatmul.mubr.bf16.gmra.mrb[0].mxu0 %v377
  %v519 = vpop.f32.mrb[0].mxu0
  %v520 = vadd.f32 %v471, %v519
  %v521 = vpop.f32.mrb[0].mxu0
  %v522 = vpop.f32.mrb[0].mxu0
  %v523 = vadd.f32 %v474, %v522
  %v524 = vpop.f32.mrb[0].mxu0
  %525 = vdwg.mxu0
  %v526 = vmax.f32 %v512, 0.0
  %v527 = vmax.f32 %v515, 0.0
  %v528 = vmax.f32 %v520, 0.0
  %v529 = vmax.f32 %v523, 0.0
  %v530 = vpack.c.bf16 %v527, %v526
  %v531 = vpack.c.bf16 %v529, %v528
  %v534 = vunpack.c.l.b16 %v530
  %v535 = vunpack.c.h.b16 %v530
  %v536 = vunpack.c.l.b16 %v531
  %v537 = vunpack.c.h.b16 %v531
  %v538 = vpack.c.b16 %v534, %v534
  %v539 = vpack.c.b16 %v535, %v535
  %v540 = vpack.c.b16 %v536, %v536
  %v541 = vpack.c.b16 %v537, %v537
  %vm546 = vcmask 519168
  %547 = vst.msk [vmem:[%s3] sm:$0xf] %vm546, %v538
  %548 = vst.msk [vmem:[%s3 + $0x4] sm:$0xf] %vm546, %v539
  %549 = vst.msk [vmem:[%s3 + $0x8] sm:$0xf] %vm546, %v540
  %550 = vst.msk [vmem:[%s3 + $0xc] sm:$0xf] %vm546, %v541
  // Predicated region
  $region14: #{policy_forward.6} parent=0 // pred_check
    _
  $region15: #{policy_forward.6} parent=0 // pred_check_branch
    %552 = sbr.rel (0) target = $region17
  $region16: #{policy_forward.6} parent=0 // pred_region
    _
  $region17: #{policy_forward.6} parent=0 // pred_fallthru
    _
  // Predicated region
  $region18: #{policy_forward.6} parent=0 // pred_check
    _
  $region19: #{policy_forward.6} parent=0 // pred_check_branch
    %554 = sbr.rel (0) target = $region21
  $region20: #{policy_forward.6} parent=0 // pred_region
    _
  $region21: #{policy_forward.6} parent=0 // pred_fallthru
    _

// kernel: policy_forward.7
$region0: #{policy_forward.7}
  #allocation0 [shape = 'u32[]', space=smem, size = 0x4, offset = 0x4, fixed_abs, tag = 'smem constant byte address 0x4 - core index']
  #allocation1 [shape = 'u32[144,128]{1,0:T(1,128)}', space=vmem, size = 0x12000, scoped, tag = 'internal scratch']
  %s0 = inlined_call_operand.vmem [shape: bf16[8,1024], index: 0, kind: input, shape index: {}]
  %s1 = inlined_call_operand.vmem [shape: bf16[1024,512], index: 1, kind: input, shape index: {}]
  %s2 = inlined_call_operand.vmem [shape: f32[1,512], index: 2, kind: input, shape index: {}]
  %s3 = inlined_call_operand.vmem [shape: bf16[512,128], index: 3, kind: input, shape index: {}]
  %s4 = inlined_call_operand.vmem [shape: f32[1,128], index: 4, kind: input, shape index: {}]
  %s5 = inlined_call_operand.vmem [shape: f32[8,128], index: 5, kind: output, shape index: {}]
  %s6 = sld [smem:[#allocation0]]
  $region30: #{policy_forward.7} parent=0
    _
  %s8 = ssub.s32 1, %s6
  %s9 = scalar_select 0, %s8, %s6
  // Predicated region
  $region2: #{policy_forward.7} parent=0 // pred_check
    _
  $region3: #{policy_forward.7} parent=0 // pred_check_branch
    %11 = sbr.rel (0) target = $region5
  $region4: #{policy_forward.7} parent=0 // pred_region
    _
  $region5: #{policy_forward.7} parent=0 // pred_fallthru
    _
  // Predicated region
  $region6: #{policy_forward.7} parent=0 // pred_check
    _
  $region7: #{policy_forward.7} parent=0 // pred_check_branch
    %13 = sbr.rel (0) target = $region9
  $region8: #{policy_forward.7} parent=0 // pred_region
    _
  $region9: #{policy_forward.7} parent=0 // pred_fallthru
    _
  // Predicated region
  $region10: #{policy_forward.7} parent=0 // pred_check
    _
  $region11: #{policy_forward.7} parent=0 // pred_check_branch
    %15 = sbr.rel (0) target = $region13
  $region12: #{policy_forward.7} parent=0 // pred_region
    _
  $region13: #{policy_forward.7} parent=0 // pred_fallthru
    _
  // Predicated region
  $region14: #{policy_forward.7} parent=0 // pred_check
    _
  $region15: #{policy_forward.7} parent=0 // pred_check_branch
    %17 = sbr.rel (0) target = $region17
  $region16: #{policy_forward.7} parent=0 // pred_region
    _
  $region17: #{policy_forward.7} parent=0 // pred_fallthru
    _
  // Predicated region
  $region18: #{policy_forward.7} parent=0 // pred_check
    _
  $region19: #{policy_forward.7} parent=0 // pred_check_branch
    %19 = sbr.rel (0) target = $region21
  $region20: #{policy_forward.7} parent=0 // pred_region
    _
  $region21: #{policy_forward.7} parent=0 // pred_fallthru
    _
  %v21 = vld [vmem:[%s0] sm:$0xff]
  %v22 = vld [vmem:[%s0 + $0x8] sm:$0xff]
  %v23 = vld [vmem:[%s0 + $0x10] sm:$0xff]
  %v24 = vld [vmem:[%s0 + $0x18] sm:$0xff]
  %v25 = vld [vmem:[%s1] sm:$0xff]
  %v26 = vld [vmem:[%s1 + $0x8] sm:$0xff]
  %v27 = vld [vmem:[%s1 + $0x10] sm:$0xff]
  %v28 = vld [vmem:[%s1 + $0x18] sm:$0xff]
  %v29 = vld [vmem:[%s1 + $0x20] sm:$0xff]
  %v30 = vld [vmem:[%s1 + $0x28] sm:$0xff]
  %v31 = vld [vmem:[%s1 + $0x30] sm:$0xff]
  %v32 = vld [vmem:[%s1 + $0x38] sm:$0xff]
  %v33 = vld [vmem:[%s1 + $0x40] sm:$0xff]
  %v34 = vld [vmem:[%s1 + $0x48] sm:$0xff]
  %v35 = vld [vmem:[%s1 + $0x50] sm:$0xff]
  %v36 = vld [vmem:[%s1 + $0x58] sm:$0xff]
  %v37 = vld [vmem:[%s1 + $0x60] sm:$0xff]
  %v38 = vld [vmem:[%s1 + $0x68] sm:$0xff]
  %v39 = vld [vmem:[%s1 + $0x70] sm:$0xff]
  %v40 = vld [vmem:[%s1 + $0x78] sm:$0xff]
  %v41 = vld [vmem:[%s1 + $0x80] sm:$0xff]
  %v42 = vld [vmem:[%s1 + $0x88] sm:$0xff]
  %v43 = vld [vmem:[%s1 + $0x90] sm:$0xff]
  %v44 = vld [vmem:[%s1 + $0x98] sm:$0xff]
  %v45 = vld [vmem:[%s1 + $0xa0] sm:$0xff]
  %v46 = vld [vmem:[%s1 + $0xa8] sm:$0xff]
  %v47 = vld [vmem:[%s1 + $0xb0] sm:$0xff]
  %v48 = vld [vmem:[%s1 + $0xb8] sm:$0xff]
  %v49 = vld [vmem:[%s1 + $0xc0] sm:$0xff]
  %v50 = vld [vmem:[%s1 + $0xc8] sm:$0xff]
  %v51 = vld [vmem:[%s1 + $0xd0] sm:$0xff]
  %v52 = vld [vmem:[%s1 + $0xd8] sm:$0xff]
  %v53 = vld [vmem:[%s1 + $0xe0] sm:$0xff]
  %v54 = vld [vmem:[%s1 + $0xe8] sm:$0xff]
  %v55 = vld [vmem:[%s1 + $0xf0] sm:$0xff]
  %v56 = vld [vmem:[%s1 + $0xf8] sm:$0xff]
  %v57 = vld [vmem:[%s1 + $0x100] sm:$0xff]
  %v58 = vld [vmem:[%s1 + $0x108] sm:$0xff]
  %v59 = vld [vmem:[%s1 + $0x110] sm:$0xff]
  %v60 = vld [vmem:[%s1 + $0x118] sm:$0xff]
  %v61 = vld [vmem:[%s1 + $0x120] sm:$0xff]
  %v62 = vld [vmem:[%s1 + $0x128] sm:$0xff]
  %v63 = vld [vmem:[%s1 + $0x130] sm:$0xff]
  %v64 = vld [vmem:[%s1 + $0x138] sm:$0xff]
  %v65 = vld [vmem:[%s1 + $0x140] sm:$0xff]
  %v66 = vld [vmem:[%s1 + $0x148] sm:$0xff]
  %v67 = vld [vmem:[%s1 + $0x150] sm:$0xff]
  %v68 = vld [vmem:[%s1 + $0x158] sm:$0xff]
  %v69 = vld [vmem:[%s1 + $0x160] sm:$0xff]
  %v70 = vld [vmem:[%s1 + $0x168] sm:$0xff]
  %v71 = vld [vmem:[%s1 + $0x170] sm:$0xff]
  %v72 = vld [vmem:[%s1 + $0x178] sm:$0xff]
  %v73 = vld [vmem:[%s1 + $0x180] sm:$0xff]
  %v74 = vld [vmem:[%s1 + $0x188] sm:$0xff]
  %v75 = vld [vmem:[%s1 + $0x190] sm:$0xff]
  %v76 = vld [vmem:[%s1 + $0x198] sm:$0xff]
  %v77 = vld [vmem:[%s1 + $0x1a0] sm:$0xff]
  %v78 = vld [vmem:[%s1 + $0x1a8] sm:$0xff]
  %v79 = vld [vmem:[%s1 + $0x1b0] sm:$0xff]
  %v80 = vld [vmem:[%s1 + $0x1b8] sm:$0xff]
  %v81 = vld [vmem:[%s1 + $0x1c0] sm:$0xff]
  %v82 = vld [vmem:[%s1 + $0x1c8] sm:$0xff]
  %v83 = vld [vmem:[%s1 + $0x1d0] sm:$0xff]
  %v84 = vld [vmem:[%s1 + $0x1d8] sm:$0xff]
  %v85 = vld [vmem:[%s1 + $0x1e0] sm:$0xff]
  %v86 = vld [vmem:[%s1 + $0x1e8] sm:$0xff]
  %v87 = vld [vmem:[%s1 + $0x1f0] sm:$0xff]
  %v88 = vld [vmem:[%s1 + $0x1f8] sm:$0xff]
  %v89 = vld [vmem:[%s1 + $0x200] sm:$0xff]
  %v90 = vld [vmem:[%s1 + $0x208] sm:$0xff]
  %v91 = vld [vmem:[%s1 + $0x210] sm:$0xff]
  %v92 = vld [vmem:[%s1 + $0x218] sm:$0xff]
  %v93 = vld [vmem:[%s1 + $0x220] sm:$0xff]
  %v94 = vld [vmem:[%s1 + $0x228] sm:$0xff]
  %v95 = vld [vmem:[%s1 + $0x230] sm:$0xff]
  %v96 = vld [vmem:[%s1 + $0x238] sm:$0xff]
  %v97 = vld [vmem:[%s1 + $0x240] sm:$0xff]
  %v98 = vld [vmem:[%s1 + $0x248] sm:$0xff]
  %v99 = vld [vmem:[%s1 + $0x250] sm:$0xff]
  %v100 = vld [vmem:[%s1 + $0x258] sm:$0xff]
  %v101 = vld [vmem:[%s1 + $0x260] sm:$0xff]
  %v102 = vld [vmem:[%s1 + $0x268] sm:$0xff]
  %v103 = vld [vmem:[%s1 + $0x270] sm:$0xff]
  %v104 = vld [vmem:[%s1 + $0x278] sm:$0xff]
  %v105 = vld [vmem:[%s1 + $0x280] sm:$0xff]
  %v106 = vld [vmem:[%s1 + $0x288] sm:$0xff]
  %v107 = vld [vmem:[%s1 + $0x290] sm:$0xff]
  %v108 = vld [vmem:[%s1 + $0x298] sm:$0xff]
  %v109 = vld [vmem:[%s1 + $0x2a0] sm:$0xff]
  %v110 = vld [vmem:[%s1 + $0x2a8] sm:$0xff]
  %v111 = vld [vmem:[%s1 + $0x2b0] sm:$0xff]
  %v112 = vld [vmem:[%s1 + $0x2b8] sm:$0xff]
  %v113 = vld [vmem:[%s1 + $0x2c0] sm:$0xff]
  %v114 = vld [vmem:[%s1 + $0x2c8] sm:$0xff]
  %v115 = vld [vmem:[%s1 + $0x2d0] sm:$0xff]
  %v116 = vld [vmem:[%s1 + $0x2d8] sm:$0xff]
  %v117 = vld [vmem:[%s1 + $0x2e0] sm:$0xff]
  %v118 = vld [vmem:[%s1 + $0x2e8] sm:$0xff]
  %v119 = vld [vmem:[%s1 + $0x2f0] sm:$0xff]
  %v120 = vld [vmem:[%s1 + $0x2f8] sm:$0xff]
  %v121 = vld [vmem:[%s1 + $0x300] sm:$0xff]
  %v122 = vld [vmem:[%s1 + $0x308] sm:$0xff]
  %v123 = vld [vmem:[%s1 + $0x310] sm:$0xff]
  %v124 = vld [vmem:[%s1 + $0x318] sm:$0xff]
  %v125 = vld [vmem:[%s1 + $0x320] sm:$0xff]
  %v126 = vld [vmem:[%s1 + $0x328] sm:$0xff]
  %v127 = vld [vmem:[%s1 + $0x330] sm:$0xff]
  %v128 = vld [vmem:[%s1 + $0x338] sm:$0xff]
  %v129 = vld [vmem:[%s1 + $0x340] sm:$0xff]
  %v130 = vld [vmem:[%s1 + $0x348] sm:$0xff]
  %v131 = vld [vmem:[%s1 + $0x350] sm:$0xff]
  %v132 = vld [vmem:[%s1 + $0x358] sm:$0xff]
  %v133 = vld [vmem:[%s1 + $0x360] sm:$0xff]
  %v134 = vld [vmem:[%s1 + $0x368] sm:$0xff]
  %v135 = vld [vmem:[%s1 + $0x370] sm:$0xff]
  %v136 = vld [vmem:[%s1 + $0x378] sm:$0xff]
  %v137 = vld [vmem:[%s1 + $0x380] sm:$0xff]
  %v138 = vld [vmem:[%s1 + $0x388] sm:$0xff]
  %v139 = vld [vmem:[%s1 + $0x390] sm:$0xff]
  %v140 = vld [vmem:[%s1 + $0x398] sm:$0xff]
  %v141 = vld [vmem:[%s1 + $0x3a0] sm:$0xff]
  %v142 = vld [vmem:[%s1 + $0x3a8] sm:$0xff]
  %v143 = vld [vmem:[%s1 + $0x3b0] sm:$0xff]
  %v144 = vld [vmem:[%s1 + $0x3b8] sm:$0xff]
  %v145 = vld [vmem:[%s1 + $0x3c0] sm:$0xff]
  %v146 = vld [vmem:[%s1 + $0x3c8] sm:$0xff]
  %v147 = vld [vmem:[%s1 + $0x3d0] sm:$0xff]
  %v148 = vld [vmem:[%s1 + $0x3d8] sm:$0xff]
  %v149 = vld [vmem:[%s1 + $0x3e0] sm:$0xff]
  %v150 = vld [vmem:[%s1 + $0x3e8] sm:$0xff]
  %v151 = vld [vmem:[%s1 + $0x3f0] sm:$0xff]
  %v152 = vld [vmem:[%s1 + $0x3f8] sm:$0xff]
  %v153 = vld [vmem:[%s1 + $0x400] sm:$0xff]
  %v154 = vld [vmem:[%s1 + $0x408] sm:$0xff]
  %v155 = vld [vmem:[%s1 + $0x410] sm:$0xff]
  %v156 = vld [vmem:[%s1 + $0x418] sm:$0xff]
  %v157 = vld [vmem:[%s1 + $0x420] sm:$0xff]
  %v158 = vld [vmem:[%s1 + $0x428] sm:$0xff]
  %v159 = vld [vmem:[%s1 + $0x430] sm:$0xff]
  %v160 = vld [vmem:[%s1 + $0x438] sm:$0xff]
  %v161 = vld [vmem:[%s1 + $0x440] sm:$0xff]
  %v162 = vld [vmem:[%s1 + $0x448] sm:$0xff]
  %v163 = vld [vmem:[%s1 + $0x450] sm:$0xff]
  %v164 = vld [vmem:[%s1 + $0x458] sm:$0xff]
  %v165 = vld [vmem:[%s1 + $0x460] sm:$0xff]
  %v166 = vld [vmem:[%s1 + $0x468] sm:$0xff]
  %v167 = vld [vmem:[%s1 + $0x470] sm:$0xff]
  %v168 = vld [vmem:[%s1 + $0x478] sm:$0xff]
  %v169 = vld [vmem:[%s1 + $0x480] sm:$0xff]
  %v170 = vld [vmem:[%s1 + $0x488] sm:$0xff]
  %v171 = vld [vmem:[%s1 + $0x490] sm:$0xff]
  %v172 = vld [vmem:[%s1 + $0x498] sm:$0xff]
  %v173 = vld [vmem:[%s1 + $0x4a0] sm:$0xff]
  %v174 = vld [vmem:[%s1 + $0x4a8] sm:$0xff]
  %v175 = vld [vmem:[%s1 + $0x4b0] sm:$0xff]
  %v176 = vld [vmem:[%s1 + $0x4b8] sm:$0xff]
  %v177 = vld [vmem:[%s1 + $0x4c0] sm:$0xff]
  %v178 = vld [vmem:[%s1 + $0x4c8] sm:$0xff]
  %v179 = vld [vmem:[%s1 + $0x4d0] sm:$0xff]
  %v180 = vld [vmem:[%s1 + $0x4d8] sm:$0xff]
  %v181 = vld [vmem:[%s1 + $0x4e0] sm:$0xff]
  %v182 = vld [vmem:[%s1 + $0x4e8] sm:$0xff]
  %v183 = vld [vmem:[%s1 + $0x4f0] sm:$0xff]
  %v184 = vld [vmem:[%s1 + $0x4f8] sm:$0xff]
  %v185 = vld [vmem:[%s1 + $0x500] sm:$0xff]
  %v186 = vld [vmem:[%s1 + $0x508] sm:$0xff]
  %v187 = vld [vmem:[%s1 + $0x510] sm:$0xff]
  %v188 = vld [vmem:[%s1 + $0x518] sm:$0xff]
  %v189 = vld [vmem:[%s1 + $0x520] sm:$0xff]
  %v190 = vld [vmem:[%s1 + $0x528] sm:$0xff]
  %v191 = vld [vmem:[%s1 + $0x530] sm:$0xff]
  %v192 = vld [vmem:[%s1 + $0x538] sm:$0xff]
  %v193 = vld [vmem:[%s1 + $0x540] sm:$0xff]
  %v194 = vld [vmem:[%s1 + $0x548] sm:$0xff]
  %v195 = vld [vmem:[%s1 + $0x550] sm:$0xff]
  %v196 = vld [vmem:[%s1 + $0x558] sm:$0xff]
  %v197 = vld [vmem:[%s1 + $0x560] sm:$0xff]
  %v198 = vld [vmem:[%s1 + $0x568] sm:$0xff]
  %v199 = vld [vmem:[%s1 + $0x570] sm:$0xff]
  %v200 = vld [vmem:[%s1 + $0x578] sm:$0xff]
  %v201 = vld [vmem:[%s1 + $0x580] sm:$0xff]
  %v202 = vld [vmem:[%s1 + $0x588] sm:$0xff]
  %v203 = vld [vmem:[%s1 + $0x590] sm:$0xff]
  %v204 = vld [vmem:[%s1 + $0x598] sm:$0xff]
  %v205 = vld [vmem:[%s1 + $0x5a0] sm:$0xff]
  %v206 = vld [vmem:[%s1 + $0x5a8] sm:$0xff]
  %v207 = vld [vmem:[%s1 + $0x5b0] sm:$0xff]
  %v208 = vld [vmem:[%s1 + $0x5b8] sm:$0xff]
  %v209 = vld [vmem:[%s1 + $0x5c0] sm:$0xff]
  %v210 = vld [vmem:[%s1 + $0x5c8] sm:$0xff]
  %v211 = vld [vmem:[%s1 + $0x5d0] sm:$0xff]
  %v212 = vld [vmem:[%s1 + $0x5d8] sm:$0xff]
  %v213 = vld [vmem:[%s1 + $0x5e0] sm:$0xff]
  %v214 = vld [vmem:[%s1 + $0x5e8] sm:$0xff]
  %v215 = vld [vmem:[%s1 + $0x5f0] sm:$0xff]
  %v216 = vld [vmem:[%s1 + $0x5f8] sm:$0xff]
  %v217 = vld [vmem:[%s1 + $0x600] sm:$0xff]
  %v218 = vld [vmem:[%s1 + $0x608] sm:$0xff]
  %v219 = vld [vmem:[%s1 + $0x610] sm:$0xff]
  %v220 = vld [vmem:[%s1 + $0x618] sm:$0xff]
  %v221 = vld [vmem:[%s1 + $0x620] sm:$0xff]
  %v222 = vld [vmem:[%s1 + $0x628] sm:$0xff]
  %v223 = vld [vmem:[%s1 + $0x630] sm:$0xff]
  %v224 = vld [vmem:[%s1 + $0x638] sm:$0xff]
  %v225 = vld [vmem:[%s1 + $0x640] sm:$0xff]
  %v226 = vld [vmem:[%s1 + $0x648] sm:$0xff]
  %v227 = vld [vmem:[%s1 + $0x650] sm:$0xff]
  %v228 = vld [vmem:[%s1 + $0x658] sm:$0xff]
  %v229 = vld [vmem:[%s1 + $0x660] sm:$0xff]
  %v230 = vld [vmem:[%s1 + $0x668] sm:$0xff]
  %v231 = vld [vmem:[%s1 + $0x670] sm:$0xff]
  %v232 = vld [vmem:[%s1 + $0x678] sm:$0xff]
  %v233 = vld [vmem:[%s1 + $0x680] sm:$0xff]
  %v234 = vld [vmem:[%s1 + $0x688] sm:$0xff]
  %v235 = vld [vmem:[%s1 + $0x690] sm:$0xff]
  %v236 = vld [vmem:[%s1 + $0x698] sm:$0xff]
  %v237 = vld [vmem:[%s1 + $0x6a0] sm:$0xff]
  %v238 = vld [vmem:[%s1 + $0x6a8] sm:$0xff]
  %v239 = vld [vmem:[%s1 + $0x6b0] sm:$0xff]
  %v240 = vld [vmem:[%s1 + $0x6b8] sm:$0xff]
  %v241 = vld [vmem:[%s1 + $0x6c0] sm:$0xff]
  %v242 = vld [vmem:[%s1 + $0x6c8] sm:$0xff]
  %v243 = vld [vmem:[%s1 + $0x6d0] sm:$0xff]
  %v244 = vld [vmem:[%s1 + $0x6d8] sm:$0xff]
  %v245 = vld [vmem:[%s1 + $0x6e0] sm:$0xff]
  %v246 = vld [vmem:[%s1 + $0x6e8] sm:$0xff]
  %v247 = vld [vmem:[%s1 + $0x6f0] sm:$0xff]
  %v248 = vld [vmem:[%s1 + $0x6f8] sm:$0xff]
  %v249 = vld [vmem:[%s1 + $0x700] sm:$0xff]
  %v250 = vld [vmem:[%s1 + $0x708] sm:$0xff]
  %v251 = vld [vmem:[%s1 + $0x710] sm:$0xff]
  %v252 = vld [vmem:[%s1 + $0x718] sm:$0xff]
  %v253 = vld [vmem:[%s1 + $0x720] sm:$0xff]
  %v254 = vld [vmem:[%s1 + $0x728] sm:$0xff]
  %v255 = vld [vmem:[%s1 + $0x730] sm:$0xff]
  %v256 = vld [vmem:[%s1 + $0x738] sm:$0xff]
  %v257 = vld [vmem:[%s1 + $0x740] sm:$0xff]
  %v258 = vld [vmem:[%s1 + $0x748] sm:$0xff]
  %v259 = vld [vmem:[%s1 + $0x750] sm:$0xff]
  %v260 = vld [vmem:[%s1 + $0x758] sm:$0xff]
  %v261 = vld [vmem:[%s1 + $0x760] sm:$0xff]
  %v262 = vld [vmem:[%s1 + $0x768] sm:$0xff]
  %v263 = vld [vmem:[%s1 + $0x770] sm:$0xff]
  %v264 = vld [vmem:[%s1 + $0x778] sm:$0xff]
  %v265 = vld [vmem:[%s1 + $0x780] sm:$0xff]
  %v266 = vld [vmem:[%s1 + $0x788] sm:$0xff]
  %v267 = vld [vmem:[%s1 + $0x790] sm:$0xff]
  %v268 = vld [vmem:[%s1 + $0x798] sm:$0xff]
  %v269 = vld [vmem:[%s1 + $0x7a0] sm:$0xff]
  %v270 = vld [vmem:[%s1 + $0x7a8] sm:$0xff]
  %v271 = vld [vmem:[%s1 + $0x7b0] sm:$0xff]
  %v272 = vld [vmem:[%s1 + $0x7b8] sm:$0xff]
  %v273 = vld [vmem:[%s1 + $0x7c0] sm:$0xff]
  %v274 = vld [vmem:[%s1 + $0x7c8] sm:$0xff]
  %v275 = vld [vmem:[%s1 + $0x7d0] sm:$0xff]
  %v276 = vld [vmem:[%s1 + $0x7d8] sm:$0xff]
  %v277 = vld [vmem:[%s1 + $0x7e0] sm:$0xff]
  %v278 = vld [vmem:[%s1 + $0x7e8] sm:$0xff]
  %v279 = vld [vmem:[%s1 + $0x7f0] sm:$0xff]
  %v280 = vld [vmem:[%s1 + $0x7f8] sm:$0xff]
  %v281 = vld [vmem:[%s2] sm:$0xf]
  %v283 = vlaneseq
  %v284 = vshrl.u32 %v283, 7
  %v285 = vsub.s32 0, %v284
  %v286 = vrot.slane %v281, %v285
  %v287 = vlaneseq
  %v288 = vshrl.u32 %v287, 7
  %v289 = vsub.s32 1, %v288
  %v290 = vrot.slane %v281, %v289
  %v291 = vlaneseq
  %v292 = vshrl.u32 %v291, 7
  %v293 = vsub.s32 2, %v292
  %v294 = vrot.slane %v281, %v293
  %v295 = vlaneseq
  %v296 = vshrl.u32 %v295, 7
  %v297 = vsub.s32 3, %v296
  %v298 = vrot.slane %v281, %v297
  %v307 = vunpack.c.l.b16 %v21
  %v308 = vunpack.c.h.b16 %v21
  %v309 = vunpack.c.l.b16 %v22
  %v310 = vunpack.c.h.b16 %v22
  %v311 = vunpack.c.l.b16 %v23
  %v312 = vunpack.c.h.b16 %v23
  %v313 = vunpack.c.l.b16 %v24
  %v314 = vunpack.c.h.b16 %v24
  %v315 = vpack.c.b16 %v307, %v307
  %v316 = vpack.c.b16 %v308, %v308
  %v317 = vpack.c.b16 %v309, %v309
  %v318 = vpack.c.b16 %v310, %v310
  %v319 = vpack.c.b16 %v311, %v311
  %v320 = vpack.c.b16 %v312, %v312
  %v321 = vpack.c.b16 %v313, %v313
  %v322 = vpack.c.b16 %v314, %v314
  %v587 = vunpack.c.l.b16 %v25
  %v588 = vunpack.c.h.b16 %v25
  %v589 = vunpack.c.l.b16 %v26
  %v590 = vunpack.c.h.b16 %v26
  %v591 = vunpack.c.l.b16 %v27
  %v592 = vunpack.c.h.b16 %v27
  %v593 = vunpack.c.l.b16 %v28
  %v594 = vunpack.c.h.b16 %v28
  %v595 = vunpack.c.l.b16 %v29
  %v596 = vunpack.c.h.b16 %v29
  %v597 = vunpack.c.l.b16 %v30
  %v598 = vunpack.c.h.b16 %v30
  %v599 = vunpack.c.l.b16 %v31
  %v600 = vunpack.c.h.b16 %v31
  %v601 = vunpack.c.l.b16 %v32
  %v602 = vunpack.c.h.b16 %v32
  %v603 = vunpack.c.l.b16 %v33
  %v604 = vunpack.c.h.b16 %v33
  %v605 = vunpack.c.l.b16 %v34
  %v606 = vunpack.c.h.b16 %v34
  %v607 = vunpack.c.l.b16 %v35
  %v608 = vunpack.c.h.b16 %v35
  %v609 = vunpack.c.l.b16 %v36
  %v610 = vunpack.c.h.b16 %v36
  %v611 = vunpack.c.l.b16 %v37
  %v612 = vunpack.c.h.b16 %v37
  %v613 = vunpack.c.l.b16 %v38
  %v614 = vunpack.c.h.b16 %v38
  %v615 = vunpack.c.l.b16 %v39
  %v616 = vunpack.c.h.b16 %v39
  %v617 = vunpack.c.l.b16 %v40
  %v618 = vunpack.c.h.b16 %v40
  %v619 = vunpack.c.l.b16 %v41
  %v620 = vunpack.c.h.b16 %v41
  %v621 = vunpack.c.l.b16 %v42
  %v622 = vunpack.c.h.b16 %v42
  %v623 = vunpack.c.l.b16 %v43
  %v624 = vunpack.c.h.b16 %v43
  %v625 = vunpack.c.l.b16 %v44
  %v626 = vunpack.c.h.b16 %v44
  %v627 = vunpack.c.l.b16 %v45
  %v628 = vunpack.c.h.b16 %v45
  %v629 = vunpack.c.l.b16 %v46
  %v630 = vunpack.c.h.b16 %v46
  %v631 = vunpack.c.l.b16 %v47
  %v632 = vunpack.c.h.b16 %v47
  %v633 = vunpack.c.l.b16 %v48
  %v634 = vunpack.c.h.b16 %v48
  %v635 = vunpack.c.l.b16 %v49
  %v636 = vunpack.c.h.b16 %v49
  %v637 = vunpack.c.l.b16 %v50
  %v638 = vunpack.c.h.b16 %v50
  %v639 = vunpack.c.l.b16 %v51
  %v640 = vunpack.c.h.b16 %v51
  %v641 = vunpack.c.l.b16 %v52
  %v642 = vunpack.c.h.b16 %v52
  %v643 = vunpack.c.l.b16 %v53
  %v644 = vunpack.c.h.b16 %v53
  %v645 = vunpack.c.l.b16 %v54
  %v646 = vunpack.c.h.b16 %v54
  %v647 = vunpack.c.l.b16 %v55
  %v648 = vunpack.c.h.b16 %v55
  %v649 = vunpack.c.l.b16 %v56
  %v650 = vunpack.c.h.b16 %v56
  %v651 = vunpack.c.l.b16 %v57
  %v652 = vunpack.c.h.b16 %v57
  %v653 = vunpack.c.l.b16 %v58
  %v654 = vunpack.c.h.b16 %v58
  %v655 = vunpack.c.l.b16 %v59
  %v656 = vunpack.c.h.b16 %v59
  %v657 = vunpack.c.l.b16 %v60
  %v658 = vunpack.c.h.b16 %v60
  %v659 = vunpack.c.l.b16 %v61
  %v660 = vunpack.c.h.b16 %v61
  %v661 = vunpack.c.l.b16 %v62
  %v662 = vunpack.c.h.b16 %v62
  %v663 = vunpack.c.l.b16 %v63
  %v664 = vunpack.c.h.b16 %v63
  %v665 = vunpack.c.l.b16 %v64
  %v666 = vunpack.c.h.b16 %v64
  %v667 = vunpack.c.l.b16 %v65
  %v668 = vunpack.c.h.b16 %v65
  %v669 = vunpack.c.l.b16 %v66
  %v670 = vunpack.c.h.b16 %v66
  %v671 = vunpack.c.l.b16 %v67
  %v672 = vunpack.c.h.b16 %v67
  %v673 = vunpack.c.l.b16 %v68
  %v674 = vunpack.c.h.b16 %v68
  %v675 = vunpack.c.l.b16 %v69
  %v676 = vunpack.c.h.b16 %v69
  %v677 = vunpack.c.l.b16 %v70
  %v678 = vunpack.c.h.b16 %v70
  %v679 = vunpack.c.l.b16 %v71
  %v680 = vunpack.c.h.b16 %v71
  %v681 = vunpack.c.l.b16 %v72
  %v682 = vunpack.c.h.b16 %v72
  %v683 = vunpack.c.l.b16 %v73
  %v684 = vunpack.c.h.b16 %v73
  %v685 = vunpack.c.l.b16 %v74
  %v686 = vunpack.c.h.b16 %v74
  %v687 = vunpack.c.l.b16 %v75
  %v688 = vunpack.c.h.b16 %v75
  %v689 = vunpack.c.l.b16 %v76
  %v690 = vunpack.c.h.b16 %v76
  %v691 = vunpack.c.l.b16 %v77
  %v692 = vunpack.c.h.b16 %v77
  %v693 = vunpack.c.l.b16 %v78
  %v694 = vunpack.c.h.b16 %v78
  %v695 = vunpack.c.l.b16 %v79
  %v696 = vunpack.c.h.b16 %v79
  %v697 = vunpack.c.l.b16 %v80
  %v698 = vunpack.c.h.b16 %v80
  %v699 = vunpack.c.l.b16 %v81
  %v700 = vunpack.c.h.b16 %v81
  %v701 = vunpack.c.l.b16 %v82
  %v702 = vunpack.c.h.b16 %v82
  %v703 = vunpack.c.l.b16 %v83
  %v704 = vunpack.c.h.b16 %v83
  %v705 = vunpack.c.l.b16 %v84
  %v706 = vunpack.c.h.b16 %v84
  %v707 = vunpack.c.l.b16 %v85
  %v708 = vunpack.c.h.b16 %v85
  %v709 = vunpack.c.l.b16 %v86
  %v710 = vunpack.c.h.b16 %v86
  %v711 = vunpack.c.l.b16 %v87
  %v712 = vunpack.c.h.b16 %v87
  %v713 = vunpack.c.l.b16 %v88
  %v714 = vunpack.c.h.b16 %v88
  %v715 = vunpack.c.l.b16 %v89
  %v716 = vunpack.c.h.b16 %v89
  %v717 = vunpack.c.l.b16 %v90
  %v718 = vunpack.c.h.b16 %v90
  %v719 = vunpack.c.l.b16 %v91
  %v720 = vunpack.c.h.b16 %v91
  %v721 = vunpack.c.l.b16 %v92
  %v722 = vunpack.c.h.b16 %v92
  %v723 = vunpack.c.l.b16 %v93
  %v724 = vunpack.c.h.b16 %v93
  %v725 = vunpack.c.l.b16 %v94
  %v726 = vunpack.c.h.b16 %v94
  %v727 = vunpack.c.l.b16 %v95
  %v728 = vunpack.c.h.b16 %v95
  %v729 = vunpack.c.l.b16 %v96
  %v730 = vunpack.c.h.b16 %v96
  %v731 = vunpack.c.l.b16 %v97
  %v732 = vunpack.c.h.b16 %v97
  %v733 = vunpack.c.l.b16 %v98
  %v734 = vunpack.c.h.b16 %v98
  %v735 = vunpack.c.l.b16 %v99
  %v736 = vunpack.c.h.b16 %v99
  %v737 = vunpack.c.l.b16 %v100
  %v738 = vunpack.c.h.b16 %v100
  %v739 = vunpack.c.l.b16 %v101
  %v740 = vunpack.c.h.b16 %v101
  %v741 = vunpack.c.l.b16 %v102
  %v742 = vunpack.c.h.b16 %v102
  %v743 = vunpack.c.l.b16 %v103
  %v744 = vunpack.c.h.b16 %v103
  %v745 = vunpack.c.l.b16 %v104
  %v746 = vunpack.c.h.b16 %v104
  %v747 = vunpack.c.l.b16 %v105
  %v748 = vunpack.c.h.b16 %v105
  %v749 = vunpack.c.l.b16 %v106
  %v750 = vunpack.c.h.b16 %v106
  %v751 = vunpack.c.l.b16 %v107
  %v752 = vunpack.c.h.b16 %v107
  %v753 = vunpack.c.l.b16 %v108
  %v754 = vunpack.c.h.b16 %v108
  %v755 = vunpack.c.l.b16 %v109
  %v756 = vunpack.c.h.b16 %v109
  %v757 = vunpack.c.l.b16 %v110
  %v758 = vunpack.c.h.b16 %v110
  %v759 = vunpack.c.l.b16 %v111
  %v760 = vunpack.c.h.b16 %v111
  %v761 = vunpack.c.l.b16 %v112
  %v762 = vunpack.c.h.b16 %v112
  %v763 = vunpack.c.l.b16 %v113
  %v764 = vunpack.c.h.b16 %v113
  %v765 = vunpack.c.l.b16 %v114
  %v766 = vunpack.c.h.b16 %v114
  %v767 = vunpack.c.l.b16 %v115
  %v768 = vunpack.c.h.b16 %v115
  %v769 = vunpack.c.l.b16 %v116
  %v770 = vunpack.c.h.b16 %v116
  %v771 = vunpack.c.l.b16 %v117
  %v772 = vunpack.c.h.b16 %v117
  %v773 = vunpack.c.l.b16 %v118
  %v774 = vunpack.c.h.b16 %v118
  %v775 = vunpack.c.l.b16 %v119
  %v776 = vunpack.c.h.b16 %v119
  %v777 = vunpack.c.l.b16 %v120
  %v778 = vunpack.c.h.b16 %v120
  %v779 = vunpack.c.l.b16 %v121
  %v780 = vunpack.c.h.b16 %v121
  %v781 = vunpack.c.l.b16 %v122
  %v782 = vunpack.c.h.b16 %v122
  %v783 = vunpack.c.l.b16 %v123
  %v784 = vunpack.c.h.b16 %v123
  %v785 = vunpack.c.l.b16 %v124
  %v786 = vunpack.c.h.b16 %v124
  %v787 = vunpack.c.l.b16 %v125
  %v788 = vunpack.c.h.b16 %v125
  %v789 = vunpack.c.l.b16 %v126
  %v790 = vunpack.c.h.b16 %v126
  %v791 = vunpack.c.l.b16 %v127
  %v792 = vunpack.c.h.b16 %v127
  %v793 = vunpack.c.l.b16 %v128
  %v794 = vunpack.c.h.b16 %v128
  %v795 = vunpack.c.l.b16 %v129
  %v796 = vunpack.c.h.b16 %v129
  %v797 = vunpack.c.l.b16 %v130
  %v798 = vunpack.c.h.b16 %v130
  %v799 = vunpack.c.l.b16 %v131
  %v800 = vunpack.c.h.b16 %v131
  %v801 = vunpack.c.l.b16 %v132
  %v802 = vunpack.c.h.b16 %v132
  %v803 = vunpack.c.l.b16 %v133
  %v804 = vunpack.c.h.b16 %v133
  %v805 = vunpack.c.l.b16 %v134
  %v806 = vunpack.c.h.b16 %v134
  %v807 = vunpack.c.l.b16 %v135
  %v808 = vunpack.c.h.b16 %v135
  %v809 = vunpack.c.l.b16 %v136
  %v810 = vunpack.c.h.b16 %v136
  %v811 = vunpack.c.l.b16 %v137
  %v812 = vunpack.c.h.b16 %v137
  %v813 = vunpack.c.l.b16 %v138
  %v814 = vunpack.c.h.b16 %v138
  %v815 = vunpack.c.l.b16 %v139
  %v816 = vunpack.c.h.b16 %v139
  %v817 = vunpack.c.l.b16 %v140
  %v818 = vunpack.c.h.b16 %v140
  %v819 = vunpack.c.l.b16 %v141
  %v820 = vunpack.c.h.b16 %v141
  %v821 = vunpack.c.l.b16 %v142
  %v822 = vunpack.c.h.b16 %v142
  %v823 = vunpack.c.l.b16 %v143
  %v824 = vunpack.c.h.b16 %v143
  %v825 = vunpack.c.l.b16 %v144
  %v826 = vunpack.c.h.b16 %v144
  %v827 = vunpack.c.l.b16 %v145
  %v828 = vunpack.c.h.b16 %v145
  %v829 = vunpack.c.l.b16 %v146
  %v830 = vunpack.c.h.b16 %v146
  %v831 = vunpack.c.l.b16 %v147
  %v832 = vunpack.c.h.b16 %v147
  %v833 = vunpack.c.l.b16 %v148
  %v834 = vunpack.c.h.b16 %v148
  %v835 = vunpack.c.l.b16 %v149
  %v836 = vunpack.c.h.b16 %v149
  %v837 = vunpack.c.l.b16 %v150
  %v838 = vunpack.c.h.b16 %v150
  %v839 = vunpack.c.l.b16 %v151
  %v840 = vunpack.c.h.b16 %v151
  %v841 = vunpack.c.l.b16 %v152
  %v842 = vunpack.c.h.b16 %v152
  %v843 = vunpack.c.l.b16 %v153
  %v844 = vunpack.c.h.b16 %v153
  %v845 = vunpack.c.l.b16 %v154
  %v846 = vunpack.c.h.b16 %v154
  %v847 = vunpack.c.l.b16 %v155
  %v848 = vunpack.c.h.b16 %v155
  %v849 = vunpack.c.l.b16 %v156
  %v850 = vunpack.c.h.b16 %v156
  %v851 = vunpack.c.l.b16 %v157
  %v852 = vunpack.c.h.b16 %v157
  %v853 = vunpack.c.l.b16 %v158
  %v854 = vunpack.c.h.b16 %v158
  %v855 = vunpack.c.l.b16 %v159
  %v856 = vunpack.c.h.b16 %v159
  %v857 = vunpack.c.l.b16 %v160
  %v858 = vunpack.c.h.b16 %v160
  %v859 = vunpack.c.l.b16 %v161
  %v860 = vunpack.c.h.b16 %v161
  %v861 = vunpack.c.l.b16 %v162
  %v862 = vunpack.c.h.b16 %v162
  %v863 = vunpack.c.l.b16 %v163
  %v864 = vunpack.c.h.b16 %v163
  %v865 = vunpack.c.l.b16 %v164
  %v866 = vunpack.c.h.b16 %v164
  %v867 = vunpack.c.l.b16 %v165
  %v868 = vunpack.c.h.b16 %v165
  %v869 = vunpack.c.l.b16 %v166
  %v870 = vunpack.c.h.b16 %v166
  %v871 = vunpack.c.l.b16 %v167
  %v872 = vunpack.c.h.b16 %v167
  %v873 = vunpack.c.l.b16 %v168
  %v874 = vunpack.c.h.b16 %v168
  %v875 = vunpack.c.l.b16 %v169
  %v876 = vunpack.c.h.b16 %v169
  %v877 = vunpack.c.l.b16 %v170
  %v878 = vunpack.c.h.b16 %v170
  %v879 = vunpack.c.l.b16 %v171
  %v880 = vunpack.c.h.b16 %v171
  %v881 = vunpack.c.l.b16 %v172
  %v882 = vunpack.c.h.b16 %v172
  %v883 = vunpack.c.l.b16 %v173
  %v884 = vunpack.c.h.b16 %v173
  %v885 = vunpack.c.l.b16 %v174
  %v886 = vunpack.c.h.b16 %v174
  %v887 = vunpack.c.l.b16 %v175
  %v888 = vunpack.c.h.b16 %v175
  %v889 = vunpack.c.l.b16 %v176
  %v890 = vunpack.c.h.b16 %v176
  %v891 = vunpack.c.l.b16 %v177
  %v892 = vunpack.c.h.b16 %v177
  %v893 = vunpack.c.l.b16 %v178
  %v894 = vunpack.c.h.b16 %v178
  %v895 = vunpack.c.l.b16 %v179
  %v896 = vunpack.c.h.b16 %v179
  %v897 = vunpack.c.l.b16 %v180
  %v898 = vunpack.c.h.b16 %v180
  %v899 = vunpack.c.l.b16 %v181
  %v900 = vunpack.c.h.b16 %v181
  %v901 = vunpack.c.l.b16 %v182
  %v902 = vunpack.c.h.b16 %v182
  %v903 = vunpack.c.l.b16 %v183
  %v904 = vunpack.c.h.b16 %v183
  %v905 = vunpack.c.l.b16 %v184
  %v906 = vunpack.c.h.b16 %v184
  %v907 = vunpack.c.l.b16 %v185
  %v908 = vunpack.c.h.b16 %v185
  %v909 = vunpack.c.l.b16 %v186
  %v910 = vunpack.c.h.b16 %v186
  %v911 = vunpack.c.l.b16 %v187
  %v912 = vunpack.c.h.b16 %v187
  %v913 = vunpack.c.l.b16 %v188
  %v914 = vunpack.c.h.b16 %v188
  %v915 = vunpack.c.l.b16 %v189
  %v916 = vunpack.c.h.b16 %v189
  %v917 = vunpack.c.l.b16 %v190
  %v918 = vunpack.c.h.b16 %v190
  %v919 = vunpack.c.l.b16 %v191
  %v920 = vunpack.c.h.b16 %v191
  %v921 = vunpack.c.l.b16 %v192
  %v922 = vunpack.c.h.b16 %v192
  %v923 = vunpack.c.l.b16 %v193
  %v924 = vunpack.c.h.b16 %v193
  %v925 = vunpack.c.l.b16 %v194
  %v926 = vunpack.c.h.b16 %v194
  %v927 = vunpack.c.l.b16 %v195
  %v928 = vunpack.c.h.b16 %v195
  %v929 = vunpack.c.l.b16 %v196
  %v930 = vunpack.c.h.b16 %v196
  %v931 = vunpack.c.l.b16 %v197
  %v932 = vunpack.c.h.b16 %v197
  %v933 = vunpack.c.l.b16 %v198
  %v934 = vunpack.c.h.b16 %v198
  %v935 = vunpack.c.l.b16 %v199
  %v936 = vunpack.c.h.b16 %v199
  %v937 = vunpack.c.l.b16 %v200
  %v938 = vunpack.c.h.b16 %v200
  %v939 = vunpack.c.l.b16 %v201
  %v940 = vunpack.c.h.b16 %v201
  %v941 = vunpack.c.l.b16 %v202
  %v942 = vunpack.c.h.b16 %v202
  %v943 = vunpack.c.l.b16 %v203
  %v944 = vunpack.c.h.b16 %v203
  %v945 = vunpack.c.l.b16 %v204
  %v946 = vunpack.c.h.b16 %v204
  %v947 = vunpack.c.l.b16 %v205
  %v948 = vunpack.c.h.b16 %v205
  %v949 = vunpack.c.l.b16 %v206
  %v950 = vunpack.c.h.b16 %v206
  %v951 = vunpack.c.l.b16 %v207
  %v952 = vunpack.c.h.b16 %v207
  %v953 = vunpack.c.l.b16 %v208
  %v954 = vunpack.c.h.b16 %v208
  %v955 = vunpack.c.l.b16 %v209
  %v956 = vunpack.c.h.b16 %v209
  %v957 = vunpack.c.l.b16 %v210
  %v958 = vunpack.c.h.b16 %v210
  %v959 = vunpack.c.l.b16 %v211
  %v960 = vunpack.c.h.b16 %v211
  %v961 = vunpack.c.l.b16 %v212
  %v962 = vunpack.c.h.b16 %v212
  %v963 = vunpack.c.l.b16 %v213
  %v964 = vunpack.c.h.b16 %v213
  %v965 = vunpack.c.l.b16 %v214
  %v966 = vunpack.c.h.b16 %v214
  %v967 = vunpack.c.l.b16 %v215
  %v968 = vunpack.c.h.b16 %v215
  %v969 = vunpack.c.l.b16 %v216
  %v970 = vunpack.c.h.b16 %v216
  %v971 = vunpack.c.l.b16 %v217
  %v972 = vunpack.c.h.b16 %v217
  %v973 = vunpack.c.l.b16 %v218
  %v974 = vunpack.c.h.b16 %v218
  %v975 = vunpack.c.l.b16 %v219
  %v976 = vunpack.c.h.b16 %v219
  %v977 = vunpack.c.l.b16 %v220
  %v978 = vunpack.c.h.b16 %v220
  %v979 = vunpack.c.l.b16 %v221
  %v980 = vunpack.c.h.b16 %v221
  %v981 = vunpack.c.l.b16 %v222
  %v982 = vunpack.c.h.b16 %v222
  %v983 = vunpack.c.l.b16 %v223
  %v984 = vunpack.c.h.b16 %v223
  %v985 = vunpack.c.l.b16 %v224
  %v986 = vunpack.c.h.b16 %v224
  %v987 = vunpack.c.l.b16 %v225
  %v988 = vunpack.c.h.b16 %v225
  %v989 = vunpack.c.l.b16 %v226
  %v990 = vunpack.c.h.b16 %v226
  %v991 = vunpack.c.l.b16 %v227
  %v992 = vunpack.c.h.b16 %v227
  %v993 = vunpack.c.l.b16 %v228
  %v994 = vunpack.c.h.b16 %v228
  %v995 = vunpack.c.l.b16 %v229
  %v996 = vunpack.c.h.b16 %v229
  %v997 = vunpack.c.l.b16 %v230
  %v998 = vunpack.c.h.b16 %v230
  %v999 = vunpack.c.l.b16 %v231
  %v1000 = vunpack.c.h.b16 %v231
  %v1001 = vunpack.c.l.b16 %v232
  %v1002 = vunpack.c.h.b16 %v232
  %v1003 = vunpack.c.l.b16 %v233
  %v1004 = vunpack.c.h.b16 %v233
  %v1005 = vunpack.c.l.b16 %v234
  %v1006 = vunpack.c.h.b16 %v234
  %v1007 = vunpack.c.l.b16 %v235
  %v1008 = vunpack.c.h.b16 %v235
  %v1009 = vunpack.c.l.b16 %v236
  %v1010 = vunpack.c.h.b16 %v236
  %v1011 = vunpack.c.l.b16 %v237
  %v1012 = vunpack.c.h.b16 %v237
  %v1013 = vunpack.c.l.b16 %v238
  %v1014 = vunpack.c.h.b16 %v238
  %v1015 = vunpack.c.l.b16 %v239
  %v1016 = vunpack.c.h.b16 %v239
  %v1017 = vunpack.c.l.b16 %v240
  %v1018 = vunpack.c.h.b16 %v240
  %v1019 = vunpack.c.l.b16 %v241
  %v1020 = vunpack.c.h.b16 %v241
  %v1021 = vunpack.c.l.b16 %v242
  %v1022 = vunpack.c.h.b16 %v242
  %v1023 = vunpack.c.l.b16 %v243
  %v1024 = vunpack.c.h.b16 %v243
  %v1025 = vunpack.c.l.b16 %v244
  %v1026 = vunpack.c.h.b16 %v244
  %v1027 = vunpack.c.l.b16 %v245
  %v1028 = vunpack.c.h.b16 %v245
  %v1029 = vunpack.c.l.b16 %v246
  %v1030 = vunpack.c.h.b16 %v246
  %v1031 = vunpack.c.l.b16 %v247
  %v1032 = vunpack.c.h.b16 %v247
  %v1033 = vunpack.c.l.b16 %v248
  %v1034 = vunpack.c.h.b16 %v248
  %v1035 = vunpack.c.l.b16 %v249
  %v1036 = vunpack.c.h.b16 %v249
  %v1037 = vunpack.c.l.b16 %v250
  %v1038 = vunpack.c.h.b16 %v250
  %v1039 = vunpack.c.l.b16 %v251
  %v1040 = vunpack.c.h.b16 %v251
  %v1041 = vunpack.c.l.b16 %v252
  %v1042 = vunpack.c.h.b16 %v252
  %v1043 = vunpack.c.l.b16 %v253
  %v1044 = vunpack.c.h.b16 %v253
  %v1045 = vunpack.c.l.b16 %v254
  %v1046 = vunpack.c.h.b16 %v254
  %v1047 = vunpack.c.l.b16 %v255
  %v1048 = vunpack.c.h.b16 %v255
  %v1049 = vunpack.c.l.b16 %v256
  %v1050 = vunpack.c.h.b16 %v256
  %v1051 = vunpack.c.l.b16 %v257
  %v1052 = vunpack.c.h.b16 %v257
  %v1053 = vunpack.c.l.b16 %v258
  %v1054 = vunpack.c.h.b16 %v258
  %v1055 = vunpack.c.l.b16 %v259
  %v1056 = vunpack.c.h.b16 %v259
  %v1057 = vunpack.c.l.b16 %v260
  %v1058 = vunpack.c.h.b16 %v260
  %v1059 = vunpack.c.l.b16 %v261
  %v1060 = vunpack.c.h.b16 %v261
  %v1061 = vunpack.c.l.b16 %v262
  %v1062 = vunpack.c.h.b16 %v262
  %v1063 = vunpack.c.l.b16 %v263
  %v1064 = vunpack.c.h.b16 %v263
  %v1065 = vunpack.c.l.b16 %v264
  %v1066 = vunpack.c.h.b16 %v264
  %v1067 = vunpack.c.l.b16 %v265
  %v1068 = vunpack.c.h.b16 %v265
  %v1069 = vunpack.c.l.b16 %v266
  %v1070 = vunpack.c.h.b16 %v266
  %v1071 = vunpack.c.l.b16 %v267
  %v1072 = vunpack.c.h.b16 %v267
  %v1073 = vunpack.c.l.b16 %v268
  %v1074 = vunpack.c.h.b16 %v268
  %v1075 = vunpack.c.l.b16 %v269
  %v1076 = vunpack.c.h.b16 %v269
  %v1077 = vunpack.c.l.b16 %v270
  %v1078 = vunpack.c.h.b16 %v270
  %v1079 = vunpack.c.l.b16 %v271
  %v1080 = vunpack.c.h.b16 %v271
  %v1081 = vunpack.c.l.b16 %v272
  %v1082 = vunpack.c.h.b16 %v272
  %v1083 = vunpack.c.l.b16 %v273
  %v1084 = vunpack.c.h.b16 %v273
  %v1085 = vunpack.c.l.b16 %v274
  %v1086 = vunpack.c.h.b16 %v274
  %v1087 = vunpack.c.l.b16 %v275
  %v1088 = vunpack.c.h.b16 %v275
  %v1089 = vunpack.c.l.b16 %v276
  %v1090 = vunpack.c.h.b16 %v276
  %v1091 = vunpack.c.l.b16 %v277
  %v1092 = vunpack.c.h.b16 %v277
  %v1093 = vunpack.c.l.b16 %v278
  %v1094 = vunpack.c.h.b16 %v278
  %v1095 = vunpack.c.l.b16 %v279
  %v1096 = vunpack.c.h.b16 %v279
  %v1097 = vunpack.c.l.b16 %v280
  %v1098 = vunpack.c.h.b16 %v280
  %v1099 = vpack.c.b16 %v591, %v587
  %v1100 = vpack.c.b16 %v592, %v588
  %v1101 = vpack.c.b16 %v593, %v589
  %v1102 = vpack.c.b16 %v594, %v590
  %v1103 = vpack.c.b16 %v599, %v595
  %v1104 = vpack.c.b16 %v600, %v596
  %v1105 = vpack.c.b16 %v601, %v597
  %v1106 = vpack.c.b16 %v602, %v598
  %v1107 = vpack.c.b16 %v607, %v603
  %v1108 = vpack.c.b16 %v608, %v604
  %v1109 = vpack.c.b16 %v609, %v605
  %v1110 = vpack.c.b16 %v610, %v606
  %v1111 = vpack.c.b16 %v615, %v611
  %v1112 = vpack.c.b16 %v616, %v612
  %v1113 = vpack.c.b16 %v617, %v613
  %v1114 = vpack.c.b16 %v618, %v614
  %v1115 = vpack.c.b16 %v623, %v619
  %v1116 = vpack.c.b16 %v624, %v620
  %v1117 = vpack.c.b16 %v625, %v621
  %v1118 = vpack.c.b16 %v626, %v622
  %v1119 = vpack.c.b16 %v631, %v627
  %v1120 = vpack.c.b16 %v632, %v628
  %v1121 = vpack.c.b16 %v633, %v629
  %v1122 = vpack.c.b16 %v634, %v630
  %v1123 = vpack.c.b16 %v639, %v635
  %v1124 = vpack.c.b16 %v640, %v636
  %v1125 = vpack.c.b16 %v641, %v637
  %v1126 = vpack.c.b16 %v642, %v638
  %v1127 = vpack.c.b16 %v647, %v643
  %v1128 = vpack.c.b16 %v648, %v644
  %v1129 = vpack.c.b16 %v649, %v645
  %v1130 = vpack.c.b16 %v650, %v646
  %v1131 = vpack.c.b16 %v655, %v651
  %v1132 = vpack.c.b16 %v656, %v652
  %v1133 = vpack.c.b16 %v657, %v653
  %v1134 = vpack.c.b16 %v658, %v654
  %v1135 = vpack.c.b16 %v663, %v659
  %v1136 = vpack.c.b16 %v664, %v660
  %v1137 = vpack.c.b16 %v665, %v661
  %v1138 = vpack.c.b16 %v666, %v662
  %v1139 = vpack.c.b16 %v671, %v667
  %v1140 = vpack.c.b16 %v672, %v668
  %v1141 = vpack.c.b16 %v673, %v669
  %v1142 = vpack.c.b16 %v674, %v670
  %v1143 = vpack.c.b16 %v679, %v675
  %v1144 = vpack.c.b16 %v680, %v676
  %v1145 = vpack.c.b16 %v681, %v677
  %v1146 = vpack.c.b16 %v682, %v678
  %v1147 = vpack.c.b16 %v687, %v683
  %v1148 = vpack.c.b16 %v688, %v684
  %v1149 = vpack.c.b16 %v689, %v685
  %v1150 = vpack.c.b16 %v690, %v686
  %v1151 = vpack.c.b16 %v695, %v691
  %v1152 = vpack.c.b16 %v696, %v692
  %v1153 = vpack.c.b16 %v697, %v693
  %v1154 = vpack.c.b16 %v698, %v694
  %v1155 = vpack.c.b16 %v703, %v699
  %v1156 = vpack.c.b16 %v704, %v700
  %v1157 = vpack.c.b16 %v705, %v701
  %v1158 = vpack.c.b16 %v706, %v702
  %v1159 = vpack.c.b16 %v711, %v707
  %v1160 = vpack.c.b16 %v712, %v708
  %v1161 = vpack.c.b16 %v713, %v709
  %v1162 = vpack.c.b16 %v714, %v710
  %v1163 = vpack.c.b16 %v719, %v715
  %v1164 = vpack.c.b16 %v720, %v716
  %v1165 = vpack.c.b16 %v721, %v717
  %v1166 = vpack.c.b16 %v722, %v718
  %v1167 = vpack.c.b16 %v727, %v723
  %v1168 = vpack.c.b16 %v728, %v724
  %v1169 = vpack.c.b16 %v729, %v725
  %v1170 = vpack.c.b16 %v730, %v726
  %v1171 = vpack.c.b16 %v735, %v731
  %v1172 = vpack.c.b16 %v736, %v732
  %v1173 = vpack.c.b16 %v737, %v733
  %v1174 = vpack.c.b16 %v738, %v734
  %v1175 = vpack.c.b16 %v743, %v739
  %v1176 = vpack.c.b16 %v744, %v740
  %v1177 = vpack.c.b16 %v745, %v741
  %v1178 = vpack.c.b16 %v746, %v742
  %v1179 = vpack.c.b16 %v751, %v747
  %v1180 = vpack.c.b16 %v752, %v748
  %v1181 = vpack.c.b16 %v753, %v749
  %v1182 = vpack.c.b16 %v754, %v750
  %v1183 = vpack.c.b16 %v759, %v755
  %v1184 = vpack.c.b16 %v760, %v756
  %v1185 = vpack.c.b16 %v761, %v757
  %v1186 = vpack.c.b16 %v762, %v758
  %v1187 = vpack.c.b16 %v767, %v763
  %v1188 = vpack.c.b16 %v768, %v764
  %v1189 = vpack.c.b16 %v769, %v765
  %v1190 = vpack.c.b16 %v770, %v766
  %v1191 = vpack.c.b16 %v775, %v771
  %v1192 = vpack.c.b16 %v776, %v772
  %v1193 = vpack.c.b16 %v777, %v773
  %v1194 = vpack.c.b16 %v778, %v774
  %v1195 = vpack.c.b16 %v783, %v779
  %v1196 = vpack.c.b16 %v784, %v780
  %v1197 = vpack.c.b16 %v785, %v781
  %v1198 = vpack.c.b16 %v786, %v782
  %v1199 = vpack.c.b16 %v791, %v787
  %v1200 = vpack.c.b16 %v792, %v788
  %v1201 = vpack.c.b16 %v793, %v789
  %v1202 = vpack.c.b16 %v794, %v790
  %v1203 = vpack.c.b16 %v799, %v795
  %v1204 = vpack.c.b16 %v800, %v796
  %v1205 = vpack.c.b16 %v801, %v797
  %v1206 = vpack.c.b16 %v802, %v798
  %v1207 = vpack.c.b16 %v807, %v803
  %v1208 = vpack.c.b16 %v808, %v804
  %v1209 = vpack.c.b16 %v809, %v805
  %v1210 = vpack.c.b16 %v810, %v806
  %v1211 = vpack.c.b16 %v815, %v811
  %v1212 = vpack.c.b16 %v816, %v812
  %v1213 = vpack.c.b16 %v817, %v813
  %v1214 = vpack.c.b16 %v818, %v814
  %v1215 = vpack.c.b16 %v823, %v819
  %v1216 = vpack.c.b16 %v824, %v820
  %v1217 = vpack.c.b16 %v825, %v821
  %v1218 = vpack.c.b16 %v826, %v822
  %v1219 = vpack.c.b16 %v831, %v827
  %v1220 = vpack.c.b16 %v832, %v828
  %v1221 = vpack.c.b16 %v833, %v829
  %v1222 = vpack.c.b16 %v834, %v830
  %v1223 = vpack.c.b16 %v839, %v835
  %v1224 = vpack.c.b16 %v840, %v836
  %v1225 = vpack.c.b16 %v841, %v837
  %v1226 = vpack.c.b16 %v842, %v838
  %v1227 = vpack.c.b16 %v847, %v843
  %v1228 = vpack.c.b16 %v848, %v844
  %v1229 = vpack.c.b16 %v849, %v845
  %v1230 = vpack.c.b16 %v850, %v846
  %v1231 = vpack.c.b16 %v855, %v851
  %v1232 = vpack.c.b16 %v856, %v852
  %v1233 = vpack.c.b16 %v857, %v853
  %v1234 = vpack.c.b16 %v858, %v854
  %v1235 = vpack.c.b16 %v863, %v859
  %v1236 = vpack.c.b16 %v864, %v860
  %v1237 = vpack.c.b16 %v865, %v861
  %v1238 = vpack.c.b16 %v866, %v862
  %v1239 = vpack.c.b16 %v871, %v867
  %v1240 = vpack.c.b16 %v872, %v868
  %v1241 = vpack.c.b16 %v873, %v869
  %v1242 = vpack.c.b16 %v874, %v870
  %v1243 = vpack.c.b16 %v879, %v875
  %v1244 = vpack.c.b16 %v880, %v876
  %v1245 = vpack.c.b16 %v881, %v877
  %v1246 = vpack.c.b16 %v882, %v878
  %v1247 = vpack.c.b16 %v887, %v883
  %v1248 = vpack.c.b16 %v888, %v884
  %v1249 = vpack.c.b16 %v889, %v885
  %v1250 = vpack.c.b16 %v890, %v886
  %v1251 = vpack.c.b16 %v895, %v891
  %v1252 = vpack.c.b16 %v896, %v892
  %v1253 = vpack.c.b16 %v897, %v893
  %v1254 = vpack.c.b16 %v898, %v894
  %v1255 = vpack.c.b16 %v903, %v899
  %v1256 = vpack.c.b16 %v904, %v900
  %v1257 = vpack.c.b16 %v905, %v901
  %v1258 = vpack.c.b16 %v906, %v902
  %v1259 = vpack.c.b16 %v911, %v907
  %v1260 = vpack.c.b16 %v912, %v908
  %v1261 = vpack.c.b16 %v913, %v909
  %v1262 = vpack.c.b16 %v914, %v910
  %v1263 = vpack.c.b16 %v919, %v915
  %v1264 = vpack.c.b16 %v920, %v916
  %v1265 = vpack.c.b16 %v921, %v917
  %v1266 = vpack.c.b16 %v922, %v918
  %v1267 = vpack.c.b16 %v927, %v923
  %v1268 = vpack.c.b16 %v928, %v924
  %v1269 = vpack.c.b16 %v929, %v925
  %v1270 = vpack.c.b16 %v930, %v926
  %v1271 = vpack.c.b16 %v935, %v931
  %v1272 = vpack.c.b16 %v936, %v932
  %v1273 = vpack.c.b16 %v937, %v933
  %v1274 = vpack.c.b16 %v938, %v934
  %v1275 = vpack.c.b16 %v943, %v939
  %v1276 = vpack.c.b16 %v944, %v940
  %v1277 = vpack.c.b16 %v945, %v941
  %v1278 = vpack.c.b16 %v946, %v942
  %v1279 = vpack.c.b16 %v951, %v947
  %v1280 = vpack.c.b16 %v952, %v948
  %v1281 = vpack.c.b16 %v953, %v949
  %v1282 = vpack.c.b16 %v954, %v950
  %v1283 = vpack.c.b16 %v959, %v955
  %v1284 = vpack.c.b16 %v960, %v956
  %v1285 = vpack.c.b16 %v961, %v957
  %v1286 = vpack.c.b16 %v962, %v958
  %v1287 = vpack.c.b16 %v967, %v963
  %v1288 = vpack.c.b16 %v968, %v964
  %v1289 = vpack.c.b16 %v969, %v965
  %v1290 = vpack.c.b16 %v970, %v966
  %v1291 = vpack.c.b16 %v975, %v971
  %v1292 = vpack.c.b16 %v976, %v972
  %v1293 = vpack.c.b16 %v977, %v973
  %v1294 = vpack.c.b16 %v978, %v974
  %v1295 = vpack.c.b16 %v983, %v979
  %v1296 = vpack.c.b16 %v984, %v980
  %v1297 = vpack.c.b16 %v985, %v981
  %v1298 = vpack.c.b16 %v986, %v982
  %v1299 = vpack.c.b16 %v991, %v987
  %v1300 = vpack.c.b16 %v992, %v988
  %v1301 = vpack.c.b16 %v993, %v989
  %v1302 = vpack.c.b16 %v994, %v990
  %v1303 = vpack.c.b16 %v999, %v995
  %v1304 = vpack.c.b16 %v1000, %v996
  %v1305 = vpack.c.b16 %v1001, %v997
  %v1306 = vpack.c.b16 %v1002, %v998
  %v1307 = vpack.c.b16 %v1007, %v1003
  %v1308 = vpack.c.b16 %v1008, %v1004
  %v1309 = vpack.c.b16 %v1009, %v1005
  %v1310 = vpack.c.b16 %v1010, %v1006
  %v1311 = vpack.c.b16 %v1015, %v1011
  %v1312 = vpack.c.b16 %v1016, %v1012
  %v1313 = vpack.c.b16 %v1017, %v1013
  %v1314 = vpack.c.b16 %v1018, %v1014
  %v1315 = vpack.c.b16 %v1023, %v1019
  %v1316 = vpack.c.b16 %v1024, %v1020
  %v1317 = vpack.c.b16 %v1025, %v1021
  %v1318 = vpack.c.b16 %v1026, %v1022
  %v1319 = vpack.c.b16 %v1031, %v1027
  %v1320 = vpack.c.b16 %v1032, %v1028
  %v1321 = vpack.c.b16 %v1033, %v1029
  %v1322 = vpack.c.b16 %v1034, %v1030
  %v1323 = vpack.c.b16 %v1039, %v1035
  %v1324 = vpack.c.b16 %v1040, %v1036
  %v1325 = vpack.c.b16 %v1041, %v1037
  %v1326 = vpack.c.b16 %v1042, %v1038
  %v1327 = vpack.c.b16 %v1047, %v1043
  %v1328 = vpack.c.b16 %v1048, %v1044
  %v1329 = vpack.c.b16 %v1049, %v1045
  %v1330 = vpack.c.b16 %v1050, %v1046
  %v1331 = vpack.c.b16 %v1055, %v1051
  %v1332 = vpack.c.b16 %v1056, %v1052
  %v1333 = vpack.c.b16 %v1057, %v1053
  %v1334 = vpack.c.b16 %v1058, %v1054
  %v1335 = vpack.c.b16 %v1063, %v1059
  %v1336 = vpack.c.b16 %v1064, %v1060
  %v1337 = vpack.c.b16 %v1065, %v1061
  %v1338 = vpack.c.b16 %v1066, %v1062
  %v1339 = vpack.c.b16 %v1071, %v1067
  %v1340 = vpack.c.b16 %v1072, %v1068
  %v1341 = vpack.c.b16 %v1073, %v1069
  %v1342 = vpack.c.b16 %v1074, %v1070
  %v1343 = vpack.c.b16 %v1079, %v1075
  %v1344 = vpack.c.b16 %v1080, %v1076
  %v1345 = vpack.c.b16 %v1081, %v1077
  %v1346 = vpack.c.b16 %v1082, %v1078
  %v1347 = vpack.c.b16 %v1087, %v1083
  %v1348 = vpack.c.b16 %v1088, %v1084
  %v1349 = vpack.c.b16 %v1089, %v1085
  %v1350 = vpack.c.b16 %v1090, %v1086
  %v1351 = vpack.c.b16 %v1095, %v1091
  %v1352 = vpack.c.b16 %v1096, %v1092
  %v1353 = vpack.c.b16 %v1097, %v1093
  %v1354 = vpack.c.b16 %v1098, %v1094
  %1611 = vmatprep.subr.bf16.mxu0 %v1100
  %1612 = vmatpush1.bf16.msra.mxu0 %v1099
  %1613 = vmatprep.subr.bf16.mxu0 %v1104
  %1614 = vmatpush1.bf16.msra.mxu0 %v1103
  %1615 = vmatprep.subr.bf16.mxu0 %v1108
  %1616 = vmatpush1.bf16.msra.mxu0 %v1107
  %1617 = vmatprep.subr.bf16.mxu0 %v1112
  %1618 = vmatpush1.bf16.msra.mxu0 %v1111
  %1619 = vmatprep.subr.bf16.mxu0 %v1116
  %1620 = vmatpush1.bf16.msra.mxu0 %v1115
  %1621 = vmatprep.subr.bf16.mxu0 %v1120
  %1622 = vmatpush1.bf16.msra.mxu0 %v1119
  %1623 = vmatprep.subr.bf16.mxu0 %v1124
  %1624 = vmatpush1.bf16.msra.mxu0 %v1123
  %1625 = vmatprep.subr.bf16.mxu0 %v1128
  %1626 = vmatpush1.bf16.msra.mxu0 %v1127
  %1627 = vmatprep.subr.bf16.mxu0 %v1132
  %1628 = vmatpush1.bf16.msra.mxu0 %v1131
  %1629 = vmatprep.subr.bf16.mxu0 %v1136
  %1630 = vmatpush1.bf16.msra.mxu0 %v1135
  %1631 = vmatprep.subr.bf16.mxu0 %v1140
  %1632 = vmatpush1.bf16.msra.mxu0 %v1139
  %1633 = vmatprep.subr.bf16.mxu0 %v1144
  %1634 = vmatpush1.bf16.msra.mxu0 %v1143
  %1635 = vmatprep.subr.bf16.mxu0 %v1148
  %1636 = vmatpush1.bf16.msra.mxu0 %v1147
  %1637 = vmatprep.subr.bf16.mxu0 %v1152
  %1638 = vmatpush1.bf16.msra.mxu0 %v1151
  %1639 = vmatprep.subr.bf16.mxu0 %v1156
  %1640 = vmatpush1.bf16.msra.mxu0 %v1155
  %1641 = vmatprep.subr.bf16.mxu0 %v1160
  %1642 = vmatpush1.bf16.msra.mxu0 %v1159
  %1643 = vmatprep.mubr.bf16.mxu0 %v316
  %1644 = vmatmul.mubr.bf16.gmra.mrb[0].mxu0 %v315
  %v1645 = vpop.f32.mrb[0].mxu0
  %v1646 = vadd.f32 %v286, %v1645
  %v1647 = vpop.f32.mrb[0].mxu0
  %v1648 = vadd.f32 %v290, %v1647
  %v1649 = vpop.f32.mrb[0].mxu0
  %v1650 = vpop.f32.mrb[0].mxu0
  %1651 = vdwg.mxu0
  %1652 = vmatprep.subr.bf16.mxu0 %v1164
  %1653 = vmatpush1.bf16.msra.mxu0 %v1163
  %1654 = vmatprep.subr.bf16.mxu0 %v1168
  %1655 = vmatpush1.bf16.msra.mxu0 %v1167
  %1656 = vmatprep.subr.bf16.mxu0 %v1172
  %1657 = vmatpush1.bf16.msra.mxu0 %v1171
  %1658 = vmatprep.subr.bf16.mxu0 %v1176
  %1659 = vmatpush1.bf16.msra.mxu0 %v1175
  %1660 = vmatprep.subr.bf16.mxu0 %v1180
  %1661 = vmatpush1.bf16.msra.mxu0 %v1179
  %1662 = vmatprep.subr.bf16.mxu0 %v1184
  %1663 = vmatpush1.bf16.msra.mxu0 %v1183
  %1664 = vmatprep.subr.bf16.mxu0 %v1188
  %1665 = vmatpush1.bf16.msra.mxu0 %v1187
  %1666 = vmatprep.subr.bf16.mxu0 %v1192
  %1667 = vmatpush1.bf16.msra.mxu0 %v1191
  %1668 = vmatprep.subr.bf16.mxu0 %v1196
  %1669 = vmatpush1.bf16.msra.mxu0 %v1195
  %1670 = vmatprep.subr.bf16.mxu0 %v1200
  %1671 = vmatpush1.bf16.msra.mxu0 %v1199
  %1672 = vmatprep.subr.bf16.mxu0 %v1204
  %1673 = vmatpush1.bf16.msra.mxu0 %v1203
  %1674 = vmatprep.subr.bf16.mxu0 %v1208
  %1675 = vmatpush1.bf16.msra.mxu0 %v1207
  %1676 = vmatprep.subr.bf16.mxu0 %v1212
  %1677 = vmatpush1.bf16.msra.mxu0 %v1211
  %1678 = vmatprep.subr.bf16.mxu0 %v1216
  %1679 = vmatpush1.bf16.msra.mxu0 %v1215
  %1680 = vmatprep.subr.bf16.mxu0 %v1220
  %1681 = vmatpush1.bf16.msra.mxu0 %v1219
  %1682 = vmatprep.subr.bf16.mxu0 %v1224
  %1683 = vmatpush1.bf16.msra.mxu0 %v1223
  %1684 = vmatprep.mubr.bf16.mxu0 %v318
  %1685 = vmatmul.mubr.bf16.gmra.mrb[0].mxu0 %v317
  %v1686 = vpop.f32.mrb[0].mxu0
  %v1687 = vadd.f32 %v1646, %v1686
  %v1688 = vpop.f32.mrb[0].mxu0
  %v1689 = vadd.f32 %v1648, %v1688
  %v1690 = vpop.f32.mrb[0].mxu0
  %v1691 = vpop.f32.mrb[0].mxu0
  %1692 = vdwg.mxu0
  %1693 = vmatprep.subr.bf16.mxu0 %v1228
  %1694 = vmatpush1.bf16.msra.mxu0 %v1227
  %1695 = vmatprep.subr.bf16.mxu0 %v1232
  %1696 = vmatpush1.bf16.msra.mxu0 %v1231
  %1697 = vmatprep.subr.bf16.mxu0 %v1236
  %1698 = vmatpush1.bf16.msra.mxu0 %v1235
  %1699 = vmatprep.subr.bf16.mxu0 %v1240
  %1700 = vmatpush1.bf16.msra.mxu0 %v1239
  %1701 = vmatprep.subr.bf16.mxu0 %v1244
  %1702 = vmatpush1.bf16.msra.mxu0 %v1243
  %1703 = vmatprep.subr.bf16.mxu0 %v1248
  %1704 = vmatpush1.bf16.msra.mxu0 %v1247
  %1705 = vmatprep.subr.bf16.mxu0 %v1252
  %1706 = vmatpush1.bf16.msra.mxu0 %v1251
  %1707 = vmatprep.subr.bf16.mxu0 %v1256
  %1708 = vmatpush1.bf16.msra.mxu0 %v1255
  %1709 = vmatprep.subr.bf16.mxu0 %v1260
  %1710 = vmatpush1.bf16.msra.mxu0 %v1259
  %1711 = vmatprep.subr.bf16.mxu0 %v1264
  %1712 = vmatpush1.bf16.msra.mxu0 %v1263
  %1713 = vmatprep.subr.bf16.mxu0 %v1268
  %1714 = vmatpush1.bf16.msra.mxu0 %v1267
  %1715 = vmatprep.subr.bf16.mxu0 %v1272
  %1716 = vmatpush1.bf16.msra.mxu0 %v1271
  %1717 = vmatprep.subr.bf16.mxu0 %v1276
  %1718 = vmatpush1.bf16.msra.mxu0 %v1275
  %1719 = vmatprep.subr.bf16.mxu0 %v1280
  %1720 = vmatpush1.bf16.msra.mxu0 %v1279
  %1721 = vmatprep.subr.bf16.mxu0 %v1284
  %1722 = vmatpush1.bf16.msra.mxu0 %v1283
  %1723 = vmatprep.subr.bf16.mxu0 %v1288
  %1724 = vmatpush1.bf16.msra.mxu0 %v1287
  %1725 = vmatprep.mubr.bf16.mxu0 %v320
  %1726 = vmatmul.mubr.bf16.gmra.mrb[0].mxu0 %v319
  %v1727 = vpop.f32.mrb[0].mxu0
  %v1728 = vadd.f32 %v1687, %v1727
  %v1729 = vpop.f32.mrb[0].mxu0
  %v1730 = vadd.f32 %v1689, %v1729
  %v1731 = vpop.f32.mrb[0].mxu0
  %v1732 = vpop.f32.mrb[0].mxu0
  %1733 = vdwg.mxu0
  %1734 = vmatprep.subr.bf16.mxu0 %v1292
  %1735 = vmatpush1.bf16.msra.mxu0 %v1291
  %1736 = vmatprep.subr.bf16.mxu0 %v1296
  %1737 = vmatpush1.bf16.msra.mxu0 %v1295
  %1738 = vmatprep.subr.bf16.mxu0 %v1300
  %1739 = vmatpush1.bf16.msra.mxu0 %v1299
  %1740 = vmatprep.subr.bf16.mxu0 %v1304
  %1741 = vmatpush1.bf16.msra.mxu0 %v1303
  %1742 = vmatprep.subr.bf16.mxu0 %v1308
  %1743 = vmatpush1.bf16.msra.mxu0 %v1307
  %1744 = vmatprep.subr.bf16.mxu0 %v1312
  %1745 = vmatpush1.bf16.msra.mxu0 %v1311
  %1746 = vmatprep.subr.bf16.mxu0 %v1316
  %1747 = vmatpush1.bf16.msra.mxu0 %v1315
  %1748 = vmatprep.subr.bf16.mxu0 %v1320
  %1749 = vmatpush1.bf16.msra.mxu0 %v1319
  %1750 = vmatprep.subr.bf16.mxu0 %v1324
  %1751 = vmatpush1.bf16.msra.mxu0 %v1323
  %1752 = vmatprep.subr.bf16.mxu0 %v1328
  %1753 = vmatpush1.bf16.msra.mxu0 %v1327
  %1754 = vmatprep.subr.bf16.mxu0 %v1332
  %1755 = vmatpush1.bf16.msra.mxu0 %v1331
  %1756 = vmatprep.subr.bf16.mxu0 %v1336
  %1757 = vmatpush1.bf16.msra.mxu0 %v1335
  %1758 = vmatprep.subr.bf16.mxu0 %v1340
  %1759 = vmatpush1.bf16.msra.mxu0 %v1339
  %1760 = vmatprep.subr.bf16.mxu0 %v1344
  %1761 = vmatpush1.bf16.msra.mxu0 %v1343
  %1762 = vmatprep.subr.bf16.mxu0 %v1348
  %1763 = vmatpush1.bf16.msra.mxu0 %v1347
  %1764 = vmatprep.subr.bf16.mxu0 %v1352
  %1765 = vmatpush1.bf16.msra.mxu0 %v1351
  %1766 = vmatprep.mubr.bf16.mxu0 %v322
  %1767 = vmatmul.mubr.bf16.gmra.mrb[0].mxu0 %v321
  %v1768 = vpop.f32.mrb[0].mxu0
  %v1769 = vadd.f32 %v1728, %v1768
  %v1770 = vpop.f32.mrb[0].mxu0
  %v1771 = vadd.f32 %v1730, %v1770
  %v1772 = vpop.f32.mrb[0].mxu0
  %v1773 = vpop.f32.mrb[0].mxu0
  %1774 = vdwg.mxu0
  %1775 = vmatprep.subr.bf16.mxu0 %v1102
  %1776 = vmatpush1.bf16.msra.mxu0 %v1101
  %1777 = vmatprep.subr.bf16.mxu0 %v1106
  %1778 = vmatpush1.bf16.msra.mxu0 %v1105
  %1779 = vmatprep.subr.bf16.mxu0 %v1110
  %1780 = vmatpush1.bf16.msra.mxu0 %v1109
  %1781 = vmatprep.subr.bf16.mxu0 %v1114
  %1782 = vmatpush1.bf16.msra.mxu0 %v1113
  %1783 = vmatprep.subr.bf16.mxu0 %v1118
  %1784 = vmatpush1.bf16.msra.mxu0 %v1117
  %1785 = vmatprep.subr.bf16.mxu0 %v1122
  %1786 = vmatpush1.bf16.msra.mxu0 %v1121
  %1787 = vmatprep.subr.bf16.mxu0 %v1126
  %1788 = vmatpush1.bf16.msra.mxu0 %v1125
  %1789 = vmatprep.subr.bf16.mxu0 %v1130
  %1790 = vmatpush1.bf16.msra.mxu0 %v1129
  %1791 = vmatprep.subr.bf16.mxu0 %v1134
  %1792 = vmatpush1.bf16.msra.mxu0 %v1133
  %1793 = vmatprep.subr.bf16.mxu0 %v1138
  %1794 = vmatpush1.bf16.msra.mxu0 %v1137
  %1795 = vmatprep.subr.bf16.mxu0 %v1142
  %1796 = vmatpush1.bf16.msra.mxu0 %v1141
  %1797 = vmatprep.subr.bf16.mxu0 %v1146
  %1798 = vmatpush1.bf16.msra.mxu0 %v1145
  %1799 = vmatprep.subr.bf16.mxu0 %v1150
  %1800 = vmatpush1.bf16.msra.mxu0 %v1149
  %1801 = vmatprep.subr.bf16.mxu0 %v1154
  %1802 = vmatpush1.bf16.msra.mxu0 %v1153
  %1803 = vmatprep.subr.bf16.mxu0 %v1158
  %1804 = vmatpush1.bf16.msra.mxu0 %v1157
  %1805 = vmatprep.subr.bf16.mxu0 %v1162
  %1806 = vmatpush1.bf16.msra.mxu0 %v1161
  %1807 = vmatprep.mubr.bf16.mxu0 %v316
  %1808 = vmatmul.mubr.bf16.gmra.mrb[0].mxu0 %v315
  %v1809 = vpop.f32.mrb[0].mxu0
  %v1810 = vadd.f32 %v294, %v1809
  %v1811 = vpop.f32.mrb[0].mxu0
  %v1812 = vadd.f32 %v298, %v1811
  %v1813 = vpop.f32.mrb[0].mxu0
  %v1814 = vpop.f32.mrb[0].mxu0
  %1815 = vdwg.mxu0
  %1816 = vmatprep.subr.bf16.mxu0 %v1166
  %1817 = vmatpush1.bf16.msra.mxu0 %v1165
  %1818 = vmatprep.subr.bf16.mxu0 %v1170
  %1819 = vmatpush1.bf16.msra.mxu0 %v1169
  %1820 = vmatprep.subr.bf16.mxu0 %v1174
  %1821 = vmatpush1.bf16.msra.mxu0 %v1173
  %1822 = vmatprep.subr.bf16.mxu0 %v1178
  %1823 = vmatpush1.bf16.msra.mxu0 %v1177
  %1824 = vmatprep.subr.bf16.mxu0 %v1182
  %1825 = vmatpush1.bf16.msra.mxu0 %v1181
  %1826 = vmatprep.subr.bf16.mxu0 %v1186
  %1827 = vmatpush1.bf16.msra.mxu0 %v1185
  %1828 = vmatprep.subr.bf16.mxu0 %v1190
  %1829 = vmatpush1.bf16.msra.mxu0 %v1189
  %1830 = vmatprep.subr.bf16.mxu0 %v1194
  %1831 = vmatpush1.bf16.msra.mxu0 %v1193
  %1832 = vmatprep.subr.bf16.mxu0 %v1198
  %1833 = vmatpush1.bf16.msra.mxu0 %v1197
  %1834 = vmatprep.subr.bf16.mxu0 %v1202
  %1835 = vmatpush1.bf16.msra.mxu0 %v1201
  %1836 = vmatprep.subr.bf16.mxu0 %v1206
  %1837 = vmatpush1.bf16.msra.mxu0 %v1205
  %1838 = vmatprep.subr.bf16.mxu0 %v1210
  %1839 = vmatpush1.bf16.msra.mxu0 %v1209
  %1840 = vmatprep.subr.bf16.mxu0 %v1214
  %1841 = vmatpush1.bf16.msra.mxu0 %v1213
  %1842 = vmatprep.subr.bf16.mxu0 %v1218
  %1843 = vmatpush1.bf16.msra.mxu0 %v1217
  %1844 = vmatprep.subr.bf16.mxu0 %v1222
  %1845 = vmatpush1.bf16.msra.mxu0 %v1221
  %1846 = vmatprep.subr.bf16.mxu0 %v1226
  %1847 = vmatpush1.bf16.msra.mxu0 %v1225
  %1848 = vmatprep.mubr.bf16.mxu0 %v318
  %1849 = vmatmul.mubr.bf16.gmra.mrb[0].mxu0 %v317
  %v1850 = vpop.f32.mrb[0].mxu0
  %v1851 = vadd.f32 %v1810, %v1850
  %v1852 = vpop.f32.mrb[0].mxu0
  %v1853 = vadd.f32 %v1812, %v1852
  %v1854 = vpop.f32.mrb[0].mxu0
  %v1855 = vpop.f32.mrb[0].mxu0
  %1856 = vdwg.mxu0
  %1857 = vmatprep.subr.bf16.mxu0 %v1230
  %1858 = vmatpush1.bf16.msra.mxu0 %v1229
  %1859 = vmatprep.subr.bf16.mxu0 %v1234
  %1860 = vmatpush1.bf16.msra.mxu0 %v1233
  %1861 = vmatprep.subr.bf16.mxu0 %v1238
  %1862 = vmatpush1.bf16.msra.mxu0 %v1237
  %1863 = vmatprep.subr.bf16.mxu0 %v1242
  %1864 = vmatpush1.bf16.msra.mxu0 %v1241
  %1865 = vmatprep.subr.bf16.mxu0 %v1246
  %1866 = vmatpush1.bf16.msra.mxu0 %v1245
  %1867 = vmatprep.subr.bf16.mxu0 %v1250
  %1868 = vmatpush1.bf16.msra.mxu0 %v1249
  %1869 = vmatprep.subr.bf16.mxu0 %v1254
  %1870 = vmatpush1.bf16.msra.mxu0 %v1253
  %1871 = vmatprep.subr.bf16.mxu0 %v1258
  %1872 = vmatpush1.bf16.msra.mxu0 %v1257
  %1873 = vmatprep.subr.bf16.mxu0 %v1262
  %1874 = vmatpush1.bf16.msra.mxu0 %v1261
  %1875 = vmatprep.subr.bf16.mxu0 %v1266
  %1876 = vmatpush1.bf16.msra.mxu0 %v1265
  %1877 = vmatprep.subr.bf16.mxu0 %v1270
  %1878 = vmatpush1.bf16.msra.mxu0 %v1269
  %1879 = vmatprep.subr.bf16.mxu0 %v1274
  %1880 = vmatpush1.bf16.msra.mxu0 %v1273
  %1881 = vmatprep.subr.bf16.mxu0 %v1278
  %1882 = vmatpush1.bf16.msra.mxu0 %v1277
  %1883 = vmatprep.subr.bf16.mxu0 %v1282
  %1884 = vmatpush1.bf16.msra.mxu0 %v1281
  %1885 = vmatprep.subr.bf16.mxu0 %v1286
  %1886 = vmatpush1.bf16.msra.mxu0 %v1285
  %1887 = vmatprep.subr.bf16.mxu0 %v1290
  %1888 = vmatpush1.bf16.msra.mxu0 %v1289
  %1889 = vmatprep.mubr.bf16.mxu0 %v320
  %1890 = vmatmul.mubr.bf16.gmra.mrb[0].mxu0 %v319
  %v1891 = vpop.f32.mrb[0].mxu0
  %v1892 = vadd.f32 %v1851, %v1891
  %v1893 = vpop.f32.mrb[0].mxu0
  %v1894 = vadd.f32 %v1853, %v1893
  %v1895 = vpop.f32.mrb[0].mxu0
  %v1896 = vpop.f32.mrb[0].mxu0
  %1897 = vdwg.mxu0
  %1898 = vmatprep.subr.bf16.mxu0 %v1294
  %1899 = vmatpush1.bf16.msra.mxu0 %v1293
  %1900 = vmatprep.subr.bf16.mxu0 %v1298
  %1901 = vmatpush1.bf16.msra.mxu0 %v1297
  %1902 = vmatprep.subr.bf16.mxu0 %v1302
  %1903 = vmatpush1.bf16.msra.mxu0 %v1301
  %1904 = vmatprep.subr.bf16.mxu0 %v1306
  %1905 = vmatpush1.bf16.msra.mxu0 %v1305
  %1906 = vmatprep.subr.bf16.mxu0 %v1310
  %1907 = vmatpush1.bf16.msra.mxu0 %v1309
  %1908 = vmatprep.subr.bf16.mxu0 %v1314
  %1909 = vmatpush1.bf16.msra.mxu0 %v1313
  %1910 = vmatprep.subr.bf16.mxu0 %v1318
  %1911 = vmatpush1.bf16.msra.mxu0 %v1317
  %1912 = vmatprep.subr.bf16.mxu0 %v1322
  %1913 = vmatpush1.bf16.msra.mxu0 %v1321
  %1914 = vmatprep.subr.bf16.mxu0 %v1326
  %1915 = vmatpush1.bf16.msra.mxu0 %v1325
  %1916 = vmatprep.subr.bf16.mxu0 %v1330
  %1917 = vmatpush1.bf16.msra.mxu0 %v1329
  %1918 = vmatprep.subr.bf16.mxu0 %v1334
  %1919 = vmatpush1.bf16.msra.mxu0 %v1333
  %1920 = vmatprep.subr.bf16.mxu0 %v1338
  %1921 = vmatpush1.bf16.msra.mxu0 %v1337
  %1922 = vmatprep.subr.bf16.mxu0 %v1342
  %1923 = vmatpush1.bf16.msra.mxu0 %v1341
  %1924 = vmatprep.subr.bf16.mxu0 %v1346
  %1925 = vmatpush1.bf16.msra.mxu0 %v1345
  %1926 = vmatprep.subr.bf16.mxu0 %v1350
  %1927 = vmatpush1.bf16.msra.mxu0 %v1349
  %1928 = vmatprep.subr.bf16.mxu0 %v1354
  %1929 = vmatpush1.bf16.msra.mxu0 %v1353
  %1930 = vmatprep.mubr.bf16.mxu0 %v322
  %1931 = vmatmul.mubr.bf16.gmra.mrb[0].mxu0 %v321
  %v1932 = vpop.f32.mrb[0].mxu0
  %v1933 = vadd.f32 %v1892, %v1932
  %v1934 = vpop.f32.mrb[0].mxu0
  %v1935 = vadd.f32 %v1894, %v1934
  %v1936 = vpop.f32.mrb[0].mxu0
  %v1937 = vpop.f32.mrb[0].mxu0
  %1938 = vdwg.mxu0
  %v1939 = vmax.f32 %v1769, 0.0
  %v1940 = vmax.f32 %v1771, 0.0
  %v1941 = vmax.f32 %v1933, 0.0
  %v1942 = vmax.f32 %v1935, 0.0
  %v1943 = vpack.c.bf16 %v1939, %v1939
  %v1944 = vpack.c.bf16 %v1940, %v1940
  %v1945 = vpack.c.bf16 %v1941, %v1941
  %v1946 = vpack.c.bf16 %v1942, %v1942
  %v1947 = vld [vmem:[%s3] sm:$0xf]
  %v1948 = vld [vmem:[%s3 + $0x4] sm:$0xf]
  %v1949 = vld [vmem:[%s3 + $0x8] sm:$0xf]
  %v1950 = vld [vmem:[%s3 + $0xc] sm:$0xf]
  %v1951 = vld [vmem:[%s3 + $0x10] sm:$0xf]
  %v1952 = vld [vmem:[%s3 + $0x14] sm:$0xf]
  %v1953 = vld [vmem:[%s3 + $0x18] sm:$0xf]
  %v1954 = vld [vmem:[%s3 + $0x1c] sm:$0xf]
  %v1955 = vld [vmem:[%s3 + $0x20] sm:$0xf]
  %v1956 = vld [vmem:[%s3 + $0x24] sm:$0xf]
  %v1957 = vld [vmem:[%s3 + $0x28] sm:$0xf]
  %v1958 = vld [vmem:[%s3 + $0x2c] sm:$0xf]
  %v1959 = vld [vmem:[%s3 + $0x30] sm:$0xf]
  %v1960 = vld [vmem:[%s3 + $0x34] sm:$0xf]
  %v1961 = vld [vmem:[%s3 + $0x38] sm:$0xf]
  %v1962 = vld [vmem:[%s3 + $0x3c] sm:$0xf]
  %v1963 = vld [vmem:[%s3 + $0x40] sm:$0xf]
  %v1964 = vld [vmem:[%s3 + $0x44] sm:$0xf]
  %v1965 = vld [vmem:[%s3 + $0x48] sm:$0xf]
  %v1966 = vld [vmem:[%s3 + $0x4c] sm:$0xf]
  %v1967 = vld [vmem:[%s3 + $0x50] sm:$0xf]
  %v1968 = vld [vmem:[%s3 + $0x54] sm:$0xf]
  %v1969 = vld [vmem:[%s3 + $0x58] sm:$0xf]
  %v1970 = vld [vmem:[%s3 + $0x5c] sm:$0xf]
  %v1971 = vld [vmem:[%s3 + $0x60] sm:$0xf]
  %v1972 = vld [vmem:[%s3 + $0x64] sm:$0xf]
  %v1973 = vld [vmem:[%s3 + $0x68] sm:$0xf]
  %v1974 = vld [vmem:[%s3 + $0x6c] sm:$0xf]
  %v1975 = vld [vmem:[%s3 + $0x70] sm:$0xf]
  %v1976 = vld [vmem:[%s3 + $0x74] sm:$0xf]
  %v1977 = vld [vmem:[%s3 + $0x78] sm:$0xf]
  %v1978 = vld [vmem:[%s3 + $0x7c] sm:$0xf]
  %v1979 = vld [vmem:[%s3 + $0x80] sm:$0xf]
  %v1980 = vld [vmem:[%s3 + $0x84] sm:$0xf]
  %v1981 = vld [vmem:[%s3 + $0x88] sm:$0xf]
  %v1982 = vld [vmem:[%s3 + $0x8c] sm:$0xf]
  %v1983 = vld [vmem:[%s3 + $0x90] sm:$0xf]
  %v1984 = vld [vmem:[%s3 + $0x94] sm:$0xf]
  %v1985 = vld [vmem:[%s3 + $0x98] sm:$0xf]
  %v1986 = vld [vmem:[%s3 + $0x9c] sm:$0xf]
  %v1987 = vld [vmem:[%s3 + $0xa0] sm:$0xf]
  %v1988 = vld [vmem:[%s3 + $0xa4] sm:$0xf]
  %v1989 = vld [vmem:[%s3 + $0xa8] sm:$0xf]
  %v1990 = vld [vmem:[%s3 + $0xac] sm:$0xf]
  %v1991 = vld [vmem:[%s3 + $0xb0] sm:$0xf]
  %v1992 = vld [vmem:[%s3 + $0xb4] sm:$0xf]
  %v1993 = vld [vmem:[%s3 + $0xb8] sm:$0xf]
  %v1994 = vld [vmem:[%s3 + $0xbc] sm:$0xf]
  %v1995 = vld [vmem:[%s3 + $0xc0] sm:$0xf]
  %v1996 = vld [vmem:[%s3 + $0xc4] sm:$0xf]
  %v1997 = vld [vmem:[%s3 + $0xc8] sm:$0xf]
  %v1998 = vld [vmem:[%s3 + $0xcc] sm:$0xf]
  %v1999 = vld [vmem:[%s3 + $0xd0] sm:$0xf]
  %v2000 = vld [vmem:[%s3 + $0xd4] sm:$0xf]
  %v2001 = vld [vmem:[%s3 + $0xd8] sm:$0xf]
  %v2002 = vld [vmem:[%s3 + $0xdc] sm:$0xf]
  %v2003 = vld [vmem:[%s3 + $0xe0] sm:$0xf]
  %v2004 = vld [vmem:[%s3 + $0xe4] sm:$0xf]
  %v2005 = vld [vmem:[%s3 + $0xe8] sm:$0xf]
  %v2006 = vld [vmem:[%s3 + $0xec] sm:$0xf]
  %v2007 = vld [vmem:[%s3 + $0xf0] sm:$0xf]
  %v2008 = vld [vmem:[%s3 + $0xf4] sm:$0xf]
  %v2009 = vld [vmem:[%s3 + $0xf8] sm:$0xf]
  %v2010 = vld [vmem:[%s3 + $0xfc] sm:$0xf]
  %v2011 = vld [vmem:[%s4] sm:$0x1]
  %v2013 = vlaneseq
  %v2014 = vshrl.u32 %v2013, 7
  %v2015 = vsub.s32 0, %v2014
  %v2016 = vrot.slane %v2011, %v2015
  %v2082 = vunpack.c.l.b16 %v1947
  %v2083 = vunpack.c.l.b16 %v1948
  %v2084 = vunpack.c.l.b16 %v1949
  %v2085 = vunpack.c.l.b16 %v1950
  %v2086 = vunpack.c.l.b16 %v1951
  %v2087 = vunpack.c.l.b16 %v1952
  %v2088 = vunpack.c.l.b16 %v1953
  %v2089 = vunpack.c.l.b16 %v1954
  %v2090 = vunpack.c.l.b16 %v1955
  %v2091 = vunpack.c.l.b16 %v1956
  %v2092 = vunpack.c.l.b16 %v1957
  %v2093 = vunpack.c.l.b16 %v1958
  %v2094 = vunpack.c.l.b16 %v1959
  %v2095 = vunpack.c.l.b16 %v1960
  %v2096 = vunpack.c.l.b16 %v1961
  %v2097 = vunpack.c.l.b16 %v1962
  %v2098 = vunpack.c.l.b16 %v1963
  %v2099 = vunpack.c.l.b16 %v1964
  %v2100 = vunpack.c.l.b16 %v1965
  %v2101 = vunpack.c.l.b16 %v1966
  %v2102 = vunpack.c.l.b16 %v1967
  %v2103 = vunpack.c.l.b16 %v1968
  %v2104 = vunpack.c.l.b16 %v1969
  %v2105 = vunpack.c.l.b16 %v1970
  %v2106 = vunpack.c.l.b16 %v1971
  %v2107 = vunpack.c.l.b16 %v1972
  %v2108 = vunpack.c.l.b16 %v1973
  %v2109 = vunpack.c.l.b16 %v1974
  %v2110 = vunpack.c.l.b16 %v1975
  %v2111 = vunpack.c.l.b16 %v1976
  %v2112 = vunpack.c.l.b16 %v1977
  %v2113 = vunpack.c.l.b16 %v1978
  %v2114 = vunpack.c.l.b16 %v1979
  %v2115 = vunpack.c.l.b16 %v1980
  %v2116 = vunpack.c.l.b16 %v1981
  %v2117 = vunpack.c.l.b16 %v1982
  %v2118 = vunpack.c.l.b16 %v1983
  %v2119 = vunpack.c.l.b16 %v1984
  %v2120 = vunpack.c.l.b16 %v1985
  %v2121 = vunpack.c.l.b16 %v1986
  %v2122 = vunpack.c.l.b16 %v1987
  %v2123 = vunpack.c.l.b16 %v1988
  %v2124 = vunpack.c.l.b16 %v1989
  %v2125 = vunpack.c.l.b16 %v1990
  %v2126 = vunpack.c.l.b16 %v1991
  %v2127 = vunpack.c.l.b16 %v1992
  %v2128 = vunpack.c.l.b16 %v1993
  %v2129 = vunpack.c.l.b16 %v1994
  %v2130 = vunpack.c.l.b16 %v1995
  %v2131 = vunpack.c.l.b16 %v1996
  %v2132 = vunpack.c.l.b16 %v1997
  %v2133 = vunpack.c.l.b16 %v1998
  %v2134 = vunpack.c.l.b16 %v1999
  %v2135 = vunpack.c.l.b16 %v2000
  %v2136 = vunpack.c.l.b16 %v2001
  %v2137 = vunpack.c.l.b16 %v2002
  %v2138 = vunpack.c.l.b16 %v2003
  %v2139 = vunpack.c.l.b16 %v2004
  %v2140 = vunpack.c.l.b16 %v2005
  %v2141 = vunpack.c.l.b16 %v2006
  %v2142 = vunpack.c.l.b16 %v2007
  %v2143 = vunpack.c.l.b16 %v2008
  %v2144 = vunpack.c.l.b16 %v2009
  %v2145 = vunpack.c.l.b16 %v2010
  %v2146 = vpack.c.b16 %v2083, %v2082
  %v2147 = vpack.c.b16 %v2085, %v2084
  %v2148 = vpack.c.b16 %v2087, %v2086
  %v2149 = vpack.c.b16 %v2089, %v2088
  %v2150 = vpack.c.b16 %v2091, %v2090
  %v2151 = vpack.c.b16 %v2093, %v2092
  %v2152 = vpack.c.b16 %v2095, %v2094
  %v2153 = vpack.c.b16 %v2097, %v2096
  %v2154 = vpack.c.b16 %v2099, %v2098
  %v2155 = vpack.c.b16 %v2101, %v2100
  %v2156 = vpack.c.b16 %v2103, %v2102
  %v2157 = vpack.c.b16 %v2105, %v2104
  %v2158 = vpack.c.b16 %v2107, %v2106
  %v2159 = vpack.c.b16 %v2109, %v2108
  %v2160 = vpack.c.b16 %v2111, %v2110
  %v2161 = vpack.c.b16 %v2113, %v2112
  %v2162 = vpack.c.b16 %v2115, %v2114
  %v2163 = vpack.c.b16 %v2117, %v2116
  %v2164 = vpack.c.b16 %v2119, %v2118
  %v2165 = vpack.c.b16 %v2121, %v2120
  %v2166 = vpack.c.b16 %v2123, %v2122
  %v2167 = vpack.c.b16 %v2125, %v2124
  %v2168 = vpack.c.b16 %v2127, %v2126
  %v2169 = vpack.c.b16 %v2129, %v2128
  %v2170 = vpack.c.b16 %v2131, %v2130
  %v2171 = vpack.c.b16 %v2133, %v2132
  %v2172 = vpack.c.b16 %v2135, %v2134
  %v2173 = vpack.c.b16 %v2137, %v2136
  %v2174 = vpack.c.b16 %v2139, %v2138
  %v2175 = vpack.c.b16 %v2141, %v2140
  %v2176 = vpack.c.b16 %v2143, %v2142
  %v2177 = vpack.c.b16 %v2145, %v2144
  %2210 = vmatprep.subr.bf16.mxu0 0
  %2211 = vmatpush1.bf16.msra.mxu0 %v2146
  %2212 = vmatprep.subr.bf16.mxu0 0
  %2213 = vmatpush1.bf16.msra.mxu0 %v2147
  %2214 = vmatprep.subr.bf16.mxu0 0
  %2215 = vmatpush1.bf16.msra.mxu0 %v2148
  %2216 = vmatprep.subr.bf16.mxu0 0
  %2217 = vmatpush1.bf16.msra.mxu0 %v2149
  %2218 = vmatprep.subr.bf16.mxu0 0
  %2219 = vmatpush1.bf16.msra.mxu0 %v2150
  %2220 = vmatprep.subr.bf16.mxu0 0
  %2221 = vmatpush1.bf16.msra.mxu0 %v2151
  %2222 = vmatprep.subr.bf16.mxu0 0
  %2223 = vmatpush1.bf16.msra.mxu0 %v2152
  %2224 = vmatprep.subr.bf16.mxu0 0
  %2225 = vmatpush1.bf16.msra.mxu0 %v2153
  %2226 = vmatprep.subr.bf16.mxu0 0
  %2227 = vmatpush1.bf16.msra.mxu0 %v2154
  %2228 = vmatprep.subr.bf16.mxu0 0
  %2229 = vmatpush1.bf16.msra.mxu0 %v2155
  %2230 = vmatprep.subr.bf16.mxu0 0
  %2231 = vmatpush1.bf16.msra.mxu0 %v2156
  %2232 = vmatprep.subr.bf16.mxu0 0
  %2233 = vmatpush1.bf16.msra.mxu0 %v2157
  %2234 = vmatprep.subr.bf16.mxu0 0
  %2235 = vmatpush1.bf16.msra.mxu0 %v2158
  %2236 = vmatprep.subr.bf16.mxu0 0
  %2237 = vmatpush1.bf16.msra.mxu0 %v2159
  %2238 = vmatprep.subr.bf16.mxu0 0
  %2239 = vmatpush1.bf16.msra.mxu0 %v2160
  %2240 = vmatprep.subr.bf16.mxu0 0
  %2241 = vmatpush1.bf16.msra.mxu0 %v2161
  %2242 = vmatprep.mubr.bf16.mxu0 %v1944
  %2243 = vmatmul.mubr.bf16.gmra.mrb[0].mxu0 %v1943
  %v2244 = vpop.f32.mrb[0].mxu0
  %v2245 = vadd.f32 %v2016, %v2244
  %v2246 = vpop.f32.mrb[0].mxu0
  %v2247 = vpop.f32.mrb[0].mxu0
  %v2248 = vpop.f32.mrb[0].mxu0
  %2249 = vdwg.mxu0
  %2250 = vmatprep.subr.bf16.mxu0 0
  %2251 = vmatpush1.bf16.msra.mxu0 %v2162
  %2252 = vmatprep.subr.bf16.mxu0 0
  %2253 = vmatpush1.bf16.msra.mxu0 %v2163
  %2254 = vmatprep.subr.bf16.mxu0 0
  %2255 = vmatpush1.bf16.msra.mxu0 %v2164
  %2256 = vmatprep.subr.bf16.mxu0 0
  %2257 = vmatpush1.bf16.msra.mxu0 %v2165
  %2258 = vmatprep.subr.bf16.mxu0 0
  %2259 = vmatpush1.bf16.msra.mxu0 %v2166
  %2260 = vmatprep.subr.bf16.mxu0 0
  %2261 = vmatpush1.bf16.msra.mxu0 %v2167
  %2262 = vmatprep.subr.bf16.mxu0 0
  %2263 = vmatpush1.bf16.msra.mxu0 %v2168
  %2264 = vmatprep.subr.bf16.mxu0 0
  %2265 = vmatpush1.bf16.msra.mxu0 %v2169
  %2266 = vmatprep.subr.bf16.mxu0 0
  %2267 = vmatpush1.bf16.msra.mxu0 %v2170
  %2268 = vmatprep.subr.bf16.mxu0 0
  %2269 = vmatpush1.bf16.msra.mxu0 %v2171
  %2270 = vmatprep.subr.bf16.mxu0 0
  %2271 = vmatpush1.bf16.msra.mxu0 %v2172
  %2272 = vmatprep.subr.bf16.mxu0 0
  %2273 = vmatpush1.bf16.msra.mxu0 %v2173
  %2274 = vmatprep.subr.bf16.mxu0 0
  %2275 = vmatpush1.bf16.msra.mxu0 %v2174
  %2276 = vmatprep.subr.bf16.mxu0 0
  %2277 = vmatpush1.bf16.msra.mxu0 %v2175
  %2278 = vmatprep.subr.bf16.mxu0 0
  %2279 = vmatpush1.bf16.msra.mxu0 %v2176
  %2280 = vmatprep.subr.bf16.mxu0 0
  %2281 = vmatpush1.bf16.msra.mxu0 %v2177
  %2282 = vmatprep.mubr.bf16.mxu0 %v1946
  %2283 = vmatmul.mubr.bf16.gmra.mrb[0].mxu0 %v1945
  %v2284 = vpop.f32.mrb[0].mxu0
  %v2285 = vadd.f32 %v2245, %v2284
  %v2286 = vpop.f32.mrb[0].mxu0
  %v2287 = vpop.f32.mrb[0].mxu0
  %v2288 = vpop.f32.mrb[0].mxu0
  %2289 = vdwg.mxu0
  %v2290 = vlaneseq
  %v2291 = vand.u32 %v2290, 127
  %vm2292 = vcmp.lt.s32.totalorder %v2291, 15
  %v2293 = vsel %vm2292, %v2285, -1e+30
  %2294 = vmax.xlane.f32.xlu0 %v2293
  %v2295 = vpop.xlane.xlu0 %2294
  %v2296 = vsub.f32 %v2293, %v2295
  %v2297 = vmul.f32 %v2296, 1.442695
  %v2298 = vpow.pop %v2297
  %2299 = vadd.xlane.f32.xlu0 %v2298
  %v2300 = vpop.xlane.xlu0 %2299
  %v2301 = vlog2.pop %v2300
  %v2302 = vmul.f32 %v2301, 0.6931472
  %v2303 = vsub.f32 %v2296, %v2302
  %vm2304 = vcmp.eq.s32.totalorder %v2291, 15
  %v2305 = vsel %vm2304, %v2285, 0.0
  %v2306 = vsel %vm2292, %v2303, %v2305
  %2307 = vst [vmem:[%s5] sm:$0xff] %v2306
  // Predicated region
  $region22: #{policy_forward.7} parent=0 // pred_check
    _
  $region23: #{policy_forward.7} parent=0 // pred_check_branch
    %2309 = sbr.rel (0) target = $region25
  $region24: #{policy_forward.7} parent=0 // pred_region
    _
  $region25: #{policy_forward.7} parent=0 // pred_fallthru
    _
  // Predicated region
  $region26: #{policy_forward.7} parent=0 // pred_check
    _
  $region27: #{policy_forward.7} parent=0 // pred_check_branch
    %2311 = sbr.rel (0) target = $region29
  $region28: #{policy_forward.7} parent=0 // pred_region
    _
  $region29: #{policy_forward.7} parent=0 // pred_fallthru
    _

</llo_original>
